<compile_context>
chip_gen: v6e
topology: v6e:2x2x1
jax: 0.10.0
libtpu: 0.0.40
codegen_flags: <defaults>
</compile_context>

<pallas_src>
import functools

import jax
import jax.numpy as jnp
import numpy as np
from jax.experimental import pallas as pl
from jax.experimental.pallas import tpu as pltpu


# Packed-weight layout indices
W_Q, W_K, W_V, W_PROJ, W_FC1, W_FC2 = range(6)
(V_LN1G, V_LN1B, V_QB, V_KB, V_VB, V_PROJB,
 V_LN2G, V_LN2B, V_FC1B, V_FC2B, V_LN3G, V_LN3B) = range(12)

_EPS = 1e-5


def _round_up(x, m):
    return ((x + m - 1) // m) * m


# ----------------------------------------------------------------------------
# In-kernel helpers
# ----------------------------------------------------------------------------
def _masked_layernorm(z, g, b, d_true, eps=_EPS):
    """LayerNorm over the last dim where only the first d_true lanes are real
    features (rest is zero padding).  g/b are zero-padded, so padded lanes of
    the result are exactly 0."""
    lane = jax.lax.broadcasted_iota(jnp.int32, z.shape, z.ndim - 1)
    mask = lane < d_true
    zm = jnp.where(mask, z, 0.0)
    mu = jnp.sum(zm, axis=-1, keepdims=True) * (1.0 / d_true)
    diff = jnp.where(mask, z - mu, 0.0)
    var = jnp.sum(diff * diff, axis=-1, keepdims=True) * (1.0 / d_true)
    zh = (z - mu) * jax.lax.rsqrt(var + eps)
    return zh * g + b


# ----------------------------------------------------------------------------
# Pallas kernels
# ----------------------------------------------------------------------------
def _pe_kernel(x_ref, w_ref, b_ref, o_ref):
    """Patch embedding: o = x @ w + b (lane-padded, one batch element)."""
    y = jnp.dot(x_ref[0], w_ref[...], preferred_element_type=jnp.float32)
    o_ref[0] = (y + b_ref[...]).astype(o_ref.dtype)


def _block_kernel(x_ref, wm_ref, vec_ref, xo_ref, h3_ref, *, num_heads, d_true):
    """One fully-fused transformer block (per batch element):
         LN1 -> QKV -> MHSA (all heads) -> proj -> +residual
         LN2 -> FC1 -> gelu -> FC2 -> +residual
         LN3 (emitted for the spectral branch; FFT runs outside)."""
    x = x_ref[0].astype(jnp.float32)                          # (Ntok, Dp)
    ntok, dp = x.shape
    dh = d_true // num_heads
    scale = 1.0 / float(dh) ** 0.5

    # ---- multi-head self-attention branch ----
    h = _masked_layernorm(x, vec_ref[V_LN1G], vec_ref[V_LN1B], d_true)
    q = jnp.dot(h, wm_ref[W_Q], preferred_element_type=jnp.float32) + vec_ref[V_QB]
    k = jnp.dot(h, wm_ref[W_K], preferred_element_type=jnp.float32) + vec_ref[V_KB]
    v = jnp.dot(h, wm_ref[W_V], preferred_element_type=jnp.float32) + vec_ref[V_VB]

    lane = jax.lax.broadcasted_iota(jnp.int32, (ntok, dp), 1)
    kt = k.T                                                  # (Dp, Ntok)
    attn = jnp.zeros((ntok, dp), jnp.float32)
    for hh in range(num_heads):
        lo = hh * dh
        hmask = (lane >= lo) & (lane < lo + dh)
        qh = jnp.where(hmask, q, 0.0)
        s = jnp.dot(qh, kt, preferred_element_type=jnp.float32) * scale
        s = s - jnp.max(s, axis=-1, keepdims=True)
        p = jnp.exp(s)
        inv_l = pl.reciprocal(jnp.sum(p, axis=-1, keepdims=True), approx=True)
        o_full = jnp.dot(p, v, preferred_element_type=jnp.float32)
        attn = attn + jnp.where(hmask, o_full, 0.0) * inv_l
    attn = (jnp.dot(attn, wm_ref[W_PROJ], preferred_element_type=jnp.float32)
            + vec_ref[V_PROJB])
    x = x + attn

    # ---- MLP branch ----
    h = _masked_layernorm(x, vec_ref[V_LN2G], vec_ref[V_LN2B], d_true)
    h = jnp.dot(h, wm_ref[W_FC1], preferred_element_type=jnp.float32) + vec_ref[V_FC1B]
    h = jax.nn.gelu(h)  # tanh-approx gelu (activation='gelu')
    h = jnp.dot(h, wm_ref[W_FC2], preferred_element_type=jnp.float32) + vec_ref[V_FC2B]
    x = x + h

    # ---- LN3: pre-normed tokens for the Fourier branch ----
    h3 = _masked_layernorm(x, vec_ref[V_LN3G], vec_ref[V_LN3B], d_true)
    xo_ref[0] = x.astype(xo_ref.dtype)
    h3_ref[0] = h3.astype(h3_ref.dtype)


def _spec_mix_kernel(x_ref, w_ref, m_ref, o_ref, *, num_scales):
    """Multi-scale complex channel mix, packed as real matmuls.
    x = [xr | xi] (rows, DCp);  w[s] = [[wr, wi], [-wi, wr]] zero-padded.
    Per-scale truncation masks are applied per frequency row and the scales
    are averaged in the frequency domain (single irfft2 afterwards)."""
    x = x_ref[0]                                              # (rows, DCp)
    acc = jnp.zeros_like(x)
    for s in range(num_scales):
        y = jnp.dot(x, w_ref[s], preferred_element_type=jnp.float32)
        acc = acc + m_ref[s] * y                              # m_ref[s]: (rows, 1)
    o_ref[0] = (acc * (1.0 / num_scales)).astype(o_ref.dtype)


def _head_kernel(x_ref, ln_ref, w_ref, b_ref, o_ref, *, d_true):
    """Head: LayerNorm -> token mean-pool -> linear projection."""
    x = x_ref[...].astype(jnp.float32)                        # (B, Ntok, Dp)
    h = _masked_layernorm(x, ln_ref[0], ln_ref[1], d_true)
    pooled = jnp.mean(h, axis=1)                              # (B, Dp)
    y = jnp.dot(pooled, w_ref[...], preferred_element_type=jnp.float32) + b_ref[...]
    o_ref[...] = y.astype(o_ref.dtype)


# ----------------------------------------------------------------------------
# Pallas wrappers
# ----------------------------------------------------------------------------
def _patch_embed(xc, w, b):
    B, ntok, kdim = xc.shape
    dp = w.shape[1]
    return pl.pallas_call(
        _pe_kernel,
        grid=(B,),
        in_specs=[pl.BlockSpec((1, ntok, kdim), lambda i: (i, 0, 0)),
                  pl.BlockSpec((kdim, dp), lambda i: (0, 0)),
                  pl.BlockSpec((1, dp), lambda i: (0, 0))],
        out_specs=pl.BlockSpec((1, ntok, dp), lambda i: (i, 0, 0)),
        out_shape=jax.ShapeDtypeStruct((B, ntok, dp), jnp.float32),
        compiler_params=pltpu.CompilerParams(dimension_semantics=("parallel",)),
    )(xc, w, b)


def _block(x, wm, vecs, *, num_heads, d_true):
    B, ntok, dp = x.shape
    io_spec = pl.BlockSpec((1, ntok, dp), lambda i: (i, 0, 0))
    return pl.pallas_call(
        functools.partial(_block_kernel, num_heads=num_heads, d_true=d_true),
        grid=(B,),
        in_specs=[io_spec,
                  pl.BlockSpec(wm.shape, lambda i: (0, 0, 0)),
                  pl.BlockSpec(vecs.shape, lambda i: (0, 0, 0))],
        out_specs=(io_spec, io_spec),
        out_shape=(jax.ShapeDtypeStruct((B, ntok, dp), jnp.float32),
                   jax.ShapeDtypeStruct((B, ntok, dp), jnp.float32)),
        compiler_params=pltpu.CompilerParams(dimension_semantics=("parallel",)),
    )(x, wm, vecs)


def _spec_mix(xp, wstack, masks):
    B, rows, dcp = xp.shape
    nscales = wstack.shape[0]
    io_spec = pl.BlockSpec((1, rows, dcp), lambda i: (i, 0, 0))
    return pl.pallas_call(
        functools.partial(_spec_mix_kernel, num_scales=nscales),
        grid=(B,),
        in_specs=[io_spec,
                  pl.BlockSpec(wstack.shape, lambda i: (0, 0, 0)),
                  pl.BlockSpec(masks.shape, lambda i: (0, 0, 0))],
        out_specs=io_spec,
        out_shape=jax.ShapeDtypeStruct((B, rows, dcp), jnp.float32),
        compiler_params=pltpu.CompilerParams(dimension_semantics=("parallel",)),
    )(xp, wstack, masks)


def _head(x, head_ln, head_w, head_b, *, d_true):
    B, ntok, dp = x.shape
    fp = head_w.shape[1]
    return pl.pallas_call(
        functools.partial(_head_kernel, d_true=d_true),
        grid=(1,),
        in_specs=[pl.BlockSpec((B, ntok, dp), lambda i: (0, 0, 0)),
                  pl.BlockSpec(head_ln.shape, lambda i: (0, 0, 0)),
                  pl.BlockSpec((dp, fp), lambda i: (0, 0)),
                  pl.BlockSpec((1, fp), lambda i: (0, 0))],
        out_specs=pl.BlockSpec((B, fp), lambda i: (0, 0)),
        out_shape=jax.ShapeDtypeStruct((B, fp), jnp.float32),
    )(x, head_ln, head_w, head_b)


# ----------------------------------------------------------------------------
# Parameters: logical init + padded/packed layout for the fused kernels
# ----------------------------------------------------------------------------
def init_hifno_params(key, *, in_channels, patch, embed_dim, depth, num_scales,
                      mlp_ratio, feature_dim):
    D = embed_dim
    hidden = int(D * mlp_ratio)
    keys = iter(jax.random.split(key, 256))

    def w(shape, scale=0.02):
        return (scale * jax.random.normal(next(keys), shape)).astype(jnp.float32)

    params = {
        "pe_w": w((in_channels * patch * patch, D)),
        "pe_b": jnp.zeros((D,), jnp.float32),
        "blocks": [],
        "head_ln_g": jnp.ones((D,), jnp.float32),
        "head_ln_b": jnp.zeros((D,), jnp.float32),
        "head_w": w((D, feature_dim)),
        "head_b": jnp.zeros((feature_dim,), jnp.float32),
    }
    for _ in range(depth):
        blk = {
            "ln1_g": jnp.ones((D,), jnp.float32), "ln1_b": jnp.zeros((D,), jnp.float32),
            "qkv_w": w((D, 3 * D)), "qkv_b": jnp.zeros((3 * D,), jnp.float32),
            "proj_w": w((D, D)), "proj_b": jnp.zeros((D,), jnp.float32),
            "ln2_g": jnp.ones((D,), jnp.float32), "ln2_b": jnp.zeros((D,), jnp.float32),
            "fc1_w": w((D, hidden)), "fc1_b": jnp.zeros((hidden,), jnp.float32),
            "fc2_w": w((hidden, D)), "fc2_b": jnp.zeros((D,), jnp.float32),
            "ln3_g": jnp.ones((D,), jnp.float32), "ln3_b": jnp.zeros((D,), jnp.float32),
            "spec": [(w((D, D), scale=1.0 / D), w((D, D), scale=1.0 / D))
                     for _ in range(num_scales)],
        }
        params["blocks"].append(blk)
    return params


def _pad2(a, rows, cols):
    a = jnp.asarray(a, jnp.float32)
    return jnp.zeros((rows, cols), jnp.float32).at[: a.shape[0], : a.shape[1]].set(a)


def _pad_vec(a, n):
    a = jnp.asarray(a, jnp.float32)
    return jnp.zeros((1, n), jnp.float32).at[0, : a.shape[0]].set(a)


def pack_hifno_params(params, lane=128):
    """Zero-pad every feature dim to a 128-lane multiple and pack per-block
    weights into single stacked operands (one DMA per operand per grid step)."""
    D = params["pe_w"].shape[1]
    hidden = params["blocks"][0]["fc1_w"].shape[1] if params["blocks"] else D
    feature_dim = params["head_w"].shape[1]
    Dp = _round_up(max(D, hidden), lane)
    DCp = _round_up(2 * D, lane)
    Fp = _round_up(feature_dim, lane)

    packed = {
        "pe_w": _pad2(params["pe_w"], params["pe_w"].shape[0], Dp),
        "pe_b": _pad_vec(params["pe_b"], Dp),
        "head_ln": jnp.stack([_pad_vec(params["head_ln_g"], Dp),
                              _pad_vec(params["head_ln_b"], Dp)]),      # (2,1,Dp)
        "head_w": _pad2(params["head_w"], Dp, Fp),
        "head_b": _pad_vec(params["head_b"], Fp),
        "blocks": [],
    }
    for blk in params["blocks"]:
        qkv_w, qkv_b = blk["qkv_w"], blk["qkv_b"]
        wm = jnp.stack([
            _pad2(qkv_w[:, 0:D], Dp, Dp),
            _pad2(qkv_w[:, D:2 * D], Dp, Dp),
            _pad2(qkv_w[:, 2 * D:3 * D], Dp, Dp),
            _pad2(blk["proj_w"], Dp, Dp),
            _pad2(blk["fc1_w"], Dp, Dp),
            _pad2(blk["fc2_w"], Dp, Dp),
        ])                                                              # (6,Dp,Dp)
        vecs = jnp.stack([
            _pad_vec(blk["ln1_g"], Dp), _pad_vec(blk["ln1_b"], Dp),
            _pad_vec(qkv_b[0:D], Dp), _pad_vec(qkv_b[D:2 * D], Dp),
            _pad_vec(qkv_b[2 * D:3 * D], Dp),
            _pad_vec(blk["proj_b"], Dp),
            _pad_vec(blk["ln2_g"], Dp), _pad_vec(blk["ln2_b"], Dp),
            _pad_vec(blk["fc1_b"], Dp), _pad_vec(blk["fc2_b"], Dp),
            _pad_vec(blk["ln3_g"], Dp), _pad_vec(blk["ln3_b"], Dp),
        ])                                                              # (12,1,Dp)
        wspec = jnp.stack([
            _pad2(jnp.block([[wr, wi], [-wi, wr]]), DCp, DCp)
            for (wr, wi) in blk["spec"]])                               # (S,DCp,DCp)
        packed["blocks"].append({"wm": wm, "vecs": vecs, "wspec": wspec})
    return packed


def _scale_masks(hp, wf, trunc_sizes):
    """Per-scale frequency truncation masks, shape (S, hp*wf, 1)."""
    S = len(trunc_sizes)
    m = np.zeros((S, hp * wf, 1), np.float32)
    for s, t in enumerate(trunc_sizes):
        mx, my = min(int(t), hp), min(int(t), wf)
        mm = np.zeros((hp, wf), np.float32)
        mm[:mx, :my] = 1.0
        m[s, :, 0] = mm.reshape(-1)
    return jnp.asarray(m)


# ----------------------------------------------------------------------------
# Forward pass
# ----------------------------------------------------------------------------
def hifno_encoder_forward(packed, obs, *, patch, num_heads, trunc_sizes,
                          embed_dim, feature_dim):
    """obs: (B, C, H, W) float32 (NCHW, same as the PyTorch module)."""
    obs = obs.astype(jnp.float32)                    # torch.FloatTensor(obs)
    B, C, H, W = obs.shape
    hp, wp = H // patch, W // patch
    ntok = hp * wp
    D = embed_dim

    # patch embedding: conv(k=p, stride=p) == im2col (XLA layout shuffle) + Pallas matmul
    xc = obs.reshape(B, C, hp, patch, wp, patch)
    xc = jnp.transpose(xc, (0, 2, 4, 1, 3, 5)).reshape(B, ntok, C * patch * patch)
    x = _patch_embed(xc, packed["pe_w"], packed["pe_b"])      # (B, ntok, Dp)
    Dp = x.shape[-1]

    wf = wp // 2 + 1
    masks = _scale_masks(hp, wf, trunc_sizes)                 # (S, hp*wf, 1)

    for blk in packed["blocks"]:
        # fused attention + MLP + LN3 (all heads, all residuals) in one kernel
        x, h3 = _block(x, blk["wm"], blk["vecs"], num_heads=num_heads, d_true=D)

        # hierarchical Fourier (multi-scale spectral conv) branch
        # TODO(synk): FFT has no Pallas primitive on TPU; rfft2/irfft2 stay in XLA glue.
        h = h3[..., :D].reshape(B, hp, wp, D)
        ft = jnp.fft.rfft2(h, axes=(1, 2))                    # (B, hp, wf, D) complex64
        DCp = blk["wspec"].shape[-1]
        xp = jnp.concatenate([jnp.real(ft), jnp.imag(ft)], axis=-1)
        xp = xp.reshape(B, hp * wf, 2 * D)
        xp = jnp.pad(xp, ((0, 0), (0, 0), (0, DCp - 2 * D)))
        y = _spec_mix(xp, blk["wspec"], masks)                # (B, hp*wf, DCp)
        yft = (y[..., :D] + 1j * y[..., D:2 * D]).reshape(B, hp, wf, D)
        spec = jnp.fft.irfft2(yft.astype(ft.dtype), s=(hp, wp), axes=(1, 2))
        spec = jax.nn.gelu(spec).reshape(B, ntok, D)
        x = x + jnp.pad(spec, ((0, 0), (0, 0), (0, Dp - D)))

    # head: LN -> token mean-pool -> linear projection (one fused kernel)
    feats = _head(x, packed["head_ln"], packed["head_w"], packed["head_b"], d_true=D)
    return feats[:, :feature_dim]                             # (B, feature_dim)


# ----------------------------------------------------------------------------
if __name__ == "__main__":
    key = jax.random.PRNGKey(0)
    kp, kx = jax.random.split(key)

    # obs_shape=(C,H,W)=(4,16,16), feature_dim=32, embed_dim=32, depth=2,
    # num_scales=3, truncation_sizes=[16,12,8], num_heads=4, mlp_ratio=2.0
    obs_shape = (4, 16, 16)
    feature_dim = 32
    embed_dim = 32
    depth = 2
    num_scales = 3
    num_heads = 4
    mlp_ratio = 2.0
    patch = 4
    trunc_sizes = (16, 12, 8)
    B = 2

    params = init_hifno_params(
        kp, in_channels=obs_shape[0], patch=patch, embed_dim=embed_dim,
        depth=depth, num_scales=num_scales, mlp_ratio=mlp_ratio,
        feature_dim=feature_dim)
    packed = pack_hifno_params(params)

    obs = jax.random.normal(kx, (B,) + obs_shape, dtype=jnp.float32)

    fwd = jax.jit(functools.partial(
        hifno_encoder_forward, patch=patch, num_heads=num_heads,
        trunc_sizes=trunc_sizes, embed_dim=embed_dim, feature_dim=feature_dim))

    feats = jax.block_until_ready(fwd(packed, obs))

    assert feats.shape == (B, feature_dim), feats.shape
    assert bool(jnp.isfinite(feats).all())
    print("KERNEL_OK")
</pallas_src>

<mosaic_0001>
module attributes {stable_mosaic.version = 11 : i64} {
  func.func @_pe_kernel(%arg0: i32, %arg1: memref<1x16x64xf32, #tpu.memory_space<vmem>>, %arg2: memref<64x128xf32, #tpu.memory_space<vmem>>, %arg3: memref<1x128xf32, #tpu.memory_space<vmem>>, %arg4: memref<1x16x128xf32, #tpu.memory_space<vmem>>) attributes {dimension_semantics = [#tpu.dimension_semantics<parallel>], iteration_bounds = array<i64: 2>, scalar_prefetch = 0 : i64, scratch_operands = 0 : i64, tpu.core_type = #tpu.core_type<tc>, window_params = [{transform_indices = @transform_0, window_bounds = array<i64: 1, 16, 64>}, {pipeline_mode = #tpu.pipeline_mode<synchronous>, transform_indices = @transform_1, window_bounds = array<i64: 64, 128>}, {pipeline_mode = #tpu.pipeline_mode<synchronous>, transform_indices = @transform_2, window_bounds = array<i64: 1, 128>}, {transform_indices = @transform_3, window_bounds = array<i64: 1, 16, 128>}]} {
    %c0 = arith.constant 0 : index
    %c0_0 = arith.constant 0 : index
    %c0_1 = arith.constant 0 : index
    %0 = vector.load %arg1[%c0, %c0_0, %c0_1] : memref<1x16x64xf32, #tpu.memory_space<vmem>>, vector<1x16x64xf32>
    %1 = vector.shape_cast %0 : vector<1x16x64xf32> to vector<16x64xf32>
    %c0_2 = arith.constant 0 : index
    %c0_3 = arith.constant 0 : index
    %2 = vector.load %arg2[%c0_2, %c0_3] : memref<64x128xf32, #tpu.memory_space<vmem>>, vector<64x128xf32>
    %cst = arith.constant dense<0.000000e+00> : vector<16x128xf32>
    %3 = tpu.matmul %1, %2, %cst {dimension_numbers = #tpu.dot_dimension_numbers<[1], [0], [0], [1], [0, 0, 1, 1], [], []>} : vector<16x64xf32>, vector<64x128xf32>, vector<16x128xf32> -> vector<16x128xf32>
    %c0_4 = arith.constant 0 : index
    %c0_5 = arith.constant 0 : index
    %4 = vector.load %arg3[%c0_4, %c0_5] : memref<1x128xf32, #tpu.memory_space<vmem>>, vector<1x128xf32>
    %5 = vector.broadcast %4 : vector<1x128xf32> to vector<16x128xf32>
    %6 = arith.addf %3, %5 : vector<16x128xf32>
    %c0_6 = arith.constant 0 : index
    %c0_7 = arith.constant 0 : index
    %c0_8 = arith.constant 0 : index
    %7 = vector.load %arg4[%c0_6, %c0_7, %c0_8] : memref<1x16x128xf32, #tpu.memory_space<vmem>>, vector<1x16x128xf32>
    %8 = vector.shape_cast %7 : vector<1x16x128xf32> to vector<16x128xf32>
    %9 = vector.shape_cast %6 : vector<16x128xf32> to vector<1x16x128xf32>
    tpu.vector_store %arg4[%c0_6, %c0_7, %c0_8], %9 {strides = array<i32>} : memref<1x16x128xf32, #tpu.memory_space<vmem>>, vector<1x16x128xf32>,
    return
  }
  func.func @transform_0(%arg0: i32) -> (i32, i32, i32) {
    %c0_i32 = arith.constant 0 : i32
    %c0_i32_0 = arith.constant 0 : i32
    %c0_i32_1 = arith.constant 0 : i32
    return %arg0, %c0_i32, %c0_i32_0 : i32, i32, i32
  }
  func.func @transform_1(%arg0: i32) -> (i32, i32) {
    %c0_i32 = arith.constant 0 : i32
    %c0_i32_0 = arith.constant 0 : i32
    %c0_i32_1 = arith.constant 0 : i32
    return %c0_i32, %c0_i32_0 : i32, i32
  }
  func.func @transform_2(%arg0: i32) -> (i32, i32) {
    %c0_i32 = arith.constant 0 : i32
    %c0_i32_0 = arith.constant 0 : i32
    %c0_i32_1 = arith.constant 0 : i32
    return %c0_i32, %c0_i32_0 : i32, i32
  }
  func.func @transform_3(%arg0: i32) -> (i32, i32, i32) {
    %c0_i32 = arith.constant 0 : i32
    %c0_i32_0 = arith.constant 0 : i32
    %c0_i32_1 = arith.constant 0 : i32
    return %arg0, %c0_i32, %c0_i32_0 : i32, i32, i32
  }
}

module attributes {stable_mosaic.version = 11 : i64} {
  func.func @_block_kernel(%arg0: i32, %arg1: memref<1x16x128xf32, #tpu.memory_space<vmem>>, %arg2: memref<6x128x128xf32, #tpu.memory_space<vmem>>, %arg3: memref<12x1x128xf32, #tpu.memory_space<vmem>>, %arg4: memref<1x16x128xf32, #tpu.memory_space<vmem>>, %arg5: memref<1x16x128xf32, #tpu.memory_space<vmem>>) attributes {dimension_semantics = [#tpu.dimension_semantics<parallel>], iteration_bounds = array<i64: 2>, scalar_prefetch = 0 : i64, scratch_operands = 0 : i64, tpu.core_type = #tpu.core_type<tc>, window_params = [{transform_indices = @transform_0, window_bounds = array<i64: 1, 16, 128>}, {pipeline_mode = #tpu.pipeline_mode<synchronous>, transform_indices = @transform_1, window_bounds = array<i64: 6, 128, 128>}, {pipeline_mode = #tpu.pipeline_mode<synchronous>, transform_indices = @transform_2, window_bounds = array<i64: 12, 1, 128>}, {transform_indices = @transform_3, window_bounds = array<i64: 1, 16, 128>}, {transform_indices = @transform_4, window_bounds = array<i64: 1, 16, 128>}]} {
    %c0 = arith.constant 0 : index
    %c0_0 = arith.constant 0 : index
    %c0_1 = arith.constant 0 : index
    %0 = vector.load %arg1[%c0, %c0_0, %c0_1] : memref<1x16x128xf32, #tpu.memory_space<vmem>>, vector<1x16x128xf32>
    %1 = vector.shape_cast %0 : vector<1x16x128xf32> to vector<16x128xf32>
    %c0_2 = arith.constant 0 : index
    %c0_3 = arith.constant 0 : index
    %c0_4 = arith.constant 0 : index
    %2 = vector.load %arg3[%c0_2, %c0_3, %c0_4] : memref<12x1x128xf32, #tpu.memory_space<vmem>>, vector<1x1x128xf32>
    %3 = vector.shape_cast %2 : vector<1x1x128xf32> to vector<1x128xf32>
    %c1 = arith.constant 1 : index
    %c0_5 = arith.constant 0 : index
    %c0_6 = arith.constant 0 : index
    %4 = vector.load %arg3[%c1, %c0_5, %c0_6] : memref<12x1x128xf32, #tpu.memory_space<vmem>>, vector<1x1x128xf32>
    %5 = vector.shape_cast %4 : vector<1x1x128xf32> to vector<1x128xf32>
    %6 = tpu.iota {dimensions = array<i32: 1>} : vector<16x128xi32>
    %c32_i32 = arith.constant 32 : i32
    %7 = vector.broadcast %c32_i32 : i32 to vector<16x128xi32>
    %8 = arith.cmpi slt, %6, %7 : vector<16x128xi32>
    %cst = arith.constant 0.000000e+00 : f32
    %9 = vector.broadcast %cst : f32 to vector<16x128xf32>
    %10 = arith.select %8, %1, %9 : vector<16x128xi1>, vector<16x128xf32>
    %cst_7 = arith.constant dense<0.000000e+00> : vector<16xf32>
    %11 = vector.multi_reduction <add>, %10, %cst_7 [1] : vector<16x128xf32> to vector<16xf32>
    %12 = vector.shape_cast %11 : vector<16xf32> to vector<16x1xf32>
    %cst_8 = arith.constant 3.125000e-02 : f32
    %13 = vector.broadcast %cst_8 : f32 to vector<16x1xf32>
    %14 = arith.mulf %12, %13 : vector<16x1xf32>
    %15 = vector.broadcast %14 : vector<16x1xf32> to vector<16x128xf32>
    %16 = arith.subf %1, %15 : vector<16x128xf32>
    %cst_9 = arith.constant 0.000000e+00 : f32
    %17 = vector.broadcast %cst_9 : f32 to vector<16x128xf32>
    %18 = arith.select %8, %16, %17 : vector<16x128xi1>, vector<16x128xf32>
    %19 = arith.mulf %18, %18 : vector<16x128xf32>
    %cst_10 = arith.constant dense<0.000000e+00> : vector<16xf32>
    %20 = vector.multi_reduction <add>, %19, %cst_10 [1] : vector<16x128xf32> to vector<16xf32>
    %21 = vector.shape_cast %20 : vector<16xf32> to vector<16x1xf32>
    %cst_11 = arith.constant 3.125000e-02 : f32
    %22 = vector.broadcast %cst_11 : f32 to vector<16x1xf32>
    %23 = arith.mulf %21, %22 : vector<16x1xf32>
    %24 = vector.broadcast %14 : vector<16x1xf32> to vector<16x128xf32>
    %25 = arith.subf %1, %24 : vector<16x128xf32>
    %cst_12 = arith.constant 9.99999974E-6 : f32
    %26 = vector.broadcast %cst_12 : f32 to vector<16x1xf32>
    %27 = arith.addf %23, %26 : vector<16x1xf32>
    %28 = math.rsqrt %27 : vector<16x1xf32>
    %29 = vector.broadcast %28 : vector<16x1xf32> to vector<16x128xf32>
    %30 = arith.mulf %25, %29 : vector<16x128xf32>
    %31 = vector.broadcast %3 : vector<1x128xf32> to vector<16x128xf32>
    %32 = arith.mulf %30, %31 : vector<16x128xf32>
    %33 = vector.broadcast %5 : vector<1x128xf32> to vector<16x128xf32>
    %34 = arith.addf %32, %33 : vector<16x128xf32>
    %c0_13 = arith.constant 0 : index
    %c0_14 = arith.constant 0 : index
    %c0_15 = arith.constant 0 : index
    %35 = vector.load %arg2[%c0_13, %c0_14, %c0_15] : memref<6x128x128xf32, #tpu.memory_space<vmem>>, vector<1x128x128xf32>
    %36 = vector.shape_cast %35 : vector<1x128x128xf32> to vector<128x128xf32>
    %cst_16 = arith.constant dense<0.000000e+00> : vector<16x128xf32>
    %37 = tpu.matmul %34, %36, %cst_16 {dimension_numbers = #tpu.dot_dimension_numbers<[1], [0], [0], [1], [0, 0, 1, 1], [], []>} : vector<16x128xf32>, vector<128x128xf32>, vector<16x128xf32> -> vector<16x128xf32>
    %c2 = arith.constant 2 : index
    %c0_17 = arith.constant 0 : index
    %c0_18 = arith.constant 0 : index
    %38 = vector.load %arg3[%c2, %c0_17, %c0_18] : memref<12x1x128xf32, #tpu.memory_space<vmem>>, vector<1x1x128xf32>
    %39 = vector.shape_cast %38 : vector<1x1x128xf32> to vector<1x128xf32>
    %40 = vector.broadcast %39 : vector<1x128xf32> to vector<16x128xf32>
    %41 = arith.addf %37, %40 : vector<16x128xf32>
    %c1_19 = arith.constant 1 : index
    %c0_20 = arith.constant 0 : index
    %c0_21 = arith.constant 0 : index
    %42 = vector.load %arg2[%c1_19, %c0_20, %c0_21] : memref<6x128x128xf32, #tpu.memory_space<vmem>>, vector<1x128x128xf32>
    %43 = vector.shape_cast %42 : vector<1x128x128xf32> to vector<128x128xf32>
    %cst_22 = arith.constant dense<0.000000e+00> : vector<16x128xf32>
    %44 = tpu.matmul %34, %43, %cst_22 {dimension_numbers = #tpu.dot_dimension_numbers<[1], [0], [0], [1], [0, 0, 1, 1], [], []>} : vector<16x128xf32>, vector<128x128xf32>, vector<16x128xf32> -> vector<16x128xf32>
    %c3 = arith.constant 3 : index
    %c0_23 = arith.constant 0 : index
    %c0_24 = arith.constant 0 : index
    %45 = vector.load %arg3[%c3, %c0_23, %c0_24] : memref<12x1x128xf32, #tpu.memory_space<vmem>>, vector<1x1x128xf32>
    %46 = vector.shape_cast %45 : vector<1x1x128xf32> to vector<1x128xf32>
    %47 = vector.broadcast %46 : vector<1x128xf32> to vector<16x128xf32>
    %48 = arith.addf %44, %47 : vector<16x128xf32>
    %c2_25 = arith.constant 2 : index
    %c0_26 = arith.constant 0 : index
    %c0_27 = arith.constant 0 : index
    %49 = vector.load %arg2[%c2_25, %c0_26, %c0_27] : memref<6x128x128xf32, #tpu.memory_space<vmem>>, vector<1x128x128xf32>
    %50 = vector.shape_cast %49 : vector<1x128x128xf32> to vector<128x128xf32>
    %cst_28 = arith.constant dense<0.000000e+00> : vector<16x128xf32>
    %51 = tpu.matmul %34, %50, %cst_28 {dimension_numbers = #tpu.dot_dimension_numbers<[1], [0], [0], [1], [0, 0, 1, 1], [], []>} : vector<16x128xf32>, vector<128x128xf32>, vector<16x128xf32> -> vector<16x128xf32>
    %c4 = arith.constant 4 : index
    %c0_29 = arith.constant 0 : index
    %c0_30 = arith.constant 0 : index
    %52 = vector.load %arg3[%c4, %c0_29, %c0_30] : memref<12x1x128xf32, #tpu.memory_space<vmem>>, vector<1x1x128xf32>
    %53 = vector.shape_cast %52 : vector<1x1x128xf32> to vector<1x128xf32>
    %54 = vector.broadcast %53 : vector<1x128xf32> to vector<16x128xf32>
    %55 = arith.addf %51, %54 : vector<16x128xf32>
    %56 = tpu.iota {dimensions = array<i32: 1>} : vector<16x128xi32>
    %57 = tpu.transpose %48, [1, 0] : vector<16x128xf32> -> vector<128x16xf32>
    %cst_31 = arith.constant 0.000000e+00 : f32
    %58 = vector.broadcast %cst_31 : f32 to vector<16x128xf32>
    %c0_i32 = arith.constant 0 : i32
    %59 = vector.broadcast %c0_i32 : i32 to vector<16x128xi32>
    %60 = arith.cmpi sge, %56, %59 : vector<16x128xi32>
    %c8_i32 = arith.constant 8 : i32
    %61 = vector.broadcast %c8_i32 : i32 to vector<16x128xi32>
    %62 = arith.cmpi slt, %56, %61 : vector<16x128xi32>
    %63 = arith.andi %60, %62 : vector<16x128xi1>
    %cst_32 = arith.constant 0.000000e+00 : f32
    %64 = vector.broadcast %cst_32 : f32 to vector<16x128xf32>
    %65 = arith.select %63, %41, %64 : vector<16x128xi1>, vector<16x128xf32>
    %cst_33 = arith.constant dense<0.000000e+00> : vector<16x16xf32>
    %66 = tpu.matmul %65, %57, %cst_33 {dimension_numbers = #tpu.dot_dimension_numbers<[1], [0], [0], [1], [0, 0, 1, 1], [], []>} : vector<16x128xf32>, vector<128x16xf32>, vector<16x16xf32> -> vector<16x16xf32>
    %cst_34 = arith.constant 0.353553385 : f32
    %67 = vector.broadcast %cst_34 : f32 to vector<16x16xf32>
    %68 = arith.mulf %66, %67 : vector<16x16xf32>
    %cst_35 = arith.constant dense<0xFF800000> : vector<16xf32>
    %69 = vector.multi_reduction <maximumf>, %68, %cst_35 [1] : vector<16x16xf32> to vector<16xf32>
    %70 = vector.shape_cast %69 : vector<16xf32> to vector<16x1xf32>
    %71 = vector.broadcast %70 : vector<16x1xf32> to vector<16x16xf32>
    %72 = arith.subf %68, %71 : vector<16x16xf32>
    %73 = math.exp %72 : vector<16x16xf32>
    %cst_36 = arith.constant dense<0.000000e+00> : vector<16xf32>
    %74 = vector.multi_reduction <add>, %73, %cst_36 [1] : vector<16x16xf32> to vector<16xf32>
    %75 = vector.shape_cast %74 : vector<16xf32> to vector<16x1xf32>
    %76 = tpu.reciprocal %75 {approx = true} : vector<16x1xf32> -> vector<16x1xf32>
    %cst_37 = arith.constant dense<0.000000e+00> : vector<16x128xf32>
    %77 = tpu.matmul %73, %55, %cst_37 {dimension_numbers = #tpu.dot_dimension_numbers<[1], [0], [0], [1], [0, 0, 1, 1], [], []>} : vector<16x16xf32>, vector<16x128xf32>, vector<16x128xf32> -> vector<16x128xf32>
    %cst_38 = arith.constant 0.000000e+00 : f32
    %78 = vector.broadcast %cst_38 : f32 to vector<16x128xf32>
    %79 = arith.select %63, %77, %78 : vector<16x128xi1>, vector<16x128xf32>
    %80 = vector.broadcast %76 : vector<16x1xf32> to vector<16x128xf32>
    %81 = arith.mulf %79, %80 : vector<16x128xf32>
    %82 = arith.addf %58, %81 : vector<16x128xf32>
    %c8_i32_39 = arith.constant 8 : i32
    %83 = vector.broadcast %c8_i32_39 : i32 to vector<16x128xi32>
    %84 = arith.cmpi sge, %56, %83 : vector<16x128xi32>
    %c16_i32 = arith.constant 16 : i32
    %85 = vector.broadcast %c16_i32 : i32 to vector<16x128xi32>
    %86 = arith.cmpi slt, %56, %85 : vector<16x128xi32>
    %87 = arith.andi %84, %86 : vector<16x128xi1>
    %cst_40 = arith.constant 0.000000e+00 : f32
    %88 = vector.broadcast %cst_40 : f32 to vector<16x128xf32>
    %89 = arith.select %87, %41, %88 : vector<16x128xi1>, vector<16x128xf32>
    %cst_41 = arith.constant dense<0.000000e+00> : vector<16x16xf32>
    %90 = tpu.matmul %89, %57, %cst_41 {dimension_numbers = #tpu.dot_dimension_numbers<[1], [0], [0], [1], [0, 0, 1, 1], [], []>} : vector<16x128xf32>, vector<128x16xf32>, vector<16x16xf32> -> vector<16x16xf32>
    %cst_42 = arith.constant 0.353553385 : f32
    %91 = vector.broadcast %cst_42 : f32 to vector<16x16xf32>
    %92 = arith.mulf %90, %91 : vector<16x16xf32>
    %cst_43 = arith.constant dense<0xFF800000> : vector<16xf32>
    %93 = vector.multi_reduction <maximumf>, %92, %cst_43 [1] : vector<16x16xf32> to vector<16xf32>
    %94 = vector.shape_cast %93 : vector<16xf32> to vector<16x1xf32>
    %95 = vector.broadcast %94 : vector<16x1xf32> to vector<16x16xf32>
    %96 = arith.subf %92, %95 : vector<16x16xf32>
    %97 = math.exp %96 : vector<16x16xf32>
    %cst_44 = arith.constant dense<0.000000e+00> : vector<16xf32>
    %98 = vector.multi_reduction <add>, %97, %cst_44 [1] : vector<16x16xf32> to vector<16xf32>
    %99 = vector.shape_cast %98 : vector<16xf32> to vector<16x1xf32>
    %100 = tpu.reciprocal %99 {approx = true} : vector<16x1xf32> -> vector<16x1xf32>
    %cst_45 = arith.constant dense<0.000000e+00> : vector<16x128xf32>
    %101 = tpu.matmul %97, %55, %cst_45 {dimension_numbers = #tpu.dot_dimension_numbers<[1], [0], [0], [1], [0, 0, 1, 1], [], []>} : vector<16x16xf32>, vector<16x128xf32>, vector<16x128xf32> -> vector<16x128xf32>
    %cst_46 = arith.constant 0.000000e+00 : f32
    %102 = vector.broadcast %cst_46 : f32 to vector<16x128xf32>
    %103 = arith.select %87, %101, %102 : vector<16x128xi1>, vector<16x128xf32>
    %104 = vector.broadcast %100 : vector<16x1xf32> to vector<16x128xf32>
    %105 = arith.mulf %103, %104 : vector<16x128xf32>
    %106 = arith.addf %82, %105 : vector<16x128xf32>
    %c16_i32_47 = arith.constant 16 : i32
    %107 = vector.broadcast %c16_i32_47 : i32 to vector<16x128xi32>
    %108 = arith.cmpi sge, %56, %107 : vector<16x128xi32>
    %c24_i32 = arith.constant 24 : i32
    %109 = vector.broadcast %c24_i32 : i32 to vector<16x128xi32>
    %110 = arith.cmpi slt, %56, %109 : vector<16x128xi32>
    %111 = arith.andi %108, %110 : vector<16x128xi1>
    %cst_48 = arith.constant 0.000000e+00 : f32
    %112 = vector.broadcast %cst_48 : f32 to vector<16x128xf32>
    %113 = arith.select %111, %41, %112 : vector<16x128xi1>, vector<16x128xf32>
    %cst_49 = arith.constant dense<0.000000e+00> : vector<16x16xf32>
    %114 = tpu.matmul %113, %57, %cst_49 {dimension_numbers = #tpu.dot_dimension_numbers<[1], [0], [0], [1], [0, 0, 1, 1], [], []>} : vector<16x128xf32>, vector<128x16xf32>, vector<16x16xf32> -> vector<16x16xf32>
    %cst_50 = arith.constant 0.353553385 : f32
    %115 = vector.broadcast %cst_50 : f32 to vector<16x16xf32>
    %116 = arith.mulf %114, %115 : vector<16x16xf32>
    %cst_51 = arith.constant dense<0xFF800000> : vector<16xf32>
    %117 = vector.multi_reduction <maximumf>, %116, %cst_51 [1] : vector<16x16xf32> to vector<16xf32>
    %118 = vector.shape_cast %117 : vector<16xf32> to vector<16x1xf32>
    %119 = vector.broadcast %118 : vector<16x1xf32> to vector<16x16xf32>
    %120 = arith.subf %116, %119 : vector<16x16xf32>
    %121 = math.exp %120 : vector<16x16xf32>
    %cst_52 = arith.constant dense<0.000000e+00> : vector<16xf32>
    %122 = vector.multi_reduction <add>, %121, %cst_52 [1] : vector<16x16xf32> to vector<16xf32>
    %123 = vector.shape_cast %122 : vector<16xf32> to vector<16x1xf32>
    %124 = tpu.reciprocal %123 {approx = true} : vector<16x1xf32> -> vector<16x1xf32>
    %cst_53 = arith.constant dense<0.000000e+00> : vector<16x128xf32>
    %125 = tpu.matmul %121, %55, %cst_53 {dimension_numbers = #tpu.dot_dimension_numbers<[1], [0], [0], [1], [0, 0, 1, 1], [], []>} : vector<16x16xf32>, vector<16x128xf32>, vector<16x128xf32> -> vector<16x128xf32>
    %cst_54 = arith.constant 0.000000e+00 : f32
    %126 = vector.broadcast %cst_54 : f32 to vector<16x128xf32>
    %127 = arith.select %111, %125, %126 : vector<16x128xi1>, vector<16x128xf32>
    %128 = vector.broadcast %124 : vector<16x1xf32> to vector<16x128xf32>
    %129 = arith.mulf %127, %128 : vector<16x128xf32>
    %130 = arith.addf %106, %129 : vector<16x128xf32>
    %c24_i32_55 = arith.constant 24 : i32
    %131 = vector.broadcast %c24_i32_55 : i32 to vector<16x128xi32>
    %132 = arith.cmpi sge, %56, %131 : vector<16x128xi32>
    %c32_i32_56 = arith.constant 32 : i32
    %133 = vector.broadcast %c32_i32_56 : i32 to vector<16x128xi32>
    %134 = arith.cmpi slt, %56, %133 : vector<16x128xi32>
    %135 = arith.andi %132, %134 : vector<16x128xi1>
    %cst_57 = arith.constant 0.000000e+00 : f32
    %136 = vector.broadcast %cst_57 : f32 to vector<16x128xf32>
    %137 = arith.select %135, %41, %136 : vector<16x128xi1>, vector<16x128xf32>
    %cst_58 = arith.constant dense<0.000000e+00> : vector<16x16xf32>
    %138 = tpu.matmul %137, %57, %cst_58 {dimension_numbers = #tpu.dot_dimension_numbers<[1], [0], [0], [1], [0, 0, 1, 1], [], []>} : vector<16x128xf32>, vector<128x16xf32>, vector<16x16xf32> -> vector<16x16xf32>
    %cst_59 = arith.constant 0.353553385 : f32
    %139 = vector.broadcast %cst_59 : f32 to vector<16x16xf32>
    %140 = arith.mulf %138, %139 : vector<16x16xf32>
    %cst_60 = arith.constant dense<0xFF800000> : vector<16xf32>
    %141 = vector.multi_reduction <maximumf>, %140, %cst_60 [1] : vector<16x16xf32> to vector<16xf32>
    %142 = vector.shape_cast %141 : vector<16xf32> to vector<16x1xf32>
    %143 = vector.broadcast %142 : vector<16x1xf32> to vector<16x16xf32>
    %144 = arith.subf %140, %143 : vector<16x16xf32>
    %145 = math.exp %144 : vector<16x16xf32>
    %cst_61 = arith.constant dense<0.000000e+00> : vector<16xf32>
    %146 = vector.multi_reduction <add>, %145, %cst_61 [1] : vector<16x16xf32> to vector<16xf32>
    %147 = vector.shape_cast %146 : vector<16xf32> to vector<16x1xf32>
    %148 = tpu.reciprocal %147 {approx = true} : vector<16x1xf32> -> vector<16x1xf32>
    %cst_62 = arith.constant dense<0.000000e+00> : vector<16x128xf32>
    %149 = tpu.matmul %145, %55, %cst_62 {dimension_numbers = #tpu.dot_dimension_numbers<[1], [0], [0], [1], [0, 0, 1, 1], [], []>} : vector<16x16xf32>, vector<16x128xf32>, vector<16x128xf32> -> vector<16x128xf32>
    %cst_63 = arith.constant 0.000000e+00 : f32
    %150 = vector.broadcast %cst_63 : f32 to vector<16x128xf32>
    %151 = arith.select %135, %149, %150 : vector<16x128xi1>, vector<16x128xf32>
    %152 = vector.broadcast %148 : vector<16x1xf32> to vector<16x128xf32>
    %153 = arith.mulf %151, %152 : vector<16x128xf32>
    %154 = arith.addf %130, %153 : vector<16x128xf32>
    %c3_64 = arith.constant 3 : index
    %c0_65 = arith.constant 0 : index
    %c0_66 = arith.constant 0 : index
    %155 = vector.load %arg2[%c3_64, %c0_65, %c0_66] : memref<6x128x128xf32, #tpu.memory_space<vmem>>, vector<1x128x128xf32>
    %156 = vector.shape_cast %155 : vector<1x128x128xf32> to vector<128x128xf32>
    %cst_67 = arith.constant dense<0.000000e+00> : vector<16x128xf32>
    %157 = tpu.matmul %154, %156, %cst_67 {dimension_numbers = #tpu.dot_dimension_numbers<[1], [0], [0], [1], [0, 0, 1, 1], [], []>} : vector<16x128xf32>, vector<128x128xf32>, vector<16x128xf32> -> vector<16x128xf32>
    %c5 = arith.constant 5 : index
    %c0_68 = arith.constant 0 : index
    %c0_69 = arith.constant 0 : index
    %158 = vector.load %arg3[%c5, %c0_68, %c0_69] : memref<12x1x128xf32, #tpu.memory_space<vmem>>, vector<1x1x128xf32>
    %159 = vector.shape_cast %158 : vector<1x1x128xf32> to vector<1x128xf32>
    %160 = vector.broadcast %159 : vector<1x128xf32> to vector<16x128xf32>
    %161 = arith.addf %157, %160 : vector<16x128xf32>
    %162 = arith.addf %1, %161 : vector<16x128xf32>
    %c6 = arith.constant 6 : index
    %c0_70 = arith.constant 0 : index
    %c0_71 = arith.constant 0 : index
    %163 = vector.load %arg3[%c6, %c0_70, %c0_71] : memref<12x1x128xf32, #tpu.memory_space<vmem>>, vector<1x1x128xf32>
    %164 = vector.shape_cast %163 : vector<1x1x128xf32> to vector<1x128xf32>
    %c7 = arith.constant 7 : index
    %c0_72 = arith.constant 0 : index
    %c0_73 = arith.constant 0 : index
    %165 = vector.load %arg3[%c7, %c0_72, %c0_73] : memref<12x1x128xf32, #tpu.memory_space<vmem>>, vector<1x1x128xf32>
    %166 = vector.shape_cast %165 : vector<1x1x128xf32> to vector<1x128xf32>
    %167 = tpu.iota {dimensions = array<i32: 1>} : vector<16x128xi32>
    %c32_i32_74 = arith.constant 32 : i32
    %168 = vector.broadcast %c32_i32_74 : i32 to vector<16x128xi32>
    %169 = arith.cmpi slt, %167, %168 : vector<16x128xi32>
    %cst_75 = arith.constant 0.000000e+00 : f32
    %170 = vector.broadcast %cst_75 : f32 to vector<16x128xf32>
    %171 = arith.select %169, %162, %170 : vector<16x128xi1>, vector<16x128xf32>
    %cst_76 = arith.constant dense<0.000000e+00> : vector<16xf32>
    %172 = vector.multi_reduction <add>, %171, %cst_76 [1] : vector<16x128xf32> to vector<16xf32>
    %173 = vector.shape_cast %172 : vector<16xf32> to vector<16x1xf32>
    %cst_77 = arith.constant 3.125000e-02 : f32
    %174 = vector.broadcast %cst_77 : f32 to vector<16x1xf32>
    %175 = arith.mulf %173, %174 : vector<16x1xf32>
    %176 = vector.broadcast %175 : vector<16x1xf32> to vector<16x128xf32>
    %177 = arith.subf %162, %176 : vector<16x128xf32>
    %cst_78 = arith.constant 0.000000e+00 : f32
    %178 = vector.broadcast %cst_78 : f32 to vector<16x128xf32>
    %179 = arith.select %169, %177, %178 : vector<16x128xi1>, vector<16x128xf32>
    %180 = arith.mulf %179, %179 : vector<16x128xf32>
    %cst_79 = arith.constant dense<0.000000e+00> : vector<16xf32>
    %181 = vector.multi_reduction <add>, %180, %cst_79 [1] : vector<16x128xf32> to vector<16xf32>
    %182 = vector.shape_cast %181 : vector<16xf32> to vector<16x1xf32>
    %cst_80 = arith.constant 3.125000e-02 : f32
    %183 = vector.broadcast %cst_80 : f32 to vector<16x1xf32>
    %184 = arith.mulf %182, %183 : vector<16x1xf32>
    %185 = vector.broadcast %175 : vector<16x1xf32> to vector<16x128xf32>
    %186 = arith.subf %162, %185 : vector<16x128xf32>
    %cst_81 = arith.constant 9.99999974E-6 : f32
    %187 = vector.broadcast %cst_81 : f32 to vector<16x1xf32>
    %188 = arith.addf %184, %187 : vector<16x1xf32>
    %189 = math.rsqrt %188 : vector<16x1xf32>
    %190 = vector.broadcast %189 : vector<16x1xf32> to vector<16x128xf32>
    %191 = arith.mulf %186, %190 : vector<16x128xf32>
    %192 = vector.broadcast %164 : vector<1x128xf32> to vector<16x128xf32>
    %193 = arith.mulf %191, %192 : vector<16x128xf32>
    %194 = vector.broadcast %166 : vector<1x128xf32> to vector<16x128xf32>
    %195 = arith.addf %193, %194 : vector<16x128xf32>
    %c4_82 = arith.constant 4 : index
    %c0_83 = arith.constant 0 : index
    %c0_84 = arith.constant 0 : index
    %196 = vector.load %arg2[%c4_82, %c0_83, %c0_84] : memref<6x128x128xf32, #tpu.memory_space<vmem>>, vector<1x128x128xf32>
    %197 = vector.shape_cast %196 : vector<1x128x128xf32> to vector<128x128xf32>
    %cst_85 = arith.constant dense<0.000000e+00> : vector<16x128xf32>
    %198 = tpu.matmul %195, %197, %cst_85 {dimension_numbers = #tpu.dot_dimension_numbers<[1], [0], [0], [1], [0, 0, 1, 1], [], []>} : vector<16x128xf32>, vector<128x128xf32>, vector<16x128xf32> -> vector<16x128xf32>
    %c8 = arith.constant 8 : index
    %c0_86 = arith.constant 0 : index
    %c0_87 = arith.constant 0 : index
    %199 = vector.load %arg3[%c8, %c0_86, %c0_87] : memref<12x1x128xf32, #tpu.memory_space<vmem>>, vector<1x1x128xf32>
    %200 = vector.shape_cast %199 : vector<1x1x128xf32> to vector<1x128xf32>
    %201 = vector.broadcast %200 : vector<1x128xf32> to vector<16x128xf32>
    %202 = arith.addf %198, %201 : vector<16x128xf32>
    %203 = arith.mulf %202, %202 : vector<16x128xf32>
    %204 = arith.mulf %202, %203 : vector<16x128xf32>
    %cst_88 = arith.constant 4.471500e-02 : f32
    %205 = vector.broadcast %cst_88 : f32 to vector<16x128xf32>
    %206 = arith.mulf %205, %204 : vector<16x128xf32>
    %207 = arith.addf %202, %206 : vector<16x128xf32>
    %cst_89 = arith.constant 0.797884583 : f32
    %208 = vector.broadcast %cst_89 : f32 to vector<16x128xf32>
    %209 = arith.mulf %208, %207 : vector<16x128xf32>
    %210 = math.tanh %209 : vector<16x128xf32>
    %cst_90 = arith.constant 1.000000e+00 : f32
    %211 = vector.broadcast %cst_90 : f32 to vector<16x128xf32>
    %212 = arith.addf %211, %210 : vector<16x128xf32>
    %cst_91 = arith.constant 5.000000e-01 : f32
    %213 = vector.broadcast %cst_91 : f32 to vector<16x128xf32>
    %214 = arith.mulf %213, %212 : vector<16x128xf32>
    %215 = arith.mulf %202, %214 : vector<16x128xf32>
    %c5_92 = arith.constant 5 : index
    %c0_93 = arith.constant 0 : index
    %c0_94 = arith.constant 0 : index
    %216 = vector.load %arg2[%c5_92, %c0_93, %c0_94] : memref<6x128x128xf32, #tpu.memory_space<vmem>>, vector<1x128x128xf32>
    %217 = vector.shape_cast %216 : vector<1x128x128xf32> to vector<128x128xf32>
    %cst_95 = arith.constant dense<0.000000e+00> : vector<16x128xf32>
    %218 = tpu.matmul %215, %217, %cst_95 {dimension_numbers = #tpu.dot_dimension_numbers<[1], [0], [0], [1], [0, 0, 1, 1], [], []>} : vector<16x128xf32>, vector<128x128xf32>, vector<16x128xf32> -> vector<16x128xf32>
    %c9 = arith.constant 9 : index
    %c0_96 = arith.constant 0 : index
    %c0_97 = arith.constant 0 : index
    %219 = vector.load %arg3[%c9, %c0_96, %c0_97] : memref<12x1x128xf32, #tpu.memory_space<vmem>>, vector<1x1x128xf32>
    %220 = vector.shape_cast %219 : vector<1x1x128xf32> to vector<1x128xf32>
    %221 = vector.broadcast %220 : vector<1x128xf32> to vector<16x128xf32>
    %222 = arith.addf %218, %221 : vector<16x128xf32>
    %223 = arith.addf %162, %222 : vector<16x128xf32>
    %c10 = arith.constant 10 : index
    %c0_98 = arith.constant 0 : index
    %c0_99 = arith.constant 0 : index
    %224 = vector.load %arg3[%c10, %c0_98, %c0_99] : memref<12x1x128xf32, #tpu.memory_space<vmem>>, vector<1x1x128xf32>
    %225 = vector.shape_cast %224 : vector<1x1x128xf32> to vector<1x128xf32>
    %c11 = arith.constant 11 : index
    %c0_100 = arith.constant 0 : index
    %c0_101 = arith.constant 0 : index
    %226 = vector.load %arg3[%c11, %c0_100, %c0_101] : memref<12x1x128xf32, #tpu.memory_space<vmem>>, vector<1x1x128xf32>
    %227 = vector.shape_cast %226 : vector<1x1x128xf32> to vector<1x128xf32>
    %228 = tpu.iota {dimensions = array<i32: 1>} : vector<16x128xi32>
    %c32_i32_102 = arith.constant 32 : i32
    %229 = vector.broadcast %c32_i32_102 : i32 to vector<16x128xi32>
    %230 = arith.cmpi slt, %228, %229 : vector<16x128xi32>
    %cst_103 = arith.constant 0.000000e+00 : f32
    %231 = vector.broadcast %cst_103 : f32 to vector<16x128xf32>
    %232 = arith.select %230, %223, %231 : vector<16x128xi1>, vector<16x128xf32>
    %cst_104 = arith.constant dense<0.000000e+00> : vector<16xf32>
    %233 = vector.multi_reduction <add>, %232, %cst_104 [1] : vector<16x128xf32> to vector<16xf32>
    %234 = vector.shape_cast %233 : vector<16xf32> to vector<16x1xf32>
    %cst_105 = arith.constant 3.125000e-02 : f32
    %235 = vector.broadcast %cst_105 : f32 to vector<16x1xf32>
    %236 = arith.mulf %234, %235 : vector<16x1xf32>
    %237 = vector.broadcast %236 : vector<16x1xf32> to vector<16x128xf32>
    %238 = arith.subf %223, %237 : vector<16x128xf32>
    %cst_106 = arith.constant 0.000000e+00 : f32
    %239 = vector.broadcast %cst_106 : f32 to vector<16x128xf32>
    %240 = arith.select %230, %238, %239 : vector<16x128xi1>, vector<16x128xf32>
    %241 = arith.mulf %240, %240 : vector<16x128xf32>
    %cst_107 = arith.constant dense<0.000000e+00> : vector<16xf32>
    %242 = vector.multi_reduction <add>, %241, %cst_107 [1] : vector<16x128xf32> to vector<16xf32>
    %243 = vector.shape_cast %242 : vector<16xf32> to vector<16x1xf32>
    %cst_108 = arith.constant 3.125000e-02 : f32
    %244 = vector.broadcast %cst_108 : f32 to vector<16x1xf32>
    %245 = arith.mulf %243, %244 : vector<16x1xf32>
    %246 = vector.broadcast %236 : vector<16x1xf32> to vector<16x128xf32>
    %247 = arith.subf %223, %246 : vector<16x128xf32>
    %cst_109 = arith.constant 9.99999974E-6 : f32
    %248 = vector.broadcast %cst_109 : f32 to vector<16x1xf32>
    %249 = arith.addf %245, %248 : vector<16x1xf32>
    %250 = math.rsqrt %249 : vector<16x1xf32>
    %251 = vector.broadcast %250 : vector<16x1xf32> to vector<16x128xf32>
    %252 = arith.mulf %247, %251 : vector<16x128xf32>
    %253 = vector.broadcast %225 : vector<1x128xf32> to vector<16x128xf32>
    %254 = arith.mulf %252, %253 : vector<16x128xf32>
    %255 = vector.broadcast %227 : vector<1x128xf32> to vector<16x128xf32>
    %256 = arith.addf %254, %255 : vector<16x128xf32>
    %c0_110 = arith.constant 0 : index
    %c0_111 = arith.constant 0 : index
    %c0_112 = arith.constant 0 : index
    %257 = vector.load %arg4[%c0_110, %c0_111, %c0_112] : memref<1x16x128xf32, #tpu.memory_space<vmem>>, vector<1x16x128xf32>
    %258 = vector.shape_cast %257 : vector<1x16x128xf32> to vector<16x128xf32>
    %259 = vector.shape_cast %223 : vector<16x128xf32> to vector<1x16x128xf32>
    tpu.vector_store %arg4[%c0_110, %c0_111, %c0_112], %259 {strides = array<i32>} : memref<1x16x128xf32, #tpu.memory_space<vmem>>, vector<1x16x128xf32>,
    %c0_113 = arith.constant 0 : index
    %c0_114 = arith.constant 0 : index
    %c0_115 = arith.constant 0 : index
    %260 = vector.load %arg5[%c0_113, %c0_114, %c0_115] : memref<1x16x128xf32, #tpu.memory_space<vmem>>, vector<1x16x128xf32>
    %261 = vector.shape_cast %260 : vector<1x16x128xf32> to vector<16x128xf32>
    %262 = vector.shape_cast %256 : vector<16x128xf32> to vector<1x16x128xf32>
    tpu.vector_store %arg5[%c0_113, %c0_114, %c0_115], %262 {strides = array<i32>} : memref<1x16x128xf32, #tpu.memory_space<vmem>>, vector<1x16x128xf32>,
    return
  }
  func.func @transform_0(%arg0: i32) -> (i32, i32, i32) {
    %c0_i32 = arith.constant 0 : i32
    %c0_i32_0 = arith.constant 0 : i32
    %c0_i32_1 = arith.constant 0 : i32
    return %arg0, %c0_i32, %c0_i32_0 : i32, i32, i32
  }
  func.func @transform_1(%arg0: i32) -> (i32, i32, i32) {
    %c0_i32 = arith.constant 0 : i32
    %c0_i32_0 = arith.constant 0 : i32
    %c0_i32_1 = arith.constant 0 : i32
    %c0_i32_2 = arith.constant 0 : i32
    return %c0_i32, %c0_i32_0, %c0_i32_1 : i32, i32, i32
  }
  func.func @transform_2(%arg0: i32) -> (i32, i32, i32) {
    %c0_i32 = arith.constant 0 : i32
    %c0_i32_0 = arith.constant 0 : i32
    %c0_i32_1 = arith.constant 0 : i32
    %c0_i32_2 = arith.constant 0 : i32
    return %c0_i32, %c0_i32_0, %c0_i32_1 : i32, i32, i32
  }
  func.func @transform_3(%arg0: i32) -> (i32, i32, i32) {
    %c0_i32 = arith.constant 0 : i32
    %c0_i32_0 = arith.constant 0 : i32
    %c0_i32_1 = arith.constant 0 : i32
    return %arg0, %c0_i32, %c0_i32_0 : i32, i32, i32
  }
  func.func @transform_4(%arg0: i32) -> (i32, i32, i32) {
    %c0_i32 = arith.constant 0 : i32
    %c0_i32_0 = arith.constant 0 : i32
    %c0_i32_1 = arith.constant 0 : i32
    return %arg0, %c0_i32, %c0_i32_0 : i32, i32, i32
  }
}

module attributes {stable_mosaic.version = 11 : i64} {
  func.func @_spec_mix_kernel(%arg0: i32, %arg1: memref<1x12x128xf32, #tpu.memory_space<vmem>>, %arg2: memref<3x128x128xf32, #tpu.memory_space<vmem>>, %arg3: memref<3x12x1xf32, #tpu.memory_space<vmem>>, %arg4: memref<1x12x128xf32, #tpu.memory_space<vmem>>) attributes {dimension_semantics = [#tpu.dimension_semantics<parallel>], iteration_bounds = array<i64: 2>, scalar_prefetch = 0 : i64, scratch_operands = 0 : i64, tpu.core_type = #tpu.core_type<tc>, window_params = [{transform_indices = @transform_0, window_bounds = array<i64: 1, 12, 128>}, {pipeline_mode = #tpu.pipeline_mode<synchronous>, transform_indices = @transform_1, window_bounds = array<i64: 3, 128, 128>}, {pipeline_mode = #tpu.pipeline_mode<synchronous>, transform_indices = @transform_2, window_bounds = array<i64: 3, 12, 1>}, {transform_indices = @transform_3, window_bounds = array<i64: 1, 12, 128>}]} {
    %c0 = arith.constant 0 : index
    %c0_0 = arith.constant 0 : index
    %c0_1 = arith.constant 0 : index
    %0 = vector.load %arg1[%c0, %c0_0, %c0_1] : memref<1x12x128xf32, #tpu.memory_space<vmem>>, vector<1x12x128xf32>
    %1 = vector.shape_cast %0 : vector<1x12x128xf32> to vector<12x128xf32>
    %cst = arith.constant 0.000000e+00 : f32
    %2 = vector.broadcast %cst : f32 to vector<12x128xf32>
    %c0_2 = arith.constant 0 : index
    %c0_3 = arith.constant 0 : index
    %c0_4 = arith.constant 0 : index
    %3 = vector.load %arg2[%c0_2, %c0_3, %c0_4] : memref<3x128x128xf32, #tpu.memory_space<vmem>>, vector<1x128x128xf32>
    %4 = vector.shape_cast %3 : vector<1x128x128xf32> to vector<128x128xf32>
    %cst_5 = arith.constant dense<0.000000e+00> : vector<12x128xf32>
    %5 = tpu.matmul %1, %4, %cst_5 {dimension_numbers = #tpu.dot_dimension_numbers<[1], [0], [0], [1], [0, 0, 1, 1], [], []>} : vector<12x128xf32>, vector<128x128xf32>, vector<12x128xf32> -> vector<12x128xf32>
    %c0_6 = arith.constant 0 : index
    %c0_7 = arith.constant 0 : index
    %c0_8 = arith.constant 0 : index
    %6 = vector.load %arg3[%c0_6, %c0_7, %c0_8] : memref<3x12x1xf32, #tpu.memory_space<vmem>>, vector<1x12x1xf32>
    %7 = vector.shape_cast %6 : vector<1x12x1xf32> to vector<12x1xf32>
    %8 = vector.broadcast %7 : vector<12x1xf32> to vector<12x128xf32>
    %9 = arith.mulf %8, %5 : vector<12x128xf32>
    %10 = arith.addf %2, %9 : vector<12x128xf32>
    %c1 = arith.constant 1 : index
    %c0_9 = arith.constant 0 : index
    %c0_10 = arith.constant 0 : index
    %11 = vector.load %arg2[%c1, %c0_9, %c0_10] : memref<3x128x128xf32, #tpu.memory_space<vmem>>, vector<1x128x128xf32>
    %12 = vector.shape_cast %11 : vector<1x128x128xf32> to vector<128x128xf32>
    %cst_11 = arith.constant dense<0.000000e+00> : vector<12x128xf32>
    %13 = tpu.matmul %1, %12, %cst_11 {dimension_numbers = #tpu.dot_dimension_numbers<[1], [0], [0], [1], [0, 0, 1, 1], [], []>} : vector<12x128xf32>, vector<128x128xf32>, vector<12x128xf32> -> vector<12x128xf32>
    %c1_12 = arith.constant 1 : index
    %c0_13 = arith.constant 0 : index
    %c0_14 = arith.constant 0 : index
    %14 = vector.load %arg3[%c1_12, %c0_13, %c0_14] : memref<3x12x1xf32, #tpu.memory_space<vmem>>, vector<1x12x1xf32>
    %15 = vector.shape_cast %14 : vector<1x12x1xf32> to vector<12x1xf32>
    %16 = vector.broadcast %15 : vector<12x1xf32> to vector<12x128xf32>
    %17 = arith.mulf %16, %13 : vector<12x128xf32>
    %18 = arith.addf %10, %17 : vector<12x128xf32>
    %c2 = arith.constant 2 : index
    %c0_15 = arith.constant 0 : index
    %c0_16 = arith.constant 0 : index
    %19 = vector.load %arg2[%c2, %c0_15, %c0_16] : memref<3x128x128xf32, #tpu.memory_space<vmem>>, vector<1x128x128xf32>
    %20 = vector.shape_cast %19 : vector<1x128x128xf32> to vector<128x128xf32>
    %cst_17 = arith.constant dense<0.000000e+00> : vector<12x128xf32>
    %21 = tpu.matmul %1, %20, %cst_17 {dimension_numbers = #tpu.dot_dimension_numbers<[1], [0], [0], [1], [0, 0, 1, 1], [], []>} : vector<12x128xf32>, vector<128x128xf32>, vector<12x128xf32> -> vector<12x128xf32>
    %c2_18 = arith.constant 2 : index
    %c0_19 = arith.constant 0 : index
    %c0_20 = arith.constant 0 : index
    %22 = vector.load %arg3[%c2_18, %c0_19, %c0_20] : memref<3x12x1xf32, #tpu.memory_space<vmem>>, vector<1x12x1xf32>
    %23 = vector.shape_cast %22 : vector<1x12x1xf32> to vector<12x1xf32>
    %24 = vector.broadcast %23 : vector<12x1xf32> to vector<12x128xf32>
    %25 = arith.mulf %24, %21 : vector<12x128xf32>
    %26 = arith.addf %18, %25 : vector<12x128xf32>
    %cst_21 = arith.constant 0.333333343 : f32
    %27 = vector.broadcast %cst_21 : f32 to vector<12x128xf32>
    %28 = arith.mulf %26, %27 : vector<12x128xf32>
    %c0_22 = arith.constant 0 : index
    %c0_23 = arith.constant 0 : index
    %c0_24 = arith.constant 0 : index
    %29 = vector.load %arg4[%c0_22, %c0_23, %c0_24] : memref<1x12x128xf32, #tpu.memory_space<vmem>>, vector<1x12x128xf32>
    %30 = vector.shape_cast %29 : vector<1x12x128xf32> to vector<12x128xf32>
    %31 = vector.shape_cast %28 : vector<12x128xf32> to vector<1x12x128xf32>
    tpu.vector_store %arg4[%c0_22, %c0_23, %c0_24], %31 {strides = array<i32>} : memref<1x12x128xf32, #tpu.memory_space<vmem>>, vector<1x12x128xf32>,
    return
  }
  func.func @transform_0(%arg0: i32) -> (i32, i32, i32) {
    %c0_i32 = arith.constant 0 : i32
    %c0_i32_0 = arith.constant 0 : i32
    %c0_i32_1 = arith.constant 0 : i32
    return %arg0, %c0_i32, %c0_i32_0 : i32, i32, i32
  }
  func.func @transform_1(%arg0: i32) -> (i32, i32, i32) {
    %c0_i32 = arith.constant 0 : i32
    %c0_i32_0 = arith.constant 0 : i32
    %c0_i32_1 = arith.constant 0 : i32
    %c0_i32_2 = arith.constant 0 : i32
    return %c0_i32, %c0_i32_0, %c0_i32_1 : i32, i32, i32
  }
  func.func @transform_2(%arg0: i32) -> (i32, i32, i32) {
    %c0_i32 = arith.constant 0 : i32
    %c0_i32_0 = arith.constant 0 : i32
    %c0_i32_1 = arith.constant 0 : i32
    %c0_i32_2 = arith.constant 0 : i32
    return %c0_i32, %c0_i32_0, %c0_i32_1 : i32, i32, i32
  }
  func.func @transform_3(%arg0: i32) -> (i32, i32, i32) {
    %c0_i32 = arith.constant 0 : i32
    %c0_i32_0 = arith.constant 0 : i32
    %c0_i32_1 = arith.constant 0 : i32
    return %arg0, %c0_i32, %c0_i32_0 : i32, i32, i32
  }
}

module attributes {stable_mosaic.version = 11 : i64} {
  func.func @_head_kernel(%arg0: i32, %arg1: memref<2x16x128xf32, #tpu.memory_space<vmem>>, %arg2: memref<2x1x128xf32, #tpu.memory_space<vmem>>, %arg3: memref<128x128xf32, #tpu.memory_space<vmem>>, %arg4: memref<1x128xf32, #tpu.memory_space<vmem>>, %arg5: memref<2x128xf32, #tpu.memory_space<vmem>>) attributes {dimension_semantics = [#tpu.dimension_semantics<arbitrary>], iteration_bounds = array<i64: 1>, scalar_prefetch = 0 : i64, scratch_operands = 0 : i64, tpu.core_type = #tpu.core_type<tc>, window_params = [{pipeline_mode = #tpu.pipeline_mode<synchronous>, transform_indices = @transform_0, window_bounds = array<i64: 2, 16, 128>}, {pipeline_mode = #tpu.pipeline_mode<synchronous>, transform_indices = @transform_1, window_bounds = array<i64: 2, 1, 128>}, {pipeline_mode = #tpu.pipeline_mode<synchronous>, transform_indices = @transform_2, window_bounds = array<i64: 128, 128>}, {pipeline_mode = #tpu.pipeline_mode<synchronous>, transform_indices = @transform_3, window_bounds = array<i64: 1, 128>}, {pipeline_mode = #tpu.pipeline_mode<synchronous>, transform_indices = @transform_4, window_bounds = array<i64: 2, 128>}]} {
    %c0 = arith.constant 0 : index
    %c0_0 = arith.constant 0 : index
    %c0_1 = arith.constant 0 : index
    %0 = vector.load %arg1[%c0, %c0_0, %c0_1] : memref<2x16x128xf32, #tpu.memory_space<vmem>>, vector<2x16x128xf32>
    %c0_2 = arith.constant 0 : index
    %c0_3 = arith.constant 0 : index
    %c0_4 = arith.constant 0 : index
    %1 = vector.load %arg2[%c0_2, %c0_3, %c0_4] : memref<2x1x128xf32, #tpu.memory_space<vmem>>, vector<1x1x128xf32>
    %2 = vector.shape_cast %1 : vector<1x1x128xf32> to vector<1x128xf32>
    %c1 = arith.constant 1 : index
    %c0_5 = arith.constant 0 : index
    %c0_6 = arith.constant 0 : index
    %3 = vector.load %arg2[%c1, %c0_5, %c0_6] : memref<2x1x128xf32, #tpu.memory_space<vmem>>, vector<1x1x128xf32>
    %4 = vector.shape_cast %3 : vector<1x1x128xf32> to vector<1x128xf32>
    %5 = tpu.iota {dimensions = array<i32: 2>} : vector<2x16x128xi32>
    %c32_i32 = arith.constant 32 : i32
    %6 = vector.broadcast %c32_i32 : i32 to vector<2x16x128xi32>
    %7 = arith.cmpi slt, %5, %6 : vector<2x16x128xi32>
    %cst = arith.constant 0.000000e+00 : f32
    %8 = vector.broadcast %cst : f32 to vector<2x16x128xf32>
    %9 = arith.select %7, %0, %8 : vector<2x16x128xi1>, vector<2x16x128xf32>
    %cst_7 = arith.constant dense<0.000000e+00> : vector<2x16xf32>
    %10 = vector.multi_reduction <add>, %9, %cst_7 [2] : vector<2x16x128xf32> to vector<2x16xf32>
    %11 = vector.shape_cast %10 : vector<2x16xf32> to vector<2x16x1xf32>
    %cst_8 = arith.constant 3.125000e-02 : f32
    %12 = vector.broadcast %cst_8 : f32 to vector<2x16x1xf32>
    %13 = arith.mulf %11, %12 : vector<2x16x1xf32>
    %14 = vector.broadcast %13 : vector<2x16x1xf32> to vector<2x16x128xf32>
    %15 = arith.subf %0, %14 : vector<2x16x128xf32>
    %cst_9 = arith.constant 0.000000e+00 : f32
    %16 = vector.broadcast %cst_9 : f32 to vector<2x16x128xf32>
    %17 = arith.select %7, %15, %16 : vector<2x16x128xi1>, vector<2x16x128xf32>
    %18 = arith.mulf %17, %17 : vector<2x16x128xf32>
    %cst_10 = arith.constant dense<0.000000e+00> : vector<2x16xf32>
    %19 = vector.multi_reduction <add>, %18, %cst_10 [2] : vector<2x16x128xf32> to vector<2x16xf32>
    %20 = vector.shape_cast %19 : vector<2x16xf32> to vector<2x16x1xf32>
    %cst_11 = arith.constant 3.125000e-02 : f32
    %21 = vector.broadcast %cst_11 : f32 to vector<2x16x1xf32>
    %22 = arith.mulf %20, %21 : vector<2x16x1xf32>
    %23 = vector.broadcast %13 : vector<2x16x1xf32> to vector<2x16x128xf32>
    %24 = arith.subf %0, %23 : vector<2x16x128xf32>
    %cst_12 = arith.constant 9.99999974E-6 : f32
    %25 = vector.broadcast %cst_12 : f32 to vector<2x16x1xf32>
    %26 = arith.addf %22, %25 : vector<2x16x1xf32>
    %27 = math.rsqrt %26 : vector<2x16x1xf32>
    %28 = vector.broadcast %27 : vector<2x16x1xf32> to vector<2x16x128xf32>
    %29 = arith.mulf %24, %28 : vector<2x16x128xf32>
    %30 = vector.shape_cast %2 : vector<1x128xf32> to vector<1x1x128xf32>
    %31 = vector.broadcast %30 : vector<1x1x128xf32> to vector<2x16x128xf32>
    %32 = arith.mulf %29, %31 : vector<2x16x128xf32>
    %33 = vector.shape_cast %4 : vector<1x128xf32> to vector<1x1x128xf32>
    %34 = vector.broadcast %33 : vector<1x1x128xf32> to vector<2x16x128xf32>
    %35 = arith.addf %32, %34 : vector<2x16x128xf32>
    %cst_13 = arith.constant dense<0.000000e+00> : vector<2x128xf32>
    %36 = vector.multi_reduction <add>, %35, %cst_13 [1] : vector<2x16x128xf32> to vector<2x128xf32>
    %cst_14 = arith.constant 1.600000e+01 : f32
    %37 = vector.broadcast %cst_14 : f32 to vector<2x128xf32>
    %38 = arith.divf %36, %37 : vector<2x128xf32>
    %c0_15 = arith.constant 0 : index
    %c0_16 = arith.constant 0 : index
    %39 = vector.load %arg3[%c0_15, %c0_16] : memref<128x128xf32, #tpu.memory_space<vmem>>, vector<128x128xf32>
    %cst_17 = arith.constant dense<0.000000e+00> : vector<2x128xf32>
    %40 = tpu.matmul %38, %39, %cst_17 {dimension_numbers = #tpu.dot_dimension_numbers<[1], [0], [0], [1], [0, 0, 1, 1], [], []>} : vector<2x128xf32>, vector<128x128xf32>, vector<2x128xf32> -> vector<2x128xf32>
    %c0_18 = arith.constant 0 : index
    %c0_19 = arith.constant 0 : index
    %41 = vector.load %arg4[%c0_18, %c0_19] : memref<1x128xf32, #tpu.memory_space<vmem>>, vector<1x128xf32>
    %42 = vector.broadcast %41 : vector<1x128xf32> to vector<2x128xf32>
    %43 = arith.addf %40, %42 : vector<2x128xf32>
    %c0_20 = arith.constant 0 : index
    %c0_21 = arith.constant 0 : index
    %44 = vector.load %arg5[%c0_20, %c0_21] : memref<2x128xf32, #tpu.memory_space<vmem>>, vector<2x128xf32>
    tpu.vector_store %arg5[%c0_20, %c0_21], %43 {strides = array<i32>} : memref<2x128xf32, #tpu.memory_space<vmem>>, vector<2x128xf32>,
    return
  }
  func.func @transform_0(%arg0: i32) -> (i32, i32, i32) {
    %c0_i32 = arith.constant 0 : i32
    %c0_i32_0 = arith.constant 0 : i32
    %c0_i32_1 = arith.constant 0 : i32
    %c0_i32_2 = arith.constant 0 : i32
    return %c0_i32, %c0_i32_0, %c0_i32_1 : i32, i32, i32
  }
  func.func @transform_1(%arg0: i32) -> (i32, i32, i32) {
    %c0_i32 = arith.constant 0 : i32
    %c0_i32_0 = arith.constant 0 : i32
    %c0_i32_1 = arith.constant 0 : i32
    %c0_i32_2 = arith.constant 0 : i32
    return %c0_i32, %c0_i32_0, %c0_i32_1 : i32, i32, i32
  }
  func.func @transform_2(%arg0: i32) -> (i32, i32) {
    %c0_i32 = arith.constant 0 : i32
    %c0_i32_0 = arith.constant 0 : i32
    %c0_i32_1 = arith.constant 0 : i32
    return %c0_i32, %c0_i32_0 : i32, i32
  }
  func.func @transform_3(%arg0: i32) -> (i32, i32) {
    %c0_i32 = arith.constant 0 : i32
    %c0_i32_0 = arith.constant 0 : i32
    %c0_i32_1 = arith.constant 0 : i32
    return %c0_i32, %c0_i32_0 : i32, i32
  }
  func.func @transform_4(%arg0: i32) -> (i32, i32) {
    %c0_i32 = arith.constant 0 : i32
    %c0_i32_0 = arith.constant 0 : i32
    %c0_i32_1 = arith.constant 0 : i32
    return %c0_i32, %c0_i32_0 : i32, i32
  }
}

</mosaic_0001>

<llo_original>
// kernel: hifno_encoder_forward.6
$region0: #{hifno_encoder_forward.6}
  #allocation0 [shape = 'u32[]', space=smem, size = 0x4, offset = 0x4, fixed_abs, tag = 'smem constant byte address 0x4 - core index']
  #allocation1 [shape = 'u32[144,128]{1,0:T(1,128)}', space=vmem, size = 0x12000, scoped, tag = 'internal scratch']
  %s0 = inlined_call_operand.vmem [shape: f32[2,16,64], index: 0, kind: input, shape index: {}]
  %s1 = inlined_call_operand.vmem [shape: f32[64,128], index: 1, kind: input, shape index: {}]
  %s2 = inlined_call_operand.vmem [shape: f32[1,128], index: 2, kind: input, shape index: {}]
  %s3 = inlined_call_operand.vmem [shape: f32[2,16,128], index: 3, kind: output, shape index: {}]
  %s4 = sld [smem:[#allocation0]]
  $region45: #{hifno_encoder_forward.6} parent=0
    _
  %s6 = ssub.s32 1, %s4
  %s7 = scalar_select 0, %s6, %s4
  loop: start=0, step=1, limit=4
  $region2: #{hifno_encoder_forward.6} parent=0 // loop_pre_header
    _
  $region3: #{hifno_encoder_forward.6} parent=0 // loop_header
    %s9 = sphi 0, %s13
    %p10 = scmp.ge.s32.totalorder %s9, 4
    %s19 = sphi 0, %s21
    %s22 = sphi 0, %s19
    %s23 = sphi 0, %s22
    %s39 = sphi 0, %s23
    %s43 = sphi 0, %s43
    %s45 = sphi 0, %s43
    %s46 = sphi 0, %s45
    %s60 = sphi 0, %s46
    %s64 = sphi 0, %s64
    %s66 = sphi 0, %s64
    %s67 = sphi 0, %s66
    %s81 = sphi 0, %s67
    %s87 = sphi 0, %s89
    %s90 = sphi 0, %s87
    %s91 = sphi 0, %s90
    %s107 = sphi 0, %s91
  $region4: #{hifno_encoder_forward.6} parent=0 // loop_header_branch
    %12 = sbr.rel (%p10) target = $region8
  $region5: #{hifno_encoder_forward.6} parent=0 // loop_body
    %s14 = ssub.s32 %s9, 1
    %s15 = ssub.s32 %s9, 2
    %s16 = sadd.s32 %s9, 1
    %s17 = ssub.s32 %s9, %s16
    %p18 = scmp.eq.s32.totalorder %s17, 0
    %s20 = sadd.s32 %s19, 1
    %s21 = scalar_select %p18, %s19, %s20
    %p24 = pneg %p18
    %p25 = scmp.eq.s32.totalorder %s9, 1
    %p26 = por %p24, %p25
    %p27 = scmp.ne.s32.totalorder %s19, %s22
    %p28 = scmp.eq.s32.totalorder %s9, 0
    %p29 = por %p27, %p28
    %p30 = scmp.ne.s32.totalorder %s19, %s22
    %p31 = scmp.eq.s32.totalorder %s14, 1
    %p32 = por %p30, %p31
    %p33 = scmp.ne.s32.totalorder %s22, %s23
    %p34 = scmp.eq.s32.totalorder %s14, 0
    %p35 = por %p33, %p34
    %p36 = scmp.ne.s32.totalorder %s22, %s23
    %p37 = scmp.eq.s32.totalorder %s15, 1
    %p38 = por %p36, %p37
    %p40 = scmp.ne.s32.totalorder %s23, %s39
    %p41 = scmp.eq.s32.totalorder %s15, 0
    %p42 = por %p40, %p41
    %s44 = sadd.s32 %s43, 1
    %p47 = scmp.eq.s32.totalorder %s9, 1
    %p48 = scmp.ne.s32.totalorder %s43, %s45
    %p49 = scmp.eq.s32.totalorder %s9, 0
    %p50 = por %p48, %p49
    %p51 = scmp.ne.s32.totalorder %s43, %s45
    %p52 = scmp.eq.s32.totalorder %s14, 1
    %p53 = por %p51, %p52
    %p54 = scmp.ne.s32.totalorder %s45, %s46
    %p55 = scmp.eq.s32.totalorder %s14, 0
    %p56 = por %p54, %p55
    %p57 = scmp.ne.s32.totalorder %s45, %s46
    %p58 = scmp.eq.s32.totalorder %s15, 1
    %p59 = por %p57, %p58
    %p61 = scmp.ne.s32.totalorder %s46, %s60
    %p62 = scmp.eq.s32.totalorder %s15, 0
    %p63 = por %p61, %p62
    %s65 = sadd.s32 %s64, 1
    %p68 = scmp.eq.s32.totalorder %s9, 1
    %p69 = scmp.ne.s32.totalorder %s64, %s66
    %p70 = scmp.eq.s32.totalorder %s9, 0
    %p71 = por %p69, %p70
    %p72 = scmp.ne.s32.totalorder %s64, %s66
    %p73 = scmp.eq.s32.totalorder %s14, 1
    %p74 = por %p72, %p73
    %p75 = scmp.ne.s32.totalorder %s66, %s67
    %p76 = scmp.eq.s32.totalorder %s14, 0
    %p77 = por %p75, %p76
    %p78 = scmp.ne.s32.totalorder %s66, %s67
    %p79 = scmp.eq.s32.totalorder %s15, 1
    %p80 = por %p78, %p79
    %p82 = scmp.ne.s32.totalorder %s67, %s81
    %p83 = scmp.eq.s32.totalorder %s15, 0
    %p84 = por %p82, %p83
    %s85 = ssub.s32 %s9, %s16
    %p86 = scmp.eq.s32.totalorder %s85, 0
    %s88 = sadd.s32 %s87, 1
    %s89 = scalar_select %p86, %s87, %s88
    %p92 = pneg %p86
    %p93 = scmp.eq.s32.totalorder %s9, 1
    %p94 = por %p92, %p93
    %p95 = scmp.ne.s32.totalorder %s87, %s90
    %p96 = scmp.eq.s32.totalorder %s9, 0
    %p97 = por %p95, %p96
    %p98 = scmp.ne.s32.totalorder %s87, %s90
    %p99 = scmp.eq.s32.totalorder %s14, 1
    %p100 = por %p98, %p99
    %p101 = scmp.ne.s32.totalorder %s90, %s91
    %p102 = scmp.eq.s32.totalorder %s14, 0
    %p103 = por %p101, %p102
    %p104 = scmp.ne.s32.totalorder %s90, %s91
    %p105 = scmp.eq.s32.totalorder %s15, 1
    %p106 = por %p104, %p105
    %p108 = scmp.ne.s32.totalorder %s91, %s107
    %p109 = scmp.eq.s32.totalorder %s15, 0
    %p110 = por %p108, %p109
    %p111 = scmp.le.s32.totalorder 1, %s9
    %p112 = scmp.lt.s32.totalorder %s9, 3
    %p113 = pnand %p111, %p112
    %p114 = pneg %p113
    // Predicated region
    $region9: #{hifno_encoder_forward.6} parent=5 // pred_check
      _
    $region10: #{hifno_encoder_forward.6} parent=5 // pred_check_branch
      %116 = sbr.rel (%p113) target = $region12
    $region11: #{hifno_encoder_forward.6} parent=5 // pred_region
      %s117 = ssub.s32 %s9, 1
      // Predicated region
      $region13: #{hifno_encoder_forward.6} parent=11 // pred_check
        %p118 = pneg %p56
      $region14: #{hifno_encoder_forward.6} parent=11 // pred_check_branch
        %120 = sbr.rel (%p118) target = $region16
      $region15: #{hifno_encoder_forward.6} parent=11 // pred_region
        _
      $region16: #{hifno_encoder_forward.6} parent=11 // pred_fallthru
        _
      // Predicated region
      $region17: #{hifno_encoder_forward.6} parent=11 // pred_check
        %p121 = pneg %p77
      $region18: #{hifno_encoder_forward.6} parent=11 // pred_check_branch
        %123 = sbr.rel (%p121) target = $region20
      $region19: #{hifno_encoder_forward.6} parent=11 // pred_region
        _
      $region20: #{hifno_encoder_forward.6} parent=11 // pred_fallthru
        _
    $region12: #{hifno_encoder_forward.6} parent=5 // pred_fallthru
      _
    %p124 = scmp.lt.s32.totalorder %s9, 2
    // Predicated region
    $region21: #{hifno_encoder_forward.6} parent=5 // pred_check
      %p125 = pneg %p124
    $region22: #{hifno_encoder_forward.6} parent=5 // pred_check_branch
      %127 = sbr.rel (%p125) target = $region24
    $region23: #{hifno_encoder_forward.6} parent=5 // pred_region
      // Predicated region
      $region25: #{hifno_encoder_forward.6} parent=23 // pred_check
        %p128 = pneg %p29
      $region26: #{hifno_encoder_forward.6} parent=23 // pred_check_branch
        %130 = sbr.rel (%p128) target = $region28
      $region27: #{hifno_encoder_forward.6} parent=23 // pred_region
        %p131 = scmp.lt.s32.totalorder %s9, 1
        %s132 = scalar_select %p131, %s9, 1
        %s133 = smul.addr %s132, 2
        %s134 = smul.addr %s133, 8
        %s135 = scalar_lea.vmem %s0, %s134
      $region28: #{hifno_encoder_forward.6} parent=23 // pred_fallthru
        _
    $region24: #{hifno_encoder_forward.6} parent=5 // pred_fallthru
      _
    %p136 = scmp.le.s32.totalorder 1, %s9
    %p137 = scmp.lt.s32.totalorder %s9, 3
    %p138 = pnand %p136, %p137
    %p139 = pneg %p138
    // Predicated region
    $region29: #{hifno_encoder_forward.6} parent=5 // pred_check
      _
    $region30: #{hifno_encoder_forward.6} parent=5 // pred_check_branch
      %141 = sbr.rel (%p138) target = $region32
    $region31: #{hifno_encoder_forward.6} parent=5 // pred_region
      %s142 = ssub.s32 %s9, 1
      %p143 = scmp.lt.s32.totalorder %s14, 1
      %s144 = scalar_select %p143, %s14, 1
      %s145 = smul.addr %s144, 2
      %s146 = smul.addr %s145, 8
      %s147 = scalar_lea.vmem %s0, %s146
      %p148 = pneg %p35
      %p149 = pneg %p32
      %p150 = pneg %p56
      %p151 = pneg %p53
      %p152 = pneg %p77
      %p153 = pneg %p74
      %p154 = pneg %p103
      %p155 = pneg %p100
      %p156 = scmp.lt.s32.totalorder %s14, 1
      %s157 = scalar_select %p156, %s14, 1
      %s158 = smul.addr %s157, 2
      %s159 = smul.addr %s158, 8
      %s160 = scalar_lea.vmem %s3, %s159
      %p161 = scmp.lt.s32.totalorder %s14, 1
      %s162 = scalar_select %p161, %s14, 1
      %s163 = smul.addr %s162, 2
      %s164 = smul.addr %s163, 8
      %s165 = scalar_lea.vmem %s0, %s164
      %p166 = scmp.lt.s32.totalorder %s14, 1
      %s167 = scalar_select %p166, %s14, 1
      %s168 = smul.addr %s167, 2
      %s169 = smul.addr %s168, 8
      %s170 = scalar_lea.vmem %s3, %s169
      %v171 = vld [vmem:[%s165] sm:$0xff]
      %v172 = vld [vmem:[%s165 + $0x8] sm:$0xff]
      %v173 = vld [vmem:[%s1] sm:$0xff]
      %v174 = vld [vmem:[%s1 + $0x8] sm:$0xff]
      %v175 = vld [vmem:[%s1 + $0x10] sm:$0xff]
      %v176 = vld [vmem:[%s1 + $0x18] sm:$0xff]
      %v177 = vld [vmem:[%s1 + $0x20] sm:$0xff]
      %v178 = vld [vmem:[%s1 + $0x28] sm:$0xff]
      %v179 = vld [vmem:[%s1 + $0x30] sm:$0xff]
      %v180 = vld [vmem:[%s1 + $0x38] sm:$0xff]
      %v181 = vld [vmem:[%s2] sm:$0x1]
      %v183 = vlaneseq
      %v184 = vshrl.u32 %v183, 7
      %v185 = vsub.s32 0, %v184
      %v186 = vrot.slane %v181, %v185
      %vm188 = vcmask 523264
      %v190 = vsel %vm188, %v171, 0
      %v193 = vsel %vm188, %v172, 0
      %195 = vmatprep.subr.mxu0 0.0
      %196 = vmatpush1.msra.mxu0 0.0
      %197 = vmatprep.subr.mxu0 0.0
      %198 = vmatpush1.msra.mxu0 0.0
      %199 = vmatprep.subr.mxu0 0.0
      %200 = vmatpush1.msra.mxu0 0.0
      %201 = vmatprep.subr.mxu0 0.0
      %202 = vmatpush1.msra.mxu0 0.0
      %203 = vmatprep.subr.mxu0 0.0
      %204 = vmatpush1.msra.mxu0 0.0
      %205 = vmatprep.subr.mxu0 0.0
      %206 = vmatpush1.msra.mxu0 0.0
      %207 = vmatprep.subr.mxu0 0.0
      %208 = vmatpush1.msra.mxu0 0.0
      %209 = vmatprep.subr.mxu0 0.0
      %210 = vmatpush1.msra.mxu0 0.0
      %211 = vmatprep.subr.mxu0 0.0
      %212 = vmatpush1.msra.mxu0 %v180
      %213 = vmatprep.subr.mxu0 0.0
      %214 = vmatpush1.msra.mxu0 %v179
      %215 = vmatprep.subr.mxu0 0.0
      %216 = vmatpush1.msra.mxu0 %v178
      %217 = vmatprep.subr.mxu0 0.0
      %218 = vmatpush1.msra.mxu0 %v177
      %219 = vmatprep.subr.mxu0 0.0
      %220 = vmatpush1.msra.mxu0 %v176
      %221 = vmatprep.subr.mxu0 0.0
      %222 = vmatpush1.msra.mxu0 %v175
      %223 = vmatprep.subr.mxu0 0.0
      %224 = vmatpush1.msra.mxu0 %v174
      %225 = vmatprep.subr.mxu0 0.0
      %226 = vmatpush1.msra.mxu0 %v173
      %227 = vmatprep.subr.mxu0 0.0
      %228 = vmatpush2.msra.mxu0 0.0
      %229 = vmatprep.subr.mxu0 0.0
      %230 = vmatpush2.msra.mxu0 0.0
      %231 = vmatprep.subr.mxu0 0.0
      %232 = vmatpush2.msra.mxu0 0.0
      %233 = vmatprep.subr.mxu0 0.0
      %234 = vmatpush2.msra.mxu0 0.0
      %235 = vmatprep.subr.mxu0 0.0
      %236 = vmatpush2.msra.mxu0 0.0
      %237 = vmatprep.subr.mxu0 0.0
      %238 = vmatpush2.msra.mxu0 0.0
      %239 = vmatprep.subr.mxu0 0.0
      %240 = vmatpush2.msra.mxu0 0.0
      %241 = vmatprep.subr.mxu0 0.0
      %242 = vmatpush2.msra.mxu0 0.0
      %243 = vmatprep.subr.mxu0 0.0
      %244 = vmatpush2.msra.mxu0 0.0
      %245 = vmatprep.subr.mxu0 0.0
      %246 = vmatpush2.msra.mxu0 0.0
      %247 = vmatprep.subr.mxu0 0.0
      %248 = vmatpush2.msra.mxu0 0.0
      %249 = vmatprep.subr.mxu0 0.0
      %250 = vmatpush2.msra.mxu0 0.0
      %251 = vmatprep.subr.mxu0 0.0
      %252 = vmatpush2.msra.mxu0 0.0
      %253 = vmatprep.subr.mxu0 0.0
      %254 = vmatpush2.msra.mxu0 0.0
      %255 = vmatprep.subr.mxu0 0.0
      %256 = vmatpush2.msra.mxu0 0.0
      %257 = vmatprep.subr.mxu0 0.0
      %258 = vmatpush2.msra.mxu0 0.0
      %259 = vmatprep.mubr.f32.mxu0 0.0
      %260 = vmatmul.mubr.f32.gmra.mxu0 %v190
      %v261 = vpop.f32.mrf.mxu0
      %v262 = vadd.f32 %v186, %v261
      %v263 = vpop.f32.mrf.mxu0
      %264 = vmatprep.mubr.f32.mxu0 0.0
      %265 = vmatmul.mubr.f32.gmra.mxu0 %v193
      %v266 = vpop.f32.mrf.mxu0
      %v267 = vadd.f32 %v186, %v266
      %v268 = vpop.f32.mrf.mxu0
      %269 = vdwg.mxu0
      %270 = vst [vmem:[%s170] sm:$0xff] %v262
      %271 = vst [vmem:[%s170 + $0x8] sm:$0xff] %v267
      %p272 = scmp.lt.s32.totalorder %s14, 1
      %s273 = scalar_select %p272, %s14, 1
      %s274 = smul.addr %s273, 2
      %s275 = smul.addr %s274, 8
      %s276 = scalar_lea.vmem %s3, %s275
      // Predicated region
      $region33: #{hifno_encoder_forward.6} parent=31 // pred_check
        %p277 = pneg %p100
      $region34: #{hifno_encoder_forward.6} parent=31 // pred_check_branch
        %279 = sbr.rel (%p277) target = $region36
      $region35: #{hifno_encoder_forward.6} parent=31 // pred_region
        _
      $region36: #{hifno_encoder_forward.6} parent=31 // pred_fallthru
        _
    $region32: #{hifno_encoder_forward.6} parent=5 // pred_fallthru
      _
    %p280 = scmp.le.s32.totalorder 2, %s9
    // Predicated region
    $region37: #{hifno_encoder_forward.6} parent=5 // pred_check
      %p281 = pneg %p280
    $region38: #{hifno_encoder_forward.6} parent=5 // pred_check_branch
      %283 = sbr.rel (%p281) target = $region40
    $region39: #{hifno_encoder_forward.6} parent=5 // pred_region
      %s284 = ssub.s32 %s9, 2
      // Predicated region
      $region41: #{hifno_encoder_forward.6} parent=39 // pred_check
        %p285 = pneg %p106
      $region42: #{hifno_encoder_forward.6} parent=39 // pred_check_branch
        %287 = sbr.rel (%p285) target = $region44
      $region43: #{hifno_encoder_forward.6} parent=39 // pred_region
        %p288 = scmp.lt.s32.totalorder %s15, 1
        %s289 = scalar_select %p288, %s15, 1
        %s290 = smul.addr %s289, 2
        %s291 = smul.addr %s290, 8
        %s292 = scalar_lea.vmem %s3, %s291
      $region44: #{hifno_encoder_forward.6} parent=39 // pred_fallthru
        _
    $region40: #{hifno_encoder_forward.6} parent=5 // pred_fallthru
      _
  $region6: #{hifno_encoder_forward.6} parent=0 // loop_footer
    %s13 = sadd.s32 1, %s9
  $region7: #{hifno_encoder_forward.6} parent=0 // loop_footer_branch
    %8 = sbr.rel target = $region3
  $region8: #{hifno_encoder_forward.6} parent=0 // loop_exit
    _

// kernel: hifno_encoder_forward.8
$region0: #{hifno_encoder_forward.8}
  #allocation0 [shape = 'u32[]', space=smem, size = 0x4, offset = 0x4, fixed_abs, tag = 'smem constant byte address 0x4 - core index']
  #allocation1 [shape = 'u32[144,128]{1,0:T(1,128)}', space=vmem, size = 0x12000, scoped, tag = 'internal scratch']
  %s0 = inlined_call_operand.vmem [shape: f32[2,12,128], index: 0, kind: input, shape index: {}]
  %s1 = inlined_call_operand.vmem [shape: f32[3,128,128], index: 1, kind: input, shape index: {}]
  %s2 = inlined_call_operand.vmem [shape: f32[3,12,1], index: 2, kind: input, shape index: {}]
  %s3 = inlined_call_operand.vmem [shape: f32[2,12,128], index: 3, kind: output, shape index: {}]
  %s4 = sld [smem:[#allocation0]]
  $region45: #{hifno_encoder_forward.8} parent=0
    _
  %s6 = ssub.s32 1, %s4
  %s7 = scalar_select 0, %s6, %s4
  loop: start=0, step=1, limit=4
  $region2: #{hifno_encoder_forward.8} parent=0 // loop_pre_header
    _
  $region3: #{hifno_encoder_forward.8} parent=0 // loop_header
    %s9 = sphi 0, %s13
    %p10 = scmp.ge.s32.totalorder %s9, 4
    %s19 = sphi 0, %s21
    %s22 = sphi 0, %s19
    %s23 = sphi 0, %s22
    %s39 = sphi 0, %s23
    %s43 = sphi 0, %s43
    %s45 = sphi 0, %s43
    %s46 = sphi 0, %s45
    %s60 = sphi 0, %s46
    %s64 = sphi 0, %s64
    %s66 = sphi 0, %s64
    %s67 = sphi 0, %s66
    %s81 = sphi 0, %s67
    %s87 = sphi 0, %s89
    %s90 = sphi 0, %s87
    %s91 = sphi 0, %s90
    %s107 = sphi 0, %s91
  $region4: #{hifno_encoder_forward.8} parent=0 // loop_header_branch
    %12 = sbr.rel (%p10) target = $region8
  $region5: #{hifno_encoder_forward.8} parent=0 // loop_body
    %s14 = ssub.s32 %s9, 1
    %s15 = ssub.s32 %s9, 2
    %s16 = sadd.s32 %s9, 1
    %s17 = ssub.s32 %s9, %s16
    %p18 = scmp.eq.s32.totalorder %s17, 0
    %s20 = sadd.s32 %s19, 1
    %s21 = scalar_select %p18, %s19, %s20
    %p24 = pneg %p18
    %p25 = scmp.eq.s32.totalorder %s9, 1
    %p26 = por %p24, %p25
    %p27 = scmp.ne.s32.totalorder %s19, %s22
    %p28 = scmp.eq.s32.totalorder %s9, 0
    %p29 = por %p27, %p28
    %p30 = scmp.ne.s32.totalorder %s19, %s22
    %p31 = scmp.eq.s32.totalorder %s14, 1
    %p32 = por %p30, %p31
    %p33 = scmp.ne.s32.totalorder %s22, %s23
    %p34 = scmp.eq.s32.totalorder %s14, 0
    %p35 = por %p33, %p34
    %p36 = scmp.ne.s32.totalorder %s22, %s23
    %p37 = scmp.eq.s32.totalorder %s15, 1
    %p38 = por %p36, %p37
    %p40 = scmp.ne.s32.totalorder %s23, %s39
    %p41 = scmp.eq.s32.totalorder %s15, 0
    %p42 = por %p40, %p41
    %s44 = sadd.s32 %s43, 1
    %p47 = scmp.eq.s32.totalorder %s9, 1
    %p48 = scmp.ne.s32.totalorder %s43, %s45
    %p49 = scmp.eq.s32.totalorder %s9, 0
    %p50 = por %p48, %p49
    %p51 = scmp.ne.s32.totalorder %s43, %s45
    %p52 = scmp.eq.s32.totalorder %s14, 1
    %p53 = por %p51, %p52
    %p54 = scmp.ne.s32.totalorder %s45, %s46
    %p55 = scmp.eq.s32.totalorder %s14, 0
    %p56 = por %p54, %p55
    %p57 = scmp.ne.s32.totalorder %s45, %s46
    %p58 = scmp.eq.s32.totalorder %s15, 1
    %p59 = por %p57, %p58
    %p61 = scmp.ne.s32.totalorder %s46, %s60
    %p62 = scmp.eq.s32.totalorder %s15, 0
    %p63 = por %p61, %p62
    %s65 = sadd.s32 %s64, 1
    %p68 = scmp.eq.s32.totalorder %s9, 1
    %p69 = scmp.ne.s32.totalorder %s64, %s66
    %p70 = scmp.eq.s32.totalorder %s9, 0
    %p71 = por %p69, %p70
    %p72 = scmp.ne.s32.totalorder %s64, %s66
    %p73 = scmp.eq.s32.totalorder %s14, 1
    %p74 = por %p72, %p73
    %p75 = scmp.ne.s32.totalorder %s66, %s67
    %p76 = scmp.eq.s32.totalorder %s14, 0
    %p77 = por %p75, %p76
    %p78 = scmp.ne.s32.totalorder %s66, %s67
    %p79 = scmp.eq.s32.totalorder %s15, 1
    %p80 = por %p78, %p79
    %p82 = scmp.ne.s32.totalorder %s67, %s81
    %p83 = scmp.eq.s32.totalorder %s15, 0
    %p84 = por %p82, %p83
    %s85 = ssub.s32 %s9, %s16
    %p86 = scmp.eq.s32.totalorder %s85, 0
    %s88 = sadd.s32 %s87, 1
    %s89 = scalar_select %p86, %s87, %s88
    %p92 = pneg %p86
    %p93 = scmp.eq.s32.totalorder %s9, 1
    %p94 = por %p92, %p93
    %p95 = scmp.ne.s32.totalorder %s87, %s90
    %p96 = scmp.eq.s32.totalorder %s9, 0
    %p97 = por %p95, %p96
    %p98 = scmp.ne.s32.totalorder %s87, %s90
    %p99 = scmp.eq.s32.totalorder %s14, 1
    %p100 = por %p98, %p99
    %p101 = scmp.ne.s32.totalorder %s90, %s91
    %p102 = scmp.eq.s32.totalorder %s14, 0
    %p103 = por %p101, %p102
    %p104 = scmp.ne.s32.totalorder %s90, %s91
    %p105 = scmp.eq.s32.totalorder %s15, 1
    %p106 = por %p104, %p105
    %p108 = scmp.ne.s32.totalorder %s91, %s107
    %p109 = scmp.eq.s32.totalorder %s15, 0
    %p110 = por %p108, %p109
    %p111 = scmp.le.s32.totalorder 1, %s9
    %p112 = scmp.lt.s32.totalorder %s9, 3
    %p113 = pnand %p111, %p112
    %p114 = pneg %p113
    // Predicated region
    $region9: #{hifno_encoder_forward.8} parent=5 // pred_check
      _
    $region10: #{hifno_encoder_forward.8} parent=5 // pred_check_branch
      %116 = sbr.rel (%p113) target = $region12
    $region11: #{hifno_encoder_forward.8} parent=5 // pred_region
      %s117 = ssub.s32 %s9, 1
      // Predicated region
      $region13: #{hifno_encoder_forward.8} parent=11 // pred_check
        %p118 = pneg %p56
      $region14: #{hifno_encoder_forward.8} parent=11 // pred_check_branch
        %120 = sbr.rel (%p118) target = $region16
      $region15: #{hifno_encoder_forward.8} parent=11 // pred_region
        _
      $region16: #{hifno_encoder_forward.8} parent=11 // pred_fallthru
        _
      // Predicated region
      $region17: #{hifno_encoder_forward.8} parent=11 // pred_check
        %p121 = pneg %p77
      $region18: #{hifno_encoder_forward.8} parent=11 // pred_check_branch
        %123 = sbr.rel (%p121) target = $region20
      $region19: #{hifno_encoder_forward.8} parent=11 // pred_region
        _
      $region20: #{hifno_encoder_forward.8} parent=11 // pred_fallthru
        _
    $region12: #{hifno_encoder_forward.8} parent=5 // pred_fallthru
      _
    %p124 = scmp.lt.s32.totalorder %s9, 2
    // Predicated region
    $region21: #{hifno_encoder_forward.8} parent=5 // pred_check
      %p125 = pneg %p124
    $region22: #{hifno_encoder_forward.8} parent=5 // pred_check_branch
      %127 = sbr.rel (%p125) target = $region24
    $region23: #{hifno_encoder_forward.8} parent=5 // pred_region
      // Predicated region
      $region25: #{hifno_encoder_forward.8} parent=23 // pred_check
        %p128 = pneg %p29
      $region26: #{hifno_encoder_forward.8} parent=23 // pred_check_branch
        %130 = sbr.rel (%p128) target = $region28
      $region27: #{hifno_encoder_forward.8} parent=23 // pred_region
        %p131 = scmp.lt.s32.totalorder %s9, 1
        %s132 = scalar_select %p131, %s9, 1
        %s133 = smul.addr %s132, 2
        %s134 = smul.addr %s133, 8
        %s135 = scalar_lea.vmem %s0, %s134
      $region28: #{hifno_encoder_forward.8} parent=23 // pred_fallthru
        _
    $region24: #{hifno_encoder_forward.8} parent=5 // pred_fallthru
      _
    %p136 = scmp.le.s32.totalorder 1, %s9
    %p137 = scmp.lt.s32.totalorder %s9, 3
    %p138 = pnand %p136, %p137
    %p139 = pneg %p138
    // Predicated region
    $region29: #{hifno_encoder_forward.8} parent=5 // pred_check
      _
    $region30: #{hifno_encoder_forward.8} parent=5 // pred_check_branch
      %141 = sbr.rel (%p138) target = $region32
    $region31: #{hifno_encoder_forward.8} parent=5 // pred_region
      %s142 = ssub.s32 %s9, 1
      %p143 = scmp.lt.s32.totalorder %s14, 1
      %s144 = scalar_select %p143, %s14, 1
      %s145 = smul.addr %s144, 2
      %s146 = smul.addr %s145, 8
      %s147 = scalar_lea.vmem %s0, %s146
      %p148 = pneg %p35
      %p149 = pneg %p32
      %p150 = pneg %p56
      %p151 = pneg %p53
      %p152 = pneg %p77
      %p153 = pneg %p74
      %p154 = pneg %p103
      %p155 = pneg %p100
      %p156 = scmp.lt.s32.totalorder %s14, 1
      %s157 = scalar_select %p156, %s14, 1
      %s158 = smul.addr %s157, 2
      %s159 = smul.addr %s158, 8
      %s160 = scalar_lea.vmem %s3, %s159
      %p161 = scmp.lt.s32.totalorder %s14, 1
      %s162 = scalar_select %p161, %s14, 1
      %s163 = smul.addr %s162, 2
      %s164 = smul.addr %s163, 8
      %s165 = scalar_lea.vmem %s0, %s164
      %p166 = scmp.lt.s32.totalorder %s14, 1
      %s167 = scalar_select %p166, %s14, 1
      %s168 = smul.addr %s167, 2
      %s169 = smul.addr %s168, 8
      %s170 = scalar_lea.vmem %s3, %s169
      %v171 = vld [vmem:[%s165] sm:$0xff]
      %v172 = vld [vmem:[%s165 + $0x8] sm:$0xf]
      %v173 = vld [vmem:[%s1] sm:$0xff]
      %v174 = vld [vmem:[%s1 + $0x8] sm:$0xff]
      %v175 = vld [vmem:[%s1 + $0x10] sm:$0xff]
      %v176 = vld [vmem:[%s1 + $0x18] sm:$0xff]
      %v177 = vld [vmem:[%s1 + $0x20] sm:$0xff]
      %v178 = vld [vmem:[%s1 + $0x28] sm:$0xff]
      %v179 = vld [vmem:[%s1 + $0x30] sm:$0xff]
      %v180 = vld [vmem:[%s1 + $0x38] sm:$0xff]
      %v181 = vld [vmem:[%s1 + $0x40] sm:$0xff]
      %v182 = vld [vmem:[%s1 + $0x48] sm:$0xff]
      %v183 = vld [vmem:[%s1 + $0x50] sm:$0xff]
      %v184 = vld [vmem:[%s1 + $0x58] sm:$0xff]
      %v185 = vld [vmem:[%s1 + $0x60] sm:$0xff]
      %v186 = vld [vmem:[%s1 + $0x68] sm:$0xff]
      %v187 = vld [vmem:[%s1 + $0x70] sm:$0xff]
      %v188 = vld [vmem:[%s1 + $0x78] sm:$0xff]
      %189 = vmatprep.subr.mxu0 0.0
      %190 = vmatpush1.msra.mxu0 %v188
      %191 = vmatprep.subr.mxu0 0.0
      %192 = vmatpush1.msra.mxu0 %v187
      %193 = vmatprep.subr.mxu0 0.0
      %194 = vmatpush1.msra.mxu0 %v186
      %195 = vmatprep.subr.mxu0 0.0
      %196 = vmatpush1.msra.mxu0 %v185
      %197 = vmatprep.subr.mxu0 0.0
      %198 = vmatpush1.msra.mxu0 %v184
      %199 = vmatprep.subr.mxu0 0.0
      %200 = vmatpush1.msra.mxu0 %v183
      %201 = vmatprep.subr.mxu0 0.0
      %202 = vmatpush1.msra.mxu0 %v182
      %203 = vmatprep.subr.mxu0 0.0
      %204 = vmatpush1.msra.mxu0 %v181
      %205 = vmatprep.subr.mxu0 0.0
      %206 = vmatpush1.msra.mxu0 %v180
      %207 = vmatprep.subr.mxu0 0.0
      %208 = vmatpush1.msra.mxu0 %v179
      %209 = vmatprep.subr.mxu0 0.0
      %210 = vmatpush1.msra.mxu0 %v178
      %211 = vmatprep.subr.mxu0 0.0
      %212 = vmatpush1.msra.mxu0 %v177
      %213 = vmatprep.subr.mxu0 0.0
      %214 = vmatpush1.msra.mxu0 %v176
      %215 = vmatprep.subr.mxu0 0.0
      %216 = vmatpush1.msra.mxu0 %v175
      %217 = vmatprep.subr.mxu0 0.0
      %218 = vmatpush1.msra.mxu0 %v174
      %219 = vmatprep.subr.mxu0 0.0
      %220 = vmatpush1.msra.mxu0 %v173
      %221 = vmatprep.subr.mxu0 0.0
      %222 = vmatpush2.msra.mxu0 0.0
      %223 = vmatprep.subr.mxu0 0.0
      %224 = vmatpush2.msra.mxu0 0.0
      %225 = vmatprep.subr.mxu0 0.0
      %226 = vmatpush2.msra.mxu0 0.0
      %227 = vmatprep.subr.mxu0 0.0
      %228 = vmatpush2.msra.mxu0 0.0
      %229 = vmatprep.subr.mxu0 0.0
      %230 = vmatpush2.msra.mxu0 0.0
      %231 = vmatprep.subr.mxu0 0.0
      %232 = vmatpush2.msra.mxu0 0.0
      %233 = vmatprep.subr.mxu0 0.0
      %234 = vmatpush2.msra.mxu0 0.0
      %235 = vmatprep.subr.mxu0 0.0
      %236 = vmatpush2.msra.mxu0 0.0
      %237 = vmatprep.subr.mxu0 0.0
      %238 = vmatpush2.msra.mxu0 0.0
      %239 = vmatprep.subr.mxu0 0.0
      %240 = vmatpush2.msra.mxu0 0.0
      %241 = vmatprep.subr.mxu0 0.0
      %242 = vmatpush2.msra.mxu0 0.0
      %243 = vmatprep.subr.mxu0 0.0
      %244 = vmatpush2.msra.mxu0 0.0
      %245 = vmatprep.subr.mxu0 0.0
      %246 = vmatpush2.msra.mxu0 0.0
      %247 = vmatprep.subr.mxu0 0.0
      %248 = vmatpush2.msra.mxu0 0.0
      %249 = vmatprep.subr.mxu0 0.0
      %250 = vmatpush2.msra.mxu0 0.0
      %251 = vmatprep.subr.mxu0 0.0
      %252 = vmatpush2.msra.mxu0 0.0
      %253 = vmatprep.mubr.f32.mxu0 0.0
      %254 = vmatmul.mubr.f32.gmra.mxu0 %v171
      %v255 = vpop.f32.mrf.mxu0
      %v256 = vadd.f32 0.0, %v255
      %v257 = vpop.f32.mrf.mxu0
      %258 = vmatprep.mubr.f32.mxu0 0.0
      %259 = vmatmul.mubr.f32.gmra.mxu0 %v172
      %v260 = vpop.f32.mrf.mxu0
      %v261 = vadd.f32 0.0, %v260
      %v262 = vpop.f32.mrf.mxu0
      %263 = vdwg.mxu0
      %v264 = vld [vmem:[%s2] sm:$0xff]
      %v265 = vld [vmem:[%s2 + $0x8] sm:$0xf]
      %267 = vset.pattern.permute.xlu0 0
      %268 = vperm.xlu0 %267, %v264
      %v269 = vpop.permute.xlu0 %268
      %272 = vset.pattern.permute.xlu0 0
      %273 = vperm.xlu0 %272, %v265
      %v274 = vpop.permute.xlu0 %273
      %v276 = vmul.f32 %v269, %v256
      %v277 = vmul.f32 %v274, %v261
      %v278 = vadd.f32 %v276, 0.0
      %v279 = vadd.f32 %v277, 0.0
      %s280 = scalar_lea.vmem %s1, 128
      %v281 = vld [vmem:[%s280] sm:$0xff]
      %v282 = vld [vmem:[%s280 + $0x8] sm:$0xff]
      %v283 = vld [vmem:[%s280 + $0x10] sm:$0xff]
      %v284 = vld [vmem:[%s280 + $0x18] sm:$0xff]
      %v285 = vld [vmem:[%s280 + $0x20] sm:$0xff]
      %v286 = vld [vmem:[%s280 + $0x28] sm:$0xff]
      %v287 = vld [vmem:[%s280 + $0x30] sm:$0xff]
      %v288 = vld [vmem:[%s280 + $0x38] sm:$0xff]
      %v289 = vld [vmem:[%s280 + $0x40] sm:$0xff]
      %v290 = vld [vmem:[%s280 + $0x48] sm:$0xff]
      %v291 = vld [vmem:[%s280 + $0x50] sm:$0xff]
      %v292 = vld [vmem:[%s280 + $0x58] sm:$0xff]
      %v293 = vld [vmem:[%s280 + $0x60] sm:$0xff]
      %v294 = vld [vmem:[%s280 + $0x68] sm:$0xff]
      %v295 = vld [vmem:[%s280 + $0x70] sm:$0xff]
      %v296 = vld [vmem:[%s280 + $0x78] sm:$0xff]
      %297 = vmatprep.subr.mxu0 0.0
      %298 = vmatpush1.msra.mxu0 %v296
      %299 = vmatprep.subr.mxu0 0.0
      %300 = vmatpush1.msra.mxu0 %v295
      %301 = vmatprep.subr.mxu0 0.0
      %302 = vmatpush1.msra.mxu0 %v294
      %303 = vmatprep.subr.mxu0 0.0
      %304 = vmatpush1.msra.mxu0 %v293
      %305 = vmatprep.subr.mxu0 0.0
      %306 = vmatpush1.msra.mxu0 %v292
      %307 = vmatprep.subr.mxu0 0.0
      %308 = vmatpush1.msra.mxu0 %v291
      %309 = vmatprep.subr.mxu0 0.0
      %310 = vmatpush1.msra.mxu0 %v290
      %311 = vmatprep.subr.mxu0 0.0
      %312 = vmatpush1.msra.mxu0 %v289
      %313 = vmatprep.subr.mxu0 0.0
      %314 = vmatpush1.msra.mxu0 %v288
      %315 = vmatprep.subr.mxu0 0.0
      %316 = vmatpush1.msra.mxu0 %v287
      %317 = vmatprep.subr.mxu0 0.0
      %318 = vmatpush1.msra.mxu0 %v286
      %319 = vmatprep.subr.mxu0 0.0
      %320 = vmatpush1.msra.mxu0 %v285
      %321 = vmatprep.subr.mxu0 0.0
      %322 = vmatpush1.msra.mxu0 %v284
      %323 = vmatprep.subr.mxu0 0.0
      %324 = vmatpush1.msra.mxu0 %v283
      %325 = vmatprep.subr.mxu0 0.0
      %326 = vmatpush1.msra.mxu0 %v282
      %327 = vmatprep.subr.mxu0 0.0
      %328 = vmatpush1.msra.mxu0 %v281
      %329 = vmatprep.subr.mxu0 0.0
      %330 = vmatpush2.msra.mxu0 0.0
      %331 = vmatprep.subr.mxu0 0.0
      %332 = vmatpush2.msra.mxu0 0.0
      %333 = vmatprep.subr.mxu0 0.0
      %334 = vmatpush2.msra.mxu0 0.0
      %335 = vmatprep.subr.mxu0 0.0
      %336 = vmatpush2.msra.mxu0 0.0
      %337 = vmatprep.subr.mxu0 0.0
      %338 = vmatpush2.msra.mxu0 0.0
      %339 = vmatprep.subr.mxu0 0.0
      %340 = vmatpush2.msra.mxu0 0.0
      %341 = vmatprep.subr.mxu0 0.0
      %342 = vmatpush2.msra.mxu0 0.0
      %343 = vmatprep.subr.mxu0 0.0
      %344 = vmatpush2.msra.mxu0 0.0
      %345 = vmatprep.subr.mxu0 0.0
      %346 = vmatpush2.msra.mxu0 0.0
      %347 = vmatprep.subr.mxu0 0.0
      %348 = vmatpush2.msra.mxu0 0.0
      %349 = vmatprep.subr.mxu0 0.0
      %350 = vmatpush2.msra.mxu0 0.0
      %351 = vmatprep.subr.mxu0 0.0
      %352 = vmatpush2.msra.mxu0 0.0
      %353 = vmatprep.subr.mxu0 0.0
      %354 = vmatpush2.msra.mxu0 0.0
      %355 = vmatprep.subr.mxu0 0.0
      %356 = vmatpush2.msra.mxu0 0.0
      %357 = vmatprep.subr.mxu0 0.0
      %358 = vmatpush2.msra.mxu0 0.0
      %359 = vmatprep.subr.mxu0 0.0
      %360 = vmatpush2.msra.mxu0 0.0
      %361 = vmatprep.mubr.f32.mxu0 0.0
      %362 = vmatmul.mubr.f32.gmra.mxu0 %v171
      %v363 = vpop.f32.mrf.mxu0
      %v364 = vadd.f32 0.0, %v363
      %v365 = vpop.f32.mrf.mxu0
      %366 = vmatprep.mubr.f32.mxu0 0.0
      %367 = vmatmul.mubr.f32.gmra.mxu0 %v172
      %v368 = vpop.f32.mrf.mxu0
      %v369 = vadd.f32 0.0, %v368
      %v370 = vpop.f32.mrf.mxu0
      %371 = vdwg.mxu0
      %s372 = scalar_lea.vmem %s2, 16
      %v373 = vld [vmem:[%s372] sm:$0xff]
      %v374 = vld [vmem:[%s372 + $0x8] sm:$0xf]
      %376 = vset.pattern.permute.xlu0 0
      %377 = vperm.xlu0 %376, %v373
      %v378 = vpop.permute.xlu0 %377
      %381 = vset.pattern.permute.xlu0 0
      %382 = vperm.xlu0 %381, %v374
      %v383 = vpop.permute.xlu0 %382
      %v385 = vmul.f32 %v378, %v364
      %v386 = vmul.f32 %v383, %v369
      %v387 = vadd.f32 %v278, %v385
      %v388 = vadd.f32 %v279, %v386
      %s389 = scalar_lea.vmem %s1, 256
      %v390 = vld [vmem:[%s389] sm:$0xff]
      %v391 = vld [vmem:[%s389 + $0x8] sm:$0xff]
      %v392 = vld [vmem:[%s389 + $0x10] sm:$0xff]
      %v393 = vld [vmem:[%s389 + $0x18] sm:$0xff]
      %v394 = vld [vmem:[%s389 + $0x20] sm:$0xff]
      %v395 = vld [vmem:[%s389 + $0x28] sm:$0xff]
      %v396 = vld [vmem:[%s389 + $0x30] sm:$0xff]
      %v397 = vld [vmem:[%s389 + $0x38] sm:$0xff]
      %v398 = vld [vmem:[%s389 + $0x40] sm:$0xff]
      %v399 = vld [vmem:[%s389 + $0x48] sm:$0xff]
      %v400 = vld [vmem:[%s389 + $0x50] sm:$0xff]
      %v401 = vld [vmem:[%s389 + $0x58] sm:$0xff]
      %v402 = vld [vmem:[%s389 + $0x60] sm:$0xff]
      %v403 = vld [vmem:[%s389 + $0x68] sm:$0xff]
      %v404 = vld [vmem:[%s389 + $0x70] sm:$0xff]
      %v405 = vld [vmem:[%s389 + $0x78] sm:$0xff]
      %406 = vmatprep.subr.mxu0 0.0
      %407 = vmatpush1.msra.mxu0 %v405
      %408 = vmatprep.subr.mxu0 0.0
      %409 = vmatpush1.msra.mxu0 %v404
      %410 = vmatprep.subr.mxu0 0.0
      %411 = vmatpush1.msra.mxu0 %v403
      %412 = vmatprep.subr.mxu0 0.0
      %413 = vmatpush1.msra.mxu0 %v402
      %414 = vmatprep.subr.mxu0 0.0
      %415 = vmatpush1.msra.mxu0 %v401
      %416 = vmatprep.subr.mxu0 0.0
      %417 = vmatpush1.msra.mxu0 %v400
      %418 = vmatprep.subr.mxu0 0.0
      %419 = vmatpush1.msra.mxu0 %v399
      %420 = vmatprep.subr.mxu0 0.0
      %421 = vmatpush1.msra.mxu0 %v398
      %422 = vmatprep.subr.mxu0 0.0
      %423 = vmatpush1.msra.mxu0 %v397
      %424 = vmatprep.subr.mxu0 0.0
      %425 = vmatpush1.msra.mxu0 %v396
      %426 = vmatprep.subr.mxu0 0.0
      %427 = vmatpush1.msra.mxu0 %v395
      %428 = vmatprep.subr.mxu0 0.0
      %429 = vmatpush1.msra.mxu0 %v394
      %430 = vmatprep.subr.mxu0 0.0
      %431 = vmatpush1.msra.mxu0 %v393
      %432 = vmatprep.subr.mxu0 0.0
      %433 = vmatpush1.msra.mxu0 %v392
      %434 = vmatprep.subr.mxu0 0.0
      %435 = vmatpush1.msra.mxu0 %v391
      %436 = vmatprep.subr.mxu0 0.0
      %437 = vmatpush1.msra.mxu0 %v390
      %438 = vmatprep.subr.mxu0 0.0
      %439 = vmatpush2.msra.mxu0 0.0
      %440 = vmatprep.subr.mxu0 0.0
      %441 = vmatpush2.msra.mxu0 0.0
      %442 = vmatprep.subr.mxu0 0.0
      %443 = vmatpush2.msra.mxu0 0.0
      %444 = vmatprep.subr.mxu0 0.0
      %445 = vmatpush2.msra.mxu0 0.0
      %446 = vmatprep.subr.mxu0 0.0
      %447 = vmatpush2.msra.mxu0 0.0
      %448 = vmatprep.subr.mxu0 0.0
      %449 = vmatpush2.msra.mxu0 0.0
      %450 = vmatprep.subr.mxu0 0.0
      %451 = vmatpush2.msra.mxu0 0.0
      %452 = vmatprep.subr.mxu0 0.0
      %453 = vmatpush2.msra.mxu0 0.0
      %454 = vmatprep.subr.mxu0 0.0
      %455 = vmatpush2.msra.mxu0 0.0
      %456 = vmatprep.subr.mxu0 0.0
      %457 = vmatpush2.msra.mxu0 0.0
      %458 = vmatprep.subr.mxu0 0.0
      %459 = vmatpush2.msra.mxu0 0.0
      %460 = vmatprep.subr.mxu0 0.0
      %461 = vmatpush2.msra.mxu0 0.0
      %462 = vmatprep.subr.mxu0 0.0
      %463 = vmatpush2.msra.mxu0 0.0
      %464 = vmatprep.subr.mxu0 0.0
      %465 = vmatpush2.msra.mxu0 0.0
      %466 = vmatprep.subr.mxu0 0.0
      %467 = vmatpush2.msra.mxu0 0.0
      %468 = vmatprep.subr.mxu0 0.0
      %469 = vmatpush2.msra.mxu0 0.0
      %470 = vmatprep.mubr.f32.mxu0 0.0
      %471 = vmatmul.mubr.f32.gmra.mxu0 %v171
      %v472 = vpop.f32.mrf.mxu0
      %v473 = vadd.f32 0.0, %v472
      %v474 = vpop.f32.mrf.mxu0
      %475 = vmatprep.mubr.f32.mxu0 0.0
      %476 = vmatmul.mubr.f32.gmra.mxu0 %v172
      %v477 = vpop.f32.mrf.mxu0
      %v478 = vadd.f32 0.0, %v477
      %v479 = vpop.f32.mrf.mxu0
      %480 = vdwg.mxu0
      %s481 = scalar_lea.vmem %s2, 32
      %v482 = vld [vmem:[%s481] sm:$0xff]
      %v483 = vld [vmem:[%s481 + $0x8] sm:$0xf]
      %485 = vset.pattern.permute.xlu0 0
      %486 = vperm.xlu0 %485, %v482
      %v487 = vpop.permute.xlu0 %486
      %490 = vset.pattern.permute.xlu0 0
      %491 = vperm.xlu0 %490, %v483
      %v492 = vpop.permute.xlu0 %491
      %v494 = vmul.f32 %v487, %v473
      %v495 = vmul.f32 %v492, %v478
      %v496 = vadd.f32 %v387, %v494
      %v497 = vadd.f32 %v388, %v495
      %v498 = vmul.f32 %v496, 0.33333334
      %v499 = vmul.f32 %v497, 0.33333334
      %500 = vst [vmem:[%s170] sm:$0xff] %v498
      %501 = vst [vmem:[%s170 + $0x8] sm:$0xf] %v499
      %p502 = scmp.lt.s32.totalorder %s14, 1
      %s503 = scalar_select %p502, %s14, 1
      %s504 = smul.addr %s503, 2
      %s505 = smul.addr %s504, 8
      %s506 = scalar_lea.vmem %s3, %s505
      // Predicated region
      $region33: #{hifno_encoder_forward.8} parent=31 // pred_check
        %p507 = pneg %p100
      $region34: #{hifno_encoder_forward.8} parent=31 // pred_check_branch
        %509 = sbr.rel (%p507) target = $region36
      $region35: #{hifno_encoder_forward.8} parent=31 // pred_region
        _
      $region36: #{hifno_encoder_forward.8} parent=31 // pred_fallthru
        _
    $region32: #{hifno_encoder_forward.8} parent=5 // pred_fallthru
      _
    %p510 = scmp.le.s32.totalorder 2, %s9
    // Predicated region
    $region37: #{hifno_encoder_forward.8} parent=5 // pred_check
      %p511 = pneg %p510
    $region38: #{hifno_encoder_forward.8} parent=5 // pred_check_branch
      %513 = sbr.rel (%p511) target = $region40
    $region39: #{hifno_encoder_forward.8} parent=5 // pred_region
      %s514 = ssub.s32 %s9, 2
      // Predicated region
      $region41: #{hifno_encoder_forward.8} parent=39 // pred_check
        %p515 = pneg %p106
      $region42: #{hifno_encoder_forward.8} parent=39 // pred_check_branch
        %517 = sbr.rel (%p515) target = $region44
      $region43: #{hifno_encoder_forward.8} parent=39 // pred_region
        %p518 = scmp.lt.s32.totalorder %s15, 1
        %s519 = scalar_select %p518, %s15, 1
        %s520 = smul.addr %s519, 2
        %s521 = smul.addr %s520, 8
        %s522 = scalar_lea.vmem %s3, %s521
      $region44: #{hifno_encoder_forward.8} parent=39 // pred_fallthru
        _
    $region40: #{hifno_encoder_forward.8} parent=5 // pred_fallthru
      _
  $region6: #{hifno_encoder_forward.8} parent=0 // loop_footer
    %s13 = sadd.s32 1, %s9
  $region7: #{hifno_encoder_forward.8} parent=0 // loop_footer_branch
    %8 = sbr.rel target = $region3
  $region8: #{hifno_encoder_forward.8} parent=0 // loop_exit
    _

// kernel: hifno_encoder_forward.7
$region0: #{hifno_encoder_forward.7}
  #allocation0 [shape = 'u32[]', space=smem, size = 0x4, offset = 0x4, fixed_abs, tag = 'smem constant byte address 0x4 - core index']
  #allocation1 [shape = 'u32[144,128]{1,0:T(1,128)}', space=vmem, size = 0x12000, scoped, tag = 'internal scratch']
  %s0 = inlined_call_operand.vmem [shape: f32[2,16,128], index: 0, kind: input, shape index: {}]
  %s1 = inlined_call_operand.vmem [shape: f32[6,128,128], index: 1, kind: input, shape index: {}]
  %s2 = inlined_call_operand.vmem [shape: f32[12,1,128], index: 2, kind: input, shape index: {}]
  %s3 = inlined_call_operand.vmem [shape: f32[2,16,128], index: 3, kind: output, shape index: {0}]
  %s4 = inlined_call_operand.vmem [shape: f32[2,16,128], index: 4, kind: output, shape index: {1}]
  %5 = xla_tuple %s3, %s4
  %s6 = sld [smem:[#allocation0]]
  $region53: #{hifno_encoder_forward.7} parent=0
    _
  %s8 = ssub.s32 1, %s6
  %s9 = scalar_select 0, %s8, %s6
  loop: start=0, step=1, limit=4
  $region2: #{hifno_encoder_forward.7} parent=0 // loop_pre_header
    _
  $region3: #{hifno_encoder_forward.7} parent=0 // loop_header
    %s11 = sphi 0, %s15
    %p12 = scmp.ge.s32.totalorder %s11, 4
    %s21 = sphi 0, %s23
    %s24 = sphi 0, %s21
    %s25 = sphi 0, %s24
    %s41 = sphi 0, %s25
    %s45 = sphi 0, %s45
    %s47 = sphi 0, %s45
    %s48 = sphi 0, %s47
    %s62 = sphi 0, %s48
    %s66 = sphi 0, %s66
    %s68 = sphi 0, %s66
    %s69 = sphi 0, %s68
    %s83 = sphi 0, %s69
    %s89 = sphi 0, %s91
    %s92 = sphi 0, %s89
    %s93 = sphi 0, %s92
    %s109 = sphi 0, %s93
    %s115 = sphi 0, %s117
    %s118 = sphi 0, %s115
    %s119 = sphi 0, %s118
    %s135 = sphi 0, %s119
  $region4: #{hifno_encoder_forward.7} parent=0 // loop_header_branch
    %14 = sbr.rel (%p12) target = $region8
  $region5: #{hifno_encoder_forward.7} parent=0 // loop_body
    %s16 = ssub.s32 %s11, 1
    %s17 = ssub.s32 %s11, 2
    %s18 = sadd.s32 %s11, 1
    %s19 = ssub.s32 %s11, %s18
    %p20 = scmp.eq.s32.totalorder %s19, 0
    %s22 = sadd.s32 %s21, 1
    %s23 = scalar_select %p20, %s21, %s22
    %p26 = pneg %p20
    %p27 = scmp.eq.s32.totalorder %s11, 1
    %p28 = por %p26, %p27
    %p29 = scmp.ne.s32.totalorder %s21, %s24
    %p30 = scmp.eq.s32.totalorder %s11, 0
    %p31 = por %p29, %p30
    %p32 = scmp.ne.s32.totalorder %s21, %s24
    %p33 = scmp.eq.s32.totalorder %s16, 1
    %p34 = por %p32, %p33
    %p35 = scmp.ne.s32.totalorder %s24, %s25
    %p36 = scmp.eq.s32.totalorder %s16, 0
    %p37 = por %p35, %p36
    %p38 = scmp.ne.s32.totalorder %s24, %s25
    %p39 = scmp.eq.s32.totalorder %s17, 1
    %p40 = por %p38, %p39
    %p42 = scmp.ne.s32.totalorder %s25, %s41
    %p43 = scmp.eq.s32.totalorder %s17, 0
    %p44 = por %p42, %p43
    %s46 = sadd.s32 %s45, 1
    %p49 = scmp.eq.s32.totalorder %s11, 1
    %p50 = scmp.ne.s32.totalorder %s45, %s47
    %p51 = scmp.eq.s32.totalorder %s11, 0
    %p52 = por %p50, %p51
    %p53 = scmp.ne.s32.totalorder %s45, %s47
    %p54 = scmp.eq.s32.totalorder %s16, 1
    %p55 = por %p53, %p54
    %p56 = scmp.ne.s32.totalorder %s47, %s48
    %p57 = scmp.eq.s32.totalorder %s16, 0
    %p58 = por %p56, %p57
    %p59 = scmp.ne.s32.totalorder %s47, %s48
    %p60 = scmp.eq.s32.totalorder %s17, 1
    %p61 = por %p59, %p60
    %p63 = scmp.ne.s32.totalorder %s48, %s62
    %p64 = scmp.eq.s32.totalorder %s17, 0
    %p65 = por %p63, %p64
    %s67 = sadd.s32 %s66, 1
    %p70 = scmp.eq.s32.totalorder %s11, 1
    %p71 = scmp.ne.s32.totalorder %s66, %s68
    %p72 = scmp.eq.s32.totalorder %s11, 0
    %p73 = por %p71, %p72
    %p74 = scmp.ne.s32.totalorder %s66, %s68
    %p75 = scmp.eq.s32.totalorder %s16, 1
    %p76 = por %p74, %p75
    %p77 = scmp.ne.s32.totalorder %s68, %s69
    %p78 = scmp.eq.s32.totalorder %s16, 0
    %p79 = por %p77, %p78
    %p80 = scmp.ne.s32.totalorder %s68, %s69
    %p81 = scmp.eq.s32.totalorder %s17, 1
    %p82 = por %p80, %p81
    %p84 = scmp.ne.s32.totalorder %s69, %s83
    %p85 = scmp.eq.s32.totalorder %s17, 0
    %p86 = por %p84, %p85
    %s87 = ssub.s32 %s11, %s18
    %p88 = scmp.eq.s32.totalorder %s87, 0
    %s90 = sadd.s32 %s89, 1
    %s91 = scalar_select %p88, %s89, %s90
    %p94 = pneg %p88
    %p95 = scmp.eq.s32.totalorder %s11, 1
    %p96 = por %p94, %p95
    %p97 = scmp.ne.s32.totalorder %s89, %s92
    %p98 = scmp.eq.s32.totalorder %s11, 0
    %p99 = por %p97, %p98
    %p100 = scmp.ne.s32.totalorder %s89, %s92
    %p101 = scmp.eq.s32.totalorder %s16, 1
    %p102 = por %p100, %p101
    %p103 = scmp.ne.s32.totalorder %s92, %s93
    %p104 = scmp.eq.s32.totalorder %s16, 0
    %p105 = por %p103, %p104
    %p106 = scmp.ne.s32.totalorder %s92, %s93
    %p107 = scmp.eq.s32.totalorder %s17, 1
    %p108 = por %p106, %p107
    %p110 = scmp.ne.s32.totalorder %s93, %s109
    %p111 = scmp.eq.s32.totalorder %s17, 0
    %p112 = por %p110, %p111
    %s113 = ssub.s32 %s11, %s18
    %p114 = scmp.eq.s32.totalorder %s113, 0
    %s116 = sadd.s32 %s115, 1
    %s117 = scalar_select %p114, %s115, %s116
    %p120 = pneg %p114
    %p121 = scmp.eq.s32.totalorder %s11, 1
    %p122 = por %p120, %p121
    %p123 = scmp.ne.s32.totalorder %s115, %s118
    %p124 = scmp.eq.s32.totalorder %s11, 0
    %p125 = por %p123, %p124
    %p126 = scmp.ne.s32.totalorder %s115, %s118
    %p127 = scmp.eq.s32.totalorder %s16, 1
    %p128 = por %p126, %p127
    %p129 = scmp.ne.s32.totalorder %s118, %s119
    %p130 = scmp.eq.s32.totalorder %s16, 0
    %p131 = por %p129, %p130
    %p132 = scmp.ne.s32.totalorder %s118, %s119
    %p133 = scmp.eq.s32.totalorder %s17, 1
    %p134 = por %p132, %p133
    %p136 = scmp.ne.s32.totalorder %s119, %s135
    %p137 = scmp.eq.s32.totalorder %s17, 0
    %p138 = por %p136, %p137
    %p139 = scmp.le.s32.totalorder 1, %s11
    %p140 = scmp.lt.s32.totalorder %s11, 3
    %p141 = pnand %p139, %p140
    %p142 = pneg %p141
    // Predicated region
    $region9: #{hifno_encoder_forward.7} parent=5 // pred_check
      _
    $region10: #{hifno_encoder_forward.7} parent=5 // pred_check_branch
      %144 = sbr.rel (%p141) target = $region12
    $region11: #{hifno_encoder_forward.7} parent=5 // pred_region
      %s145 = ssub.s32 %s11, 1
      // Predicated region
      $region13: #{hifno_encoder_forward.7} parent=11 // pred_check
        %p146 = pneg %p58
      $region14: #{hifno_encoder_forward.7} parent=11 // pred_check_branch
        %148 = sbr.rel (%p146) target = $region16
      $region15: #{hifno_encoder_forward.7} parent=11 // pred_region
        _
      $region16: #{hifno_encoder_forward.7} parent=11 // pred_fallthru
        _
      // Predicated region
      $region17: #{hifno_encoder_forward.7} parent=11 // pred_check
        %p149 = pneg %p79
      $region18: #{hifno_encoder_forward.7} parent=11 // pred_check_branch
        %151 = sbr.rel (%p149) target = $region20
      $region19: #{hifno_encoder_forward.7} parent=11 // pred_region
        _
      $region20: #{hifno_encoder_forward.7} parent=11 // pred_fallthru
        _
    $region12: #{hifno_encoder_forward.7} parent=5 // pred_fallthru
      _
    %p152 = scmp.lt.s32.totalorder %s11, 2
    // Predicated region
    $region21: #{hifno_encoder_forward.7} parent=5 // pred_check
      %p153 = pneg %p152
    $region22: #{hifno_encoder_forward.7} parent=5 // pred_check_branch
      %155 = sbr.rel (%p153) target = $region24
    $region23: #{hifno_encoder_forward.7} parent=5 // pred_region
      // Predicated region
      $region25: #{hifno_encoder_forward.7} parent=23 // pred_check
        %p156 = pneg %p31
      $region26: #{hifno_encoder_forward.7} parent=23 // pred_check_branch
        %158 = sbr.rel (%p156) target = $region28
      $region27: #{hifno_encoder_forward.7} parent=23 // pred_region
        %p159 = scmp.lt.s32.totalorder %s11, 1
        %s160 = scalar_select %p159, %s11, 1
        %s161 = smul.addr %s160, 2
        %s162 = smul.addr %s161, 8
        %s163 = scalar_lea.vmem %s0, %s162
      $region28: #{hifno_encoder_forward.7} parent=23 // pred_fallthru
        _
    $region24: #{hifno_encoder_forward.7} parent=5 // pred_fallthru
      _
    %p164 = scmp.le.s32.totalorder 1, %s11
    %p165 = scmp.lt.s32.totalorder %s11, 3
    %p166 = pnand %p164, %p165
    %p167 = pneg %p166
    // Predicated region
    $region29: #{hifno_encoder_forward.7} parent=5 // pred_check
      _
    $region30: #{hifno_encoder_forward.7} parent=5 // pred_check_branch
      %169 = sbr.rel (%p166) target = $region32
    $region31: #{hifno_encoder_forward.7} parent=5 // pred_region
      %s170 = ssub.s32 %s11, 1
      %p171 = scmp.lt.s32.totalorder %s16, 1
      %s172 = scalar_select %p171, %s16, 1
      %s173 = smul.addr %s172, 2
      %s174 = smul.addr %s173, 8
      %s175 = scalar_lea.vmem %s0, %s174
      %p176 = pneg %p37
      %p177 = pneg %p34
      %p178 = pneg %p58
      %p179 = pneg %p55
      %p180 = pneg %p79
      %p181 = pneg %p76
      %p182 = pneg %p105
      %p183 = pneg %p102
      %p184 = scmp.lt.s32.totalorder %s16, 1
      %s185 = scalar_select %p184, %s16, 1
      %s186 = smul.addr %s185, 2
      %s187 = smul.addr %s186, 8
      %s188 = scalar_lea.vmem %s3, %s187
      %p189 = pneg %p131
      %p190 = pneg %p128
      %p191 = scmp.lt.s32.totalorder %s16, 1
      %s192 = scalar_select %p191, %s16, 1
      %s193 = smul.addr %s192, 2
      %s194 = smul.addr %s193, 8
      %s195 = scalar_lea.vmem %s4, %s194
      %p196 = scmp.lt.s32.totalorder %s16, 1
      %s197 = scalar_select %p196, %s16, 1
      %s198 = smul.addr %s197, 2
      %s199 = smul.addr %s198, 8
      %s200 = scalar_lea.vmem %s0, %s199
      %p201 = scmp.lt.s32.totalorder %s16, 1
      %s202 = scalar_select %p201, %s16, 1
      %s203 = smul.addr %s202, 2
      %s204 = smul.addr %s203, 8
      %s205 = scalar_lea.vmem %s3, %s204
      %p206 = scmp.lt.s32.totalorder %s16, 1
      %s207 = scalar_select %p206, %s16, 1
      %s208 = smul.addr %s207, 2
      %s209 = smul.addr %s208, 8
      %s210 = scalar_lea.vmem %s4, %s209
      %v211 = vld [vmem:[%s200] sm:$0xff]
      %v212 = vld [vmem:[%s200 + $0x8] sm:$0xff]
      %v213 = vld [vmem:[%s2] sm:$0x1]
      %s214 = scalar_lea.vmem %s2, 1
      %v215 = vld [vmem:[%s214] sm:$0x1]
      %v216 = vlaneseq
      %v217 = vand.u32 %v216, 127
      %vm218 = vcmp.lt.s32.totalorder %v217, 32
      %v219 = vsel %vm218, %v211, 0.0
      %v220 = vsel %vm218, %v212, 0.0
      %221 = vadd.xlane.f32.xlu0 %v219
      %v222 = vpop.xlane.xlu0 %221
      %223 = vadd.xlane.f32.xlu0 %v220
      %v224 = vpop.xlane.xlu0 %223
      %v225 = vmul.f32 %v222, 0.03125
      %v226 = vmul.f32 %v224, 0.03125
      %v227 = vsub.f32 %v211, %v225
      %v228 = vsub.f32 %v212, %v226
      %v229 = vsel %vm218, %v227, 0.0
      %v230 = vsel %vm218, %v228, 0.0
      %v231 = vmul.f32 %v229, %v229
      %v232 = vmul.f32 %v230, %v230
      %233 = vadd.xlane.f32.xlu0 %v231
      %v234 = vpop.xlane.xlu0 %233
      %235 = vadd.xlane.f32.xlu0 %v232
      %v236 = vpop.xlane.xlu0 %235
      %v237 = vmul.f32 %v234, 0.03125
      %v238 = vmul.f32 %v236, 0.03125
      %v239 = vadd.f32 %v237, 1e-05
      %v240 = vadd.f32 %v238, 1e-05
      %v241 = vrsqrt.pop %v239
      %v242 = vrsqrt.pop %v240
      %v243 = vmul.f32 %v227, %v241
      %v244 = vmul.f32 %v228, %v242
      %v246 = vlaneseq
      %v247 = vshrl.u32 %v246, 7
      %v248 = vsub.s32 0, %v247
      %v249 = vrot.slane %v213, %v248
      %v251 = vmul.f32 %v243, %v249
      %v252 = vmul.f32 %v244, %v249
      %v254 = vlaneseq
      %v255 = vshrl.u32 %v254, 7
      %v256 = vsub.s32 0, %v255
      %v257 = vrot.slane %v215, %v256
      %v259 = vadd.f32 %v251, %v257
      %v260 = vadd.f32 %v252, %v257
      %v261 = vld [vmem:[%s1] sm:$0xff]
      %v262 = vld [vmem:[%s1 + $0x8] sm:$0xff]
      %v263 = vld [vmem:[%s1 + $0x10] sm:$0xff]
      %v264 = vld [vmem:[%s1 + $0x18] sm:$0xff]
      %v265 = vld [vmem:[%s1 + $0x20] sm:$0xff]
      %v266 = vld [vmem:[%s1 + $0x28] sm:$0xff]
      %v267 = vld [vmem:[%s1 + $0x30] sm:$0xff]
      %v268 = vld [vmem:[%s1 + $0x38] sm:$0xff]
      %v269 = vld [vmem:[%s1 + $0x40] sm:$0xff]
      %v270 = vld [vmem:[%s1 + $0x48] sm:$0xff]
      %v271 = vld [vmem:[%s1 + $0x50] sm:$0xff]
      %v272 = vld [vmem:[%s1 + $0x58] sm:$0xff]
      %v273 = vld [vmem:[%s1 + $0x60] sm:$0xff]
      %v274 = vld [vmem:[%s1 + $0x68] sm:$0xff]
      %v275 = vld [vmem:[%s1 + $0x70] sm:$0xff]
      %v276 = vld [vmem:[%s1 + $0x78] sm:$0xff]
      %s277 = scalar_lea.vmem %s2, 2
      %v278 = vld [vmem:[%s277] sm:$0x1]
      %v280 = vlaneseq
      %v281 = vshrl.u32 %v280, 7
      %v282 = vsub.s32 0, %v281
      %v283 = vrot.slane %v278, %v282
      %285 = vmatprep.subr.mxu0 0.0
      %286 = vmatpush1.msra.mxu0 %v276
      %287 = vmatprep.subr.mxu0 0.0
      %288 = vmatpush1.msra.mxu0 %v275
      %289 = vmatprep.subr.mxu0 0.0
      %290 = vmatpush1.msra.mxu0 %v274
      %291 = vmatprep.subr.mxu0 0.0
      %292 = vmatpush1.msra.mxu0 %v273
      %293 = vmatprep.subr.mxu0 0.0
      %294 = vmatpush1.msra.mxu0 %v272
      %295 = vmatprep.subr.mxu0 0.0
      %296 = vmatpush1.msra.mxu0 %v271
      %297 = vmatprep.subr.mxu0 0.0
      %298 = vmatpush1.msra.mxu0 %v270
      %299 = vmatprep.subr.mxu0 0.0
      %300 = vmatpush1.msra.mxu0 %v269
      %301 = vmatprep.subr.mxu0 0.0
      %302 = vmatpush1.msra.mxu0 %v268
      %303 = vmatprep.subr.mxu0 0.0
      %304 = vmatpush1.msra.mxu0 %v267
      %305 = vmatprep.subr.mxu0 0.0
      %306 = vmatpush1.msra.mxu0 %v266
      %307 = vmatprep.subr.mxu0 0.0
      %308 = vmatpush1.msra.mxu0 %v265
      %309 = vmatprep.subr.mxu0 0.0
      %310 = vmatpush1.msra.mxu0 %v264
      %311 = vmatprep.subr.mxu0 0.0
      %312 = vmatpush1.msra.mxu0 %v263
      %313 = vmatprep.subr.mxu0 0.0
      %314 = vmatpush1.msra.mxu0 %v262
      %315 = vmatprep.subr.mxu0 0.0
      %316 = vmatpush1.msra.mxu0 %v261
      %317 = vmatprep.subr.mxu0 0.0
      %318 = vmatpush2.msra.mxu0 0.0
      %319 = vmatprep.subr.mxu0 0.0
      %320 = vmatpush2.msra.mxu0 0.0
      %321 = vmatprep.subr.mxu0 0.0
      %322 = vmatpush2.msra.mxu0 0.0
      %323 = vmatprep.subr.mxu0 0.0
      %324 = vmatpush2.msra.mxu0 0.0
      %325 = vmatprep.subr.mxu0 0.0
      %326 = vmatpush2.msra.mxu0 0.0
      %327 = vmatprep.subr.mxu0 0.0
      %328 = vmatpush2.msra.mxu0 0.0
      %329 = vmatprep.subr.mxu0 0.0
      %330 = vmatpush2.msra.mxu0 0.0
      %331 = vmatprep.subr.mxu0 0.0
      %332 = vmatpush2.msra.mxu0 0.0
      %333 = vmatprep.subr.mxu0 0.0
      %334 = vmatpush2.msra.mxu0 0.0
      %335 = vmatprep.subr.mxu0 0.0
      %336 = vmatpush2.msra.mxu0 0.0
      %337 = vmatprep.subr.mxu0 0.0
      %338 = vmatpush2.msra.mxu0 0.0
      %339 = vmatprep.subr.mxu0 0.0
      %340 = vmatpush2.msra.mxu0 0.0
      %341 = vmatprep.subr.mxu0 0.0
      %342 = vmatpush2.msra.mxu0 0.0
      %343 = vmatprep.subr.mxu0 0.0
      %344 = vmatpush2.msra.mxu0 0.0
      %345 = vmatprep.subr.mxu0 0.0
      %346 = vmatpush2.msra.mxu0 0.0
      %347 = vmatprep.subr.mxu0 0.0
      %348 = vmatpush2.msra.mxu0 0.0
      %349 = vmatprep.mubr.f32.mxu0 0.0
      %350 = vmatmul.mubr.f32.gmra.mxu0 %v259
      %v351 = vpop.f32.mrf.mxu0
      %v352 = vadd.f32 %v283, %v351
      %v353 = vpop.f32.mrf.mxu0
      %354 = vmatprep.mubr.f32.mxu0 0.0
      %355 = vmatmul.mubr.f32.gmra.mxu0 %v260
      %v356 = vpop.f32.mrf.mxu0
      %v357 = vadd.f32 %v283, %v356
      %v358 = vpop.f32.mrf.mxu0
      %359 = vdwg.mxu0
      %s360 = scalar_lea.vmem %s1, 128
      %v361 = vld [vmem:[%s360] sm:$0xff]
      %v362 = vld [vmem:[%s360 + $0x8] sm:$0xff]
      %v363 = vld [vmem:[%s360 + $0x10] sm:$0xff]
      %v364 = vld [vmem:[%s360 + $0x18] sm:$0xff]
      %v365 = vld [vmem:[%s360 + $0x20] sm:$0xff]
      %v366 = vld [vmem:[%s360 + $0x28] sm:$0xff]
      %v367 = vld [vmem:[%s360 + $0x30] sm:$0xff]
      %v368 = vld [vmem:[%s360 + $0x38] sm:$0xff]
      %v369 = vld [vmem:[%s360 + $0x40] sm:$0xff]
      %v370 = vld [vmem:[%s360 + $0x48] sm:$0xff]
      %v371 = vld [vmem:[%s360 + $0x50] sm:$0xff]
      %v372 = vld [vmem:[%s360 + $0x58] sm:$0xff]
      %v373 = vld [vmem:[%s360 + $0x60] sm:$0xff]
      %v374 = vld [vmem:[%s360 + $0x68] sm:$0xff]
      %v375 = vld [vmem:[%s360 + $0x70] sm:$0xff]
      %v376 = vld [vmem:[%s360 + $0x78] sm:$0xff]
      %s377 = scalar_lea.vmem %s2, 3
      %v378 = vld [vmem:[%s377] sm:$0x1]
      %v380 = vlaneseq
      %v381 = vshrl.u32 %v380, 7
      %v382 = vsub.s32 0, %v381
      %v383 = vrot.slane %v378, %v382
      %385 = vmatprep.subr.mxu0 0.0
      %386 = vmatpush1.msra.mxu0 %v376
      %387 = vmatprep.subr.mxu0 0.0
      %388 = vmatpush1.msra.mxu0 %v375
      %389 = vmatprep.subr.mxu0 0.0
      %390 = vmatpush1.msra.mxu0 %v374
      %391 = vmatprep.subr.mxu0 0.0
      %392 = vmatpush1.msra.mxu0 %v373
      %393 = vmatprep.subr.mxu0 0.0
      %394 = vmatpush1.msra.mxu0 %v372
      %395 = vmatprep.subr.mxu0 0.0
      %396 = vmatpush1.msra.mxu0 %v371
      %397 = vmatprep.subr.mxu0 0.0
      %398 = vmatpush1.msra.mxu0 %v370
      %399 = vmatprep.subr.mxu0 0.0
      %400 = vmatpush1.msra.mxu0 %v369
      %401 = vmatprep.subr.mxu0 0.0
      %402 = vmatpush1.msra.mxu0 %v368
      %403 = vmatprep.subr.mxu0 0.0
      %404 = vmatpush1.msra.mxu0 %v367
      %405 = vmatprep.subr.mxu0 0.0
      %406 = vmatpush1.msra.mxu0 %v366
      %407 = vmatprep.subr.mxu0 0.0
      %408 = vmatpush1.msra.mxu0 %v365
      %409 = vmatprep.subr.mxu0 0.0
      %410 = vmatpush1.msra.mxu0 %v364
      %411 = vmatprep.subr.mxu0 0.0
      %412 = vmatpush1.msra.mxu0 %v363
      %413 = vmatprep.subr.mxu0 0.0
      %414 = vmatpush1.msra.mxu0 %v362
      %415 = vmatprep.subr.mxu0 0.0
      %416 = vmatpush1.msra.mxu0 %v361
      %417 = vmatprep.subr.mxu0 0.0
      %418 = vmatpush2.msra.mxu0 0.0
      %419 = vmatprep.subr.mxu0 0.0
      %420 = vmatpush2.msra.mxu0 0.0
      %421 = vmatprep.subr.mxu0 0.0
      %422 = vmatpush2.msra.mxu0 0.0
      %423 = vmatprep.subr.mxu0 0.0
      %424 = vmatpush2.msra.mxu0 0.0
      %425 = vmatprep.subr.mxu0 0.0
      %426 = vmatpush2.msra.mxu0 0.0
      %427 = vmatprep.subr.mxu0 0.0
      %428 = vmatpush2.msra.mxu0 0.0
      %429 = vmatprep.subr.mxu0 0.0
      %430 = vmatpush2.msra.mxu0 0.0
      %431 = vmatprep.subr.mxu0 0.0
      %432 = vmatpush2.msra.mxu0 0.0
      %433 = vmatprep.subr.mxu0 0.0
      %434 = vmatpush2.msra.mxu0 0.0
      %435 = vmatprep.subr.mxu0 0.0
      %436 = vmatpush2.msra.mxu0 0.0
      %437 = vmatprep.subr.mxu0 0.0
      %438 = vmatpush2.msra.mxu0 0.0
      %439 = vmatprep.subr.mxu0 0.0
      %440 = vmatpush2.msra.mxu0 0.0
      %441 = vmatprep.subr.mxu0 0.0
      %442 = vmatpush2.msra.mxu0 0.0
      %443 = vmatprep.subr.mxu0 0.0
      %444 = vmatpush2.msra.mxu0 0.0
      %445 = vmatprep.subr.mxu0 0.0
      %446 = vmatpush2.msra.mxu0 0.0
      %447 = vmatprep.subr.mxu0 0.0
      %448 = vmatpush2.msra.mxu0 0.0
      %449 = vmatprep.mubr.f32.mxu0 0.0
      %450 = vmatmul.mubr.f32.gmra.mxu0 %v259
      %v451 = vpop.f32.mrf.mxu0
      %v452 = vadd.f32 %v383, %v451
      %v453 = vpop.f32.mrf.mxu0
      %454 = vmatprep.mubr.f32.mxu0 0.0
      %455 = vmatmul.mubr.f32.gmra.mxu0 %v260
      %v456 = vpop.f32.mrf.mxu0
      %v457 = vadd.f32 %v383, %v456
      %v458 = vpop.f32.mrf.mxu0
      %459 = vdwg.mxu0
      %s460 = scalar_lea.vmem %s1, 256
      %v461 = vld [vmem:[%s460] sm:$0xff]
      %v462 = vld [vmem:[%s460 + $0x8] sm:$0xff]
      %v463 = vld [vmem:[%s460 + $0x10] sm:$0xff]
      %v464 = vld [vmem:[%s460 + $0x18] sm:$0xff]
      %v465 = vld [vmem:[%s460 + $0x20] sm:$0xff]
      %v466 = vld [vmem:[%s460 + $0x28] sm:$0xff]
      %v467 = vld [vmem:[%s460 + $0x30] sm:$0xff]
      %v468 = vld [vmem:[%s460 + $0x38] sm:$0xff]
      %v469 = vld [vmem:[%s460 + $0x40] sm:$0xff]
      %v470 = vld [vmem:[%s460 + $0x48] sm:$0xff]
      %v471 = vld [vmem:[%s460 + $0x50] sm:$0xff]
      %v472 = vld [vmem:[%s460 + $0x58] sm:$0xff]
      %v473 = vld [vmem:[%s460 + $0x60] sm:$0xff]
      %v474 = vld [vmem:[%s460 + $0x68] sm:$0xff]
      %v475 = vld [vmem:[%s460 + $0x70] sm:$0xff]
      %v476 = vld [vmem:[%s460 + $0x78] sm:$0xff]
      %s477 = scalar_lea.vmem %s2, 4
      %v478 = vld [vmem:[%s477] sm:$0x1]
      %v480 = vlaneseq
      %v481 = vshrl.u32 %v480, 7
      %v482 = vsub.s32 0, %v481
      %v483 = vrot.slane %v478, %v482
      %485 = vmatprep.subr.mxu0 0.0
      %486 = vmatpush1.msra.mxu0 %v476
      %487 = vmatprep.subr.mxu0 0.0
      %488 = vmatpush1.msra.mxu0 %v475
      %489 = vmatprep.subr.mxu0 0.0
      %490 = vmatpush1.msra.mxu0 %v474
      %491 = vmatprep.subr.mxu0 0.0
      %492 = vmatpush1.msra.mxu0 %v473
      %493 = vmatprep.subr.mxu0 0.0
      %494 = vmatpush1.msra.mxu0 %v472
      %495 = vmatprep.subr.mxu0 0.0
      %496 = vmatpush1.msra.mxu0 %v471
      %497 = vmatprep.subr.mxu0 0.0
      %498 = vmatpush1.msra.mxu0 %v470
      %499 = vmatprep.subr.mxu0 0.0
      %500 = vmatpush1.msra.mxu0 %v469
      %501 = vmatprep.subr.mxu0 0.0
      %502 = vmatpush1.msra.mxu0 %v468
      %503 = vmatprep.subr.mxu0 0.0
      %504 = vmatpush1.msra.mxu0 %v467
      %505 = vmatprep.subr.mxu0 0.0
      %506 = vmatpush1.msra.mxu0 %v466
      %507 = vmatprep.subr.mxu0 0.0
      %508 = vmatpush1.msra.mxu0 %v465
      %509 = vmatprep.subr.mxu0 0.0
      %510 = vmatpush1.msra.mxu0 %v464
      %511 = vmatprep.subr.mxu0 0.0
      %512 = vmatpush1.msra.mxu0 %v463
      %513 = vmatprep.subr.mxu0 0.0
      %514 = vmatpush1.msra.mxu0 %v462
      %515 = vmatprep.subr.mxu0 0.0
      %516 = vmatpush1.msra.mxu0 %v461
      %517 = vmatprep.subr.mxu0 0.0
      %518 = vmatpush2.msra.mxu0 0.0
      %519 = vmatprep.subr.mxu0 0.0
      %520 = vmatpush2.msra.mxu0 0.0
      %521 = vmatprep.subr.mxu0 0.0
      %522 = vmatpush2.msra.mxu0 0.0
      %523 = vmatprep.subr.mxu0 0.0
      %524 = vmatpush2.msra.mxu0 0.0
      %525 = vmatprep.subr.mxu0 0.0
      %526 = vmatpush2.msra.mxu0 0.0
      %527 = vmatprep.subr.mxu0 0.0
      %528 = vmatpush2.msra.mxu0 0.0
      %529 = vmatprep.subr.mxu0 0.0
      %530 = vmatpush2.msra.mxu0 0.0
      %531 = vmatprep.subr.mxu0 0.0
      %532 = vmatpush2.msra.mxu0 0.0
      %533 = vmatprep.subr.mxu0 0.0
      %534 = vmatpush2.msra.mxu0 0.0
      %535 = vmatprep.subr.mxu0 0.0
      %536 = vmatpush2.msra.mxu0 0.0
      %537 = vmatprep.subr.mxu0 0.0
      %538 = vmatpush2.msra.mxu0 0.0
      %539 = vmatprep.subr.mxu0 0.0
      %540 = vmatpush2.msra.mxu0 0.0
      %541 = vmatprep.subr.mxu0 0.0
      %542 = vmatpush2.msra.mxu0 0.0
      %543 = vmatprep.subr.mxu0 0.0
      %544 = vmatpush2.msra.mxu0 0.0
      %545 = vmatprep.subr.mxu0 0.0
      %546 = vmatpush2.msra.mxu0 0.0
      %547 = vmatprep.subr.mxu0 0.0
      %548 = vmatpush2.msra.mxu0 0.0
      %549 = vmatprep.mubr.f32.mxu0 0.0
      %550 = vmatmul.mubr.f32.gmra.mxu0 %v259
      %v551 = vpop.f32.mrf.mxu0
      %v552 = vadd.f32 %v483, %v551
      %v553 = vpop.f32.mrf.mxu0
      %554 = vmatprep.mubr.f32.mxu0 0.0
      %555 = vmatmul.mubr.f32.gmra.mxu0 %v260
      %v556 = vpop.f32.mrf.mxu0
      %v557 = vadd.f32 %v483, %v556
      %v558 = vpop.f32.mrf.mxu0
      %559 = vdwg.mxu0
      %vm560 = vcmp.ge.s32.totalorder %v217, 0
      %vm561 = vcmp.lt.s32.totalorder %v217, 8
      %vm562 = vmand %vm560, %vm561
      %v563 = vsel %vm562, %v352, 0.0
      %v564 = vsel %vm562, %v357, 0.0
      %565 = vmatprep.subr.mxu0 0.0
      %566 = vmatpush1.xpose.msra.mxu0 0.0
      %567 = vmatprep.subr.mxu0 0.0
      %568 = vmatpush1.xpose.msra.mxu0 0.0
      %569 = vmatprep.subr.mxu0 0.0
      %570 = vmatpush1.xpose.msra.mxu0 0.0
      %571 = vmatprep.subr.mxu0 0.0
      %572 = vmatpush1.xpose.msra.mxu0 0.0
      %573 = vmatprep.subr.mxu0 0.0
      %574 = vmatpush1.xpose.msra.mxu0 0.0
      %575 = vmatprep.subr.mxu0 0.0
      %576 = vmatpush1.xpose.msra.mxu0 0.0
      %577 = vmatprep.subr.mxu0 0.0
      %578 = vmatpush1.xpose.msra.mxu0 0.0
      %579 = vmatprep.subr.mxu0 0.0
      %580 = vmatpush1.xpose.msra.mxu0 0.0
      %581 = vmatprep.subr.mxu0 0.0
      %582 = vmatpush1.xpose.msra.mxu0 0.0
      %583 = vmatprep.subr.mxu0 0.0
      %584 = vmatpush1.xpose.msra.mxu0 0.0
      %585 = vmatprep.subr.mxu0 0.0
      %586 = vmatpush1.xpose.msra.mxu0 0.0
      %587 = vmatprep.subr.mxu0 0.0
      %588 = vmatpush1.xpose.msra.mxu0 0.0
      %589 = vmatprep.subr.mxu0 0.0
      %590 = vmatpush1.xpose.msra.mxu0 0.0
      %591 = vmatprep.subr.mxu0 0.0
      %592 = vmatpush1.xpose.msra.mxu0 0.0
      %593 = vmatprep.subr.mxu0 0.0
      %594 = vmatpush1.xpose.msra.mxu0 %v457
      %595 = vmatprep.subr.mxu0 0.0
      %596 = vmatpush1.xpose.msra.mxu0 %v452
      %597 = vmatprep.subr.mxu0 0.0
      %598 = vmatpush2.xpose.msra.mxu0 0.0
      %599 = vmatprep.subr.mxu0 0.0
      %600 = vmatpush2.xpose.msra.mxu0 0.0
      %601 = vmatprep.subr.mxu0 0.0
      %602 = vmatpush2.xpose.msra.mxu0 0.0
      %603 = vmatprep.subr.mxu0 0.0
      %604 = vmatpush2.xpose.msra.mxu0 0.0
      %605 = vmatprep.subr.mxu0 0.0
      %606 = vmatpush2.xpose.msra.mxu0 0.0
      %607 = vmatprep.subr.mxu0 0.0
      %608 = vmatpush2.xpose.msra.mxu0 0.0
      %609 = vmatprep.subr.mxu0 0.0
      %610 = vmatpush2.xpose.msra.mxu0 0.0
      %611 = vmatprep.subr.mxu0 0.0
      %612 = vmatpush2.xpose.msra.mxu0 0.0
      %613 = vmatprep.subr.mxu0 0.0
      %614 = vmatpush2.xpose.msra.mxu0 0.0
      %615 = vmatprep.subr.mxu0 0.0
      %616 = vmatpush2.xpose.msra.mxu0 0.0
      %617 = vmatprep.subr.mxu0 0.0
      %618 = vmatpush2.xpose.msra.mxu0 0.0
      %619 = vmatprep.subr.mxu0 0.0
      %620 = vmatpush2.xpose.msra.mxu0 0.0
      %621 = vmatprep.subr.mxu0 0.0
      %622 = vmatpush2.xpose.msra.mxu0 0.0
      %623 = vmatprep.subr.mxu0 0.0
      %624 = vmatpush2.xpose.msra.mxu0 0.0
      %625 = vmatprep.subr.mxu0 0.0
      %626 = vmatpush2.xpose.msra.mxu0 0.0
      %627 = vmatprep.subr.mxu0 0.0
      %628 = vmatpush2.xpose.msra.mxu0 0.0
      %629 = vmatprep.mubr.f32.mxu0 0.0
      %630 = vmatmul.mubr.f32.gmra.mxu0 %v563
      %v631 = vpop.f32.mrf.mxu0
      %v632 = vadd.f32 0.0, %v631
      %v633 = vpop.f32.mrf.mxu0
      %634 = vmatprep.mubr.f32.mxu0 0.0
      %635 = vmatmul.mubr.f32.gmra.mxu0 %v564
      %v636 = vpop.f32.mrf.mxu0
      %v637 = vadd.f32 0.0, %v636
      %v638 = vpop.f32.mrf.mxu0
      %639 = vdwg.mxu0
      %v640 = vmul.f32 %v632, 0.35355338
      %v641 = vmul.f32 %v637, 0.35355338
      %vm642 = vcmask 130048
      %v643 = vsel %vm642, %v640, -inf
      %644 = vmax.xlane.f32.xlu0 %v643
      %v645 = vpop.xlane.xlu0 %644
      %v646 = vsel %vm642, %v641, -inf
      %647 = vmax.xlane.f32.xlu0 %v646
      %v648 = vpop.xlane.xlu0 %647
      %v649 = vsub.f32 %v640, %v645
      %v650 = vsub.f32 %v641, %v648
      %v651 = vmul.f32 %v649, 1.442695
      %v652 = vpow.pop %v651
      %v653 = vmul.f32 %v650, 1.442695
      %v654 = vpow.pop %v653
      %v655 = vsel %vm642, %v652, 0.0
      %656 = vadd.xlane.f32.xlu0 %v655
      %v657 = vpop.xlane.xlu0 %656
      %v658 = vsel %vm642, %v654, 0.0
      %659 = vadd.xlane.f32.xlu0 %v658
      %v660 = vpop.xlane.xlu0 %659
      %v661 = vrcp.pop %v657
      %v662 = vrcp.pop %v660
      %v664 = vsel %vm642, %v652, 0
      %v667 = vsel %vm642, %v654, 0
      %669 = vmatprep.subr.mxu0 0.0
      %670 = vmatpush1.msra.mxu0 0.0
      %671 = vmatprep.subr.mxu0 0.0
      %672 = vmatpush1.msra.mxu0 0.0
      %673 = vmatprep.subr.mxu0 0.0
      %674 = vmatpush1.msra.mxu0 0.0
      %675 = vmatprep.subr.mxu0 0.0
      %676 = vmatpush1.msra.mxu0 0.0
      %677 = vmatprep.subr.mxu0 0.0
      %678 = vmatpush1.msra.mxu0 0.0
      %679 = vmatprep.subr.mxu0 0.0
      %680 = vmatpush1.msra.mxu0 0.0
      %681 = vmatprep.subr.mxu0 0.0
      %682 = vmatpush1.msra.mxu0 0.0
      %683 = vmatprep.subr.mxu0 0.0
      %684 = vmatpush1.msra.mxu0 0.0
      %685 = vmatprep.subr.mxu0 0.0
      %686 = vmatpush1.msra.mxu0 0.0
      %687 = vmatprep.subr.mxu0 0.0
      %688 = vmatpush1.msra.mxu0 0.0
      %689 = vmatprep.subr.mxu0 0.0
      %690 = vmatpush1.msra.mxu0 0.0
      %691 = vmatprep.subr.mxu0 0.0
      %692 = vmatpush1.msra.mxu0 0.0
      %693 = vmatprep.subr.mxu0 0.0
      %694 = vmatpush1.msra.mxu0 0.0
      %695 = vmatprep.subr.mxu0 0.0
      %696 = vmatpush1.msra.mxu0 0.0
      %697 = vmatprep.subr.mxu0 0.0
      %698 = vmatpush1.msra.mxu0 %v557
      %699 = vmatprep.subr.mxu0 0.0
      %700 = vmatpush1.msra.mxu0 %v552
      %701 = vmatprep.subr.mxu0 0.0
      %702 = vmatpush2.msra.mxu0 0.0
      %703 = vmatprep.subr.mxu0 0.0
      %704 = vmatpush2.msra.mxu0 0.0
      %705 = vmatprep.subr.mxu0 0.0
      %706 = vmatpush2.msra.mxu0 0.0
      %707 = vmatprep.subr.mxu0 0.0
      %708 = vmatpush2.msra.mxu0 0.0
      %709 = vmatprep.subr.mxu0 0.0
      %710 = vmatpush2.msra.mxu0 0.0
      %711 = vmatprep.subr.mxu0 0.0
      %712 = vmatpush2.msra.mxu0 0.0
      %713 = vmatprep.subr.mxu0 0.0
      %714 = vmatpush2.msra.mxu0 0.0
      %715 = vmatprep.subr.mxu0 0.0
      %716 = vmatpush2.msra.mxu0 0.0
      %717 = vmatprep.subr.mxu0 0.0
      %718 = vmatpush2.msra.mxu0 0.0
      %719 = vmatprep.subr.mxu0 0.0
      %720 = vmatpush2.msra.mxu0 0.0
      %721 = vmatprep.subr.mxu0 0.0
      %722 = vmatpush2.msra.mxu0 0.0
      %723 = vmatprep.subr.mxu0 0.0
      %724 = vmatpush2.msra.mxu0 0.0
      %725 = vmatprep.subr.mxu0 0.0
      %726 = vmatpush2.msra.mxu0 0.0
      %727 = vmatprep.subr.mxu0 0.0
      %728 = vmatpush2.msra.mxu0 0.0
      %729 = vmatprep.subr.mxu0 0.0
      %730 = vmatpush2.msra.mxu0 0.0
      %731 = vmatprep.subr.mxu0 0.0
      %732 = vmatpush2.msra.mxu0 0.0
      %733 = vmatprep.mubr.f32.mxu0 0.0
      %734 = vmatmul.mubr.f32.gmra.mxu0 %v664
      %v735 = vpop.f32.mrf.mxu0
      %v736 = vadd.f32 0.0, %v735
      %v737 = vpop.f32.mrf.mxu0
      %738 = vmatprep.mubr.f32.mxu0 0.0
      %739 = vmatmul.mubr.f32.gmra.mxu0 %v667
      %v740 = vpop.f32.mrf.mxu0
      %v741 = vadd.f32 0.0, %v740
      %v742 = vpop.f32.mrf.mxu0
      %743 = vdwg.mxu0
      %v744 = vsel %vm562, %v736, 0.0
      %v745 = vsel %vm562, %v741, 0.0
      %v746 = vmul.f32 %v744, %v661
      %v747 = vmul.f32 %v745, %v662
      %v748 = vadd.f32 %v746, 0.0
      %v749 = vadd.f32 %v747, 0.0
      %vm750 = vcmp.ge.s32.totalorder %v217, 8
      %vm751 = vcmp.lt.s32.totalorder %v217, 16
      %vm752 = vmand %vm750, %vm751
      %v753 = vsel %vm752, %v352, 0.0
      %v754 = vsel %vm752, %v357, 0.0
      %755 = vmatprep.subr.mxu0 0.0
      %756 = vmatpush1.xpose.msra.mxu0 0.0
      %757 = vmatprep.subr.mxu0 0.0
      %758 = vmatpush1.xpose.msra.mxu0 0.0
      %759 = vmatprep.subr.mxu0 0.0
      %760 = vmatpush1.xpose.msra.mxu0 0.0
      %761 = vmatprep.subr.mxu0 0.0
      %762 = vmatpush1.xpose.msra.mxu0 0.0
      %763 = vmatprep.subr.mxu0 0.0
      %764 = vmatpush1.xpose.msra.mxu0 0.0
      %765 = vmatprep.subr.mxu0 0.0
      %766 = vmatpush1.xpose.msra.mxu0 0.0
      %767 = vmatprep.subr.mxu0 0.0
      %768 = vmatpush1.xpose.msra.mxu0 0.0
      %769 = vmatprep.subr.mxu0 0.0
      %770 = vmatpush1.xpose.msra.mxu0 0.0
      %771 = vmatprep.subr.mxu0 0.0
      %772 = vmatpush1.xpose.msra.mxu0 0.0
      %773 = vmatprep.subr.mxu0 0.0
      %774 = vmatpush1.xpose.msra.mxu0 0.0
      %775 = vmatprep.subr.mxu0 0.0
      %776 = vmatpush1.xpose.msra.mxu0 0.0
      %777 = vmatprep.subr.mxu0 0.0
      %778 = vmatpush1.xpose.msra.mxu0 0.0
      %779 = vmatprep.subr.mxu0 0.0
      %780 = vmatpush1.xpose.msra.mxu0 0.0
      %781 = vmatprep.subr.mxu0 0.0
      %782 = vmatpush1.xpose.msra.mxu0 0.0
      %783 = vmatprep.subr.mxu0 0.0
      %784 = vmatpush1.xpose.msra.mxu0 %v457
      %785 = vmatprep.subr.mxu0 0.0
      %786 = vmatpush1.xpose.msra.mxu0 %v452
      %787 = vmatprep.subr.mxu0 0.0
      %788 = vmatpush2.xpose.msra.mxu0 0.0
      %789 = vmatprep.subr.mxu0 0.0
      %790 = vmatpush2.xpose.msra.mxu0 0.0
      %791 = vmatprep.subr.mxu0 0.0
      %792 = vmatpush2.xpose.msra.mxu0 0.0
      %793 = vmatprep.subr.mxu0 0.0
      %794 = vmatpush2.xpose.msra.mxu0 0.0
      %795 = vmatprep.subr.mxu0 0.0
      %796 = vmatpush2.xpose.msra.mxu0 0.0
      %797 = vmatprep.subr.mxu0 0.0
      %798 = vmatpush2.xpose.msra.mxu0 0.0
      %799 = vmatprep.subr.mxu0 0.0
      %800 = vmatpush2.xpose.msra.mxu0 0.0
      %801 = vmatprep.subr.mxu0 0.0
      %802 = vmatpush2.xpose.msra.mxu0 0.0
      %803 = vmatprep.subr.mxu0 0.0
      %804 = vmatpush2.xpose.msra.mxu0 0.0
      %805 = vmatprep.subr.mxu0 0.0
      %806 = vmatpush2.xpose.msra.mxu0 0.0
      %807 = vmatprep.subr.mxu0 0.0
      %808 = vmatpush2.xpose.msra.mxu0 0.0
      %809 = vmatprep.subr.mxu0 0.0
      %810 = vmatpush2.xpose.msra.mxu0 0.0
      %811 = vmatprep.subr.mxu0 0.0
      %812 = vmatpush2.xpose.msra.mxu0 0.0
      %813 = vmatprep.subr.mxu0 0.0
      %814 = vmatpush2.xpose.msra.mxu0 0.0
      %815 = vmatprep.subr.mxu0 0.0
      %816 = vmatpush2.xpose.msra.mxu0 0.0
      %817 = vmatprep.subr.mxu0 0.0
      %818 = vmatpush2.xpose.msra.mxu0 0.0
      %819 = vmatprep.mubr.f32.mxu0 0.0
      %820 = vmatmul.mubr.f32.gmra.mxu0 %v753
      %v821 = vpop.f32.mrf.mxu0
      %v822 = vadd.f32 0.0, %v821
      %v823 = vpop.f32.mrf.mxu0
      %824 = vmatprep.mubr.f32.mxu0 0.0
      %825 = vmatmul.mubr.f32.gmra.mxu0 %v754
      %v826 = vpop.f32.mrf.mxu0
      %v827 = vadd.f32 0.0, %v826
      %v828 = vpop.f32.mrf.mxu0
      %829 = vdwg.mxu0
      %v830 = vmul.f32 %v822, 0.35355338
      %v831 = vmul.f32 %v827, 0.35355338
      %v832 = vsel %vm642, %v830, -inf
      %833 = vmax.xlane.f32.xlu0 %v832
      %v834 = vpop.xlane.xlu0 %833
      %v835 = vsel %vm642, %v831, -inf
      %836 = vmax.xlane.f32.xlu0 %v835
      %v837 = vpop.xlane.xlu0 %836
      %v838 = vsub.f32 %v830, %v834
      %v839 = vsub.f32 %v831, %v837
      %v840 = vmul.f32 %v838, 1.442695
      %v841 = vpow.pop %v840
      %v842 = vmul.f32 %v839, 1.442695
      %v843 = vpow.pop %v842
      %v844 = vsel %vm642, %v841, 0.0
      %845 = vadd.xlane.f32.xlu0 %v844
      %v846 = vpop.xlane.xlu0 %845
      %v847 = vsel %vm642, %v843, 0.0
      %848 = vadd.xlane.f32.xlu0 %v847
      %v849 = vpop.xlane.xlu0 %848
      %v850 = vrcp.pop %v846
      %v851 = vrcp.pop %v849
      %v853 = vsel %vm642, %v841, 0
      %v856 = vsel %vm642, %v843, 0
      %858 = vmatprep.subr.mxu0 0.0
      %859 = vmatpush1.msra.mxu0 0.0
      %860 = vmatprep.subr.mxu0 0.0
      %861 = vmatpush1.msra.mxu0 0.0
      %862 = vmatprep.subr.mxu0 0.0
      %863 = vmatpush1.msra.mxu0 0.0
      %864 = vmatprep.subr.mxu0 0.0
      %865 = vmatpush1.msra.mxu0 0.0
      %866 = vmatprep.subr.mxu0 0.0
      %867 = vmatpush1.msra.mxu0 0.0
      %868 = vmatprep.subr.mxu0 0.0
      %869 = vmatpush1.msra.mxu0 0.0
      %870 = vmatprep.subr.mxu0 0.0
      %871 = vmatpush1.msra.mxu0 0.0
      %872 = vmatprep.subr.mxu0 0.0
      %873 = vmatpush1.msra.mxu0 0.0
      %874 = vmatprep.subr.mxu0 0.0
      %875 = vmatpush1.msra.mxu0 0.0
      %876 = vmatprep.subr.mxu0 0.0
      %877 = vmatpush1.msra.mxu0 0.0
      %878 = vmatprep.subr.mxu0 0.0
      %879 = vmatpush1.msra.mxu0 0.0
      %880 = vmatprep.subr.mxu0 0.0
      %881 = vmatpush1.msra.mxu0 0.0
      %882 = vmatprep.subr.mxu0 0.0
      %883 = vmatpush1.msra.mxu0 0.0
      %884 = vmatprep.subr.mxu0 0.0
      %885 = vmatpush1.msra.mxu0 0.0
      %886 = vmatprep.subr.mxu0 0.0
      %887 = vmatpush1.msra.mxu0 %v557
      %888 = vmatprep.subr.mxu0 0.0
      %889 = vmatpush1.msra.mxu0 %v552
      %890 = vmatprep.subr.mxu0 0.0
      %891 = vmatpush2.msra.mxu0 0.0
      %892 = vmatprep.subr.mxu0 0.0
      %893 = vmatpush2.msra.mxu0 0.0
      %894 = vmatprep.subr.mxu0 0.0
      %895 = vmatpush2.msra.mxu0 0.0
      %896 = vmatprep.subr.mxu0 0.0
      %897 = vmatpush2.msra.mxu0 0.0
      %898 = vmatprep.subr.mxu0 0.0
      %899 = vmatpush2.msra.mxu0 0.0
      %900 = vmatprep.subr.mxu0 0.0
      %901 = vmatpush2.msra.mxu0 0.0
      %902 = vmatprep.subr.mxu0 0.0
      %903 = vmatpush2.msra.mxu0 0.0
      %904 = vmatprep.subr.mxu0 0.0
      %905 = vmatpush2.msra.mxu0 0.0
      %906 = vmatprep.subr.mxu0 0.0
      %907 = vmatpush2.msra.mxu0 0.0
      %908 = vmatprep.subr.mxu0 0.0
      %909 = vmatpush2.msra.mxu0 0.0
      %910 = vmatprep.subr.mxu0 0.0
      %911 = vmatpush2.msra.mxu0 0.0
      %912 = vmatprep.subr.mxu0 0.0
      %913 = vmatpush2.msra.mxu0 0.0
      %914 = vmatprep.subr.mxu0 0.0
      %915 = vmatpush2.msra.mxu0 0.0
      %916 = vmatprep.subr.mxu0 0.0
      %917 = vmatpush2.msra.mxu0 0.0
      %918 = vmatprep.subr.mxu0 0.0
      %919 = vmatpush2.msra.mxu0 0.0
      %920 = vmatprep.subr.mxu0 0.0
      %921 = vmatpush2.msra.mxu0 0.0
      %922 = vmatprep.mubr.f32.mxu0 0.0
      %923 = vmatmul.mubr.f32.gmra.mxu0 %v853
      %v924 = vpop.f32.mrf.mxu0
      %v925 = vadd.f32 0.0, %v924
      %v926 = vpop.f32.mrf.mxu0
      %927 = vmatprep.mubr.f32.mxu0 0.0
      %928 = vmatmul.mubr.f32.gmra.mxu0 %v856
      %v929 = vpop.f32.mrf.mxu0
      %v930 = vadd.f32 0.0, %v929
      %v931 = vpop.f32.mrf.mxu0
      %932 = vdwg.mxu0
      %v933 = vsel %vm752, %v925, 0.0
      %v934 = vsel %vm752, %v930, 0.0
      %v935 = vmul.f32 %v933, %v850
      %v936 = vmul.f32 %v934, %v851
      %v937 = vadd.f32 %v748, %v935
      %v938 = vadd.f32 %v749, %v936
      %vm939 = vcmp.ge.s32.totalorder %v217, 16
      %vm940 = vcmp.lt.s32.totalorder %v217, 24
      %vm941 = vmand %vm939, %vm940
      %v942 = vsel %vm941, %v352, 0.0
      %v943 = vsel %vm941, %v357, 0.0
      %944 = vmatprep.subr.mxu0 0.0
      %945 = vmatpush1.xpose.msra.mxu0 0.0
      %946 = vmatprep.subr.mxu0 0.0
      %947 = vmatpush1.xpose.msra.mxu0 0.0
      %948 = vmatprep.subr.mxu0 0.0
      %949 = vmatpush1.xpose.msra.mxu0 0.0
      %950 = vmatprep.subr.mxu0 0.0
      %951 = vmatpush1.xpose.msra.mxu0 0.0
      %952 = vmatprep.subr.mxu0 0.0
      %953 = vmatpush1.xpose.msra.mxu0 0.0
      %954 = vmatprep.subr.mxu0 0.0
      %955 = vmatpush1.xpose.msra.mxu0 0.0
      %956 = vmatprep.subr.mxu0 0.0
      %957 = vmatpush1.xpose.msra.mxu0 0.0
      %958 = vmatprep.subr.mxu0 0.0
      %959 = vmatpush1.xpose.msra.mxu0 0.0
      %960 = vmatprep.subr.mxu0 0.0
      %961 = vmatpush1.xpose.msra.mxu0 0.0
      %962 = vmatprep.subr.mxu0 0.0
      %963 = vmatpush1.xpose.msra.mxu0 0.0
      %964 = vmatprep.subr.mxu0 0.0
      %965 = vmatpush1.xpose.msra.mxu0 0.0
      %966 = vmatprep.subr.mxu0 0.0
      %967 = vmatpush1.xpose.msra.mxu0 0.0
      %968 = vmatprep.subr.mxu0 0.0
      %969 = vmatpush1.xpose.msra.mxu0 0.0
      %970 = vmatprep.subr.mxu0 0.0
      %971 = vmatpush1.xpose.msra.mxu0 0.0
      %972 = vmatprep.subr.mxu0 0.0
      %973 = vmatpush1.xpose.msra.mxu0 %v457
      %974 = vmatprep.subr.mxu0 0.0
      %975 = vmatpush1.xpose.msra.mxu0 %v452
      %976 = vmatprep.subr.mxu0 0.0
      %977 = vmatpush2.xpose.msra.mxu0 0.0
      %978 = vmatprep.subr.mxu0 0.0
      %979 = vmatpush2.xpose.msra.mxu0 0.0
      %980 = vmatprep.subr.mxu0 0.0
      %981 = vmatpush2.xpose.msra.mxu0 0.0
      %982 = vmatprep.subr.mxu0 0.0
      %983 = vmatpush2.xpose.msra.mxu0 0.0
      %984 = vmatprep.subr.mxu0 0.0
      %985 = vmatpush2.xpose.msra.mxu0 0.0
      %986 = vmatprep.subr.mxu0 0.0
      %987 = vmatpush2.xpose.msra.mxu0 0.0
      %988 = vmatprep.subr.mxu0 0.0
      %989 = vmatpush2.xpose.msra.mxu0 0.0
      %990 = vmatprep.subr.mxu0 0.0
      %991 = vmatpush2.xpose.msra.mxu0 0.0
      %992 = vmatprep.subr.mxu0 0.0
      %993 = vmatpush2.xpose.msra.mxu0 0.0
      %994 = vmatprep.subr.mxu0 0.0
      %995 = vmatpush2.xpose.msra.mxu0 0.0
      %996 = vmatprep.subr.mxu0 0.0
      %997 = vmatpush2.xpose.msra.mxu0 0.0
      %998 = vmatprep.subr.mxu0 0.0
      %999 = vmatpush2.xpose.msra.mxu0 0.0
      %1000 = vmatprep.subr.mxu0 0.0
      %1001 = vmatpush2.xpose.msra.mxu0 0.0
      %1002 = vmatprep.subr.mxu0 0.0
      %1003 = vmatpush2.xpose.msra.mxu0 0.0
      %1004 = vmatprep.subr.mxu0 0.0
      %1005 = vmatpush2.xpose.msra.mxu0 0.0
      %1006 = vmatprep.subr.mxu0 0.0
      %1007 = vmatpush2.xpose.msra.mxu0 0.0
      %1008 = vmatprep.mubr.f32.mxu0 0.0
      %1009 = vmatmul.mubr.f32.gmra.mxu0 %v942
      %v1010 = vpop.f32.mrf.mxu0
      %v1011 = vadd.f32 0.0, %v1010
      %v1012 = vpop.f32.mrf.mxu0
      %1013 = vmatprep.mubr.f32.mxu0 0.0
      %1014 = vmatmul.mubr.f32.gmra.mxu0 %v943
      %v1015 = vpop.f32.mrf.mxu0
      %v1016 = vadd.f32 0.0, %v1015
      %v1017 = vpop.f32.mrf.mxu0
      %1018 = vdwg.mxu0
      %v1019 = vmul.f32 %v1011, 0.35355338
      %v1020 = vmul.f32 %v1016, 0.35355338
      %v1021 = vsel %vm642, %v1019, -inf
      %1022 = vmax.xlane.f32.xlu0 %v1021
      %v1023 = vpop.xlane.xlu0 %1022
      %v1024 = vsel %vm642, %v1020, -inf
      %1025 = vmax.xlane.f32.xlu0 %v1024
      %v1026 = vpop.xlane.xlu0 %1025
      %v1027 = vsub.f32 %v1019, %v1023
      %v1028 = vsub.f32 %v1020, %v1026
      %v1029 = vmul.f32 %v1027, 1.442695
      %v1030 = vpow.pop %v1029
      %v1031 = vmul.f32 %v1028, 1.442695
      %v1032 = vpow.pop %v1031
      %v1033 = vsel %vm642, %v1030, 0.0
      %1034 = vadd.xlane.f32.xlu0 %v1033
      %v1035 = vpop.xlane.xlu0 %1034
      %v1036 = vsel %vm642, %v1032, 0.0
      %1037 = vadd.xlane.f32.xlu0 %v1036
      %v1038 = vpop.xlane.xlu0 %1037
      %v1039 = vrcp.pop %v1035
      %v1040 = vrcp.pop %v1038
      %v1042 = vsel %vm642, %v1030, 0
      %v1045 = vsel %vm642, %v1032, 0
      %1047 = vmatprep.subr.mxu0 0.0
      %1048 = vmatpush1.msra.mxu0 0.0
      %1049 = vmatprep.subr.mxu0 0.0
      %1050 = vmatpush1.msra.mxu0 0.0
      %1051 = vmatprep.subr.mxu0 0.0
      %1052 = vmatpush1.msra.mxu0 0.0
      %1053 = vmatprep.subr.mxu0 0.0
      %1054 = vmatpush1.msra.mxu0 0.0
      %1055 = vmatprep.subr.mxu0 0.0
      %1056 = vmatpush1.msra.mxu0 0.0
      %1057 = vmatprep.subr.mxu0 0.0
      %1058 = vmatpush1.msra.mxu0 0.0
      %1059 = vmatprep.subr.mxu0 0.0
      %1060 = vmatpush1.msra.mxu0 0.0
      %1061 = vmatprep.subr.mxu0 0.0
      %1062 = vmatpush1.msra.mxu0 0.0
      %1063 = vmatprep.subr.mxu0 0.0
      %1064 = vmatpush1.msra.mxu0 0.0
      %1065 = vmatprep.subr.mxu0 0.0
      %1066 = vmatpush1.msra.mxu0 0.0
      %1067 = vmatprep.subr.mxu0 0.0
      %1068 = vmatpush1.msra.mxu0 0.0
      %1069 = vmatprep.subr.mxu0 0.0
      %1070 = vmatpush1.msra.mxu0 0.0
      %1071 = vmatprep.subr.mxu0 0.0
      %1072 = vmatpush1.msra.mxu0 0.0
      %1073 = vmatprep.subr.mxu0 0.0
      %1074 = vmatpush1.msra.mxu0 0.0
      %1075 = vmatprep.subr.mxu0 0.0
      %1076 = vmatpush1.msra.mxu0 %v557
      %1077 = vmatprep.subr.mxu0 0.0
      %1078 = vmatpush1.msra.mxu0 %v552
      %1079 = vmatprep.subr.mxu0 0.0
      %1080 = vmatpush2.msra.mxu0 0.0
      %1081 = vmatprep.subr.mxu0 0.0
      %1082 = vmatpush2.msra.mxu0 0.0
      %1083 = vmatprep.subr.mxu0 0.0
      %1084 = vmatpush2.msra.mxu0 0.0
      %1085 = vmatprep.subr.mxu0 0.0
      %1086 = vmatpush2.msra.mxu0 0.0
      %1087 = vmatprep.subr.mxu0 0.0
      %1088 = vmatpush2.msra.mxu0 0.0
      %1089 = vmatprep.subr.mxu0 0.0
      %1090 = vmatpush2.msra.mxu0 0.0
      %1091 = vmatprep.subr.mxu0 0.0
      %1092 = vmatpush2.msra.mxu0 0.0
      %1093 = vmatprep.subr.mxu0 0.0
      %1094 = vmatpush2.msra.mxu0 0.0
      %1095 = vmatprep.subr.mxu0 0.0
      %1096 = vmatpush2.msra.mxu0 0.0
      %1097 = vmatprep.subr.mxu0 0.0
      %1098 = vmatpush2.msra.mxu0 0.0
      %1099 = vmatprep.subr.mxu0 0.0
      %1100 = vmatpush2.msra.mxu0 0.0
      %1101 = vmatprep.subr.mxu0 0.0
      %1102 = vmatpush2.msra.mxu0 0.0
      %1103 = vmatprep.subr.mxu0 0.0
      %1104 = vmatpush2.msra.mxu0 0.0
      %1105 = vmatprep.subr.mxu0 0.0
      %1106 = vmatpush2.msra.mxu0 0.0
      %1107 = vmatprep.subr.mxu0 0.0
      %1108 = vmatpush2.msra.mxu0 0.0
      %1109 = vmatprep.subr.mxu0 0.0
      %1110 = vmatpush2.msra.mxu0 0.0
      %1111 = vmatprep.mubr.f32.mxu0 0.0
      %1112 = vmatmul.mubr.f32.gmra.mxu0 %v1042
      %v1113 = vpop.f32.mrf.mxu0
      %v1114 = vadd.f32 0.0, %v1113
      %v1115 = vpop.f32.mrf.mxu0
      %1116 = vmatprep.mubr.f32.mxu0 0.0
      %1117 = vmatmul.mubr.f32.gmra.mxu0 %v1045
      %v1118 = vpop.f32.mrf.mxu0
      %v1119 = vadd.f32 0.0, %v1118
      %v1120 = vpop.f32.mrf.mxu0
      %1121 = vdwg.mxu0
      %v1122 = vsel %vm941, %v1114, 0.0
      %v1123 = vsel %vm941, %v1119, 0.0
      %v1124 = vmul.f32 %v1122, %v1039
      %v1125 = vmul.f32 %v1123, %v1040
      %v1126 = vadd.f32 %v937, %v1124
      %v1127 = vadd.f32 %v938, %v1125
      %vm1128 = vcmp.ge.s32.totalorder %v217, 24
      %vm1129 = vmand %vm1128, %vm218
      %v1130 = vsel %vm1129, %v352, 0.0
      %v1131 = vsel %vm1129, %v357, 0.0
      %1132 = vmatprep.subr.mxu0 0.0
      %1133 = vmatpush1.xpose.msra.mxu0 0.0
      %1134 = vmatprep.subr.mxu0 0.0
      %1135 = vmatpush1.xpose.msra.mxu0 0.0
      %1136 = vmatprep.subr.mxu0 0.0
      %1137 = vmatpush1.xpose.msra.mxu0 0.0
      %1138 = vmatprep.subr.mxu0 0.0
      %1139 = vmatpush1.xpose.msra.mxu0 0.0
      %1140 = vmatprep.subr.mxu0 0.0
      %1141 = vmatpush1.xpose.msra.mxu0 0.0
      %1142 = vmatprep.subr.mxu0 0.0
      %1143 = vmatpush1.xpose.msra.mxu0 0.0
      %1144 = vmatprep.subr.mxu0 0.0
      %1145 = vmatpush1.xpose.msra.mxu0 0.0
      %1146 = vmatprep.subr.mxu0 0.0
      %1147 = vmatpush1.xpose.msra.mxu0 0.0
      %1148 = vmatprep.subr.mxu0 0.0
      %1149 = vmatpush1.xpose.msra.mxu0 0.0
      %1150 = vmatprep.subr.mxu0 0.0
      %1151 = vmatpush1.xpose.msra.mxu0 0.0
      %1152 = vmatprep.subr.mxu0 0.0
      %1153 = vmatpush1.xpose.msra.mxu0 0.0
      %1154 = vmatprep.subr.mxu0 0.0
      %1155 = vmatpush1.xpose.msra.mxu0 0.0
      %1156 = vmatprep.subr.mxu0 0.0
      %1157 = vmatpush1.xpose.msra.mxu0 0.0
      %1158 = vmatprep.subr.mxu0 0.0
      %1159 = vmatpush1.xpose.msra.mxu0 0.0
      %1160 = vmatprep.subr.mxu0 0.0
      %1161 = vmatpush1.xpose.msra.mxu0 %v457
      %1162 = vmatprep.subr.mxu0 0.0
      %1163 = vmatpush1.xpose.msra.mxu0 %v452
      %1164 = vmatprep.subr.mxu0 0.0
      %1165 = vmatpush2.xpose.msra.mxu0 0.0
      %1166 = vmatprep.subr.mxu0 0.0
      %1167 = vmatpush2.xpose.msra.mxu0 0.0
      %1168 = vmatprep.subr.mxu0 0.0
      %1169 = vmatpush2.xpose.msra.mxu0 0.0
      %1170 = vmatprep.subr.mxu0 0.0
      %1171 = vmatpush2.xpose.msra.mxu0 0.0
      %1172 = vmatprep.subr.mxu0 0.0
      %1173 = vmatpush2.xpose.msra.mxu0 0.0
      %1174 = vmatprep.subr.mxu0 0.0
      %1175 = vmatpush2.xpose.msra.mxu0 0.0
      %1176 = vmatprep.subr.mxu0 0.0
      %1177 = vmatpush2.xpose.msra.mxu0 0.0
      %1178 = vmatprep.subr.mxu0 0.0
      %1179 = vmatpush2.xpose.msra.mxu0 0.0
      %1180 = vmatprep.subr.mxu0 0.0
      %1181 = vmatpush2.xpose.msra.mxu0 0.0
      %1182 = vmatprep.subr.mxu0 0.0
      %1183 = vmatpush2.xpose.msra.mxu0 0.0
      %1184 = vmatprep.subr.mxu0 0.0
      %1185 = vmatpush2.xpose.msra.mxu0 0.0
      %1186 = vmatprep.subr.mxu0 0.0
      %1187 = vmatpush2.xpose.msra.mxu0 0.0
      %1188 = vmatprep.subr.mxu0 0.0
      %1189 = vmatpush2.xpose.msra.mxu0 0.0
      %1190 = vmatprep.subr.mxu0 0.0
      %1191 = vmatpush2.xpose.msra.mxu0 0.0
      %1192 = vmatprep.subr.mxu0 0.0
      %1193 = vmatpush2.xpose.msra.mxu0 0.0
      %1194 = vmatprep.subr.mxu0 0.0
      %1195 = vmatpush2.xpose.msra.mxu0 0.0
      %1196 = vmatprep.mubr.f32.mxu0 0.0
      %1197 = vmatmul.mubr.f32.gmra.mxu0 %v1130
      %v1198 = vpop.f32.mrf.mxu0
      %v1199 = vadd.f32 0.0, %v1198
      %v1200 = vpop.f32.mrf.mxu0
      %1201 = vmatprep.mubr.f32.mxu0 0.0
      %1202 = vmatmul.mubr.f32.gmra.mxu0 %v1131
      %v1203 = vpop.f32.mrf.mxu0
      %v1204 = vadd.f32 0.0, %v1203
      %v1205 = vpop.f32.mrf.mxu0
      %1206 = vdwg.mxu0
      %v1207 = vmul.f32 %v1199, 0.35355338
      %v1208 = vmul.f32 %v1204, 0.35355338
      %v1209 = vsel %vm642, %v1207, -inf
      %1210 = vmax.xlane.f32.xlu0 %v1209
      %v1211 = vpop.xlane.xlu0 %1210
      %v1212 = vsel %vm642, %v1208, -inf
      %1213 = vmax.xlane.f32.xlu0 %v1212
      %v1214 = vpop.xlane.xlu0 %1213
      %v1215 = vsub.f32 %v1207, %v1211
      %v1216 = vsub.f32 %v1208, %v1214
      %v1217 = vmul.f32 %v1215, 1.442695
      %v1218 = vpow.pop %v1217
      %v1219 = vmul.f32 %v1216, 1.442695
      %v1220 = vpow.pop %v1219
      %v1221 = vsel %vm642, %v1218, 0.0
      %1222 = vadd.xlane.f32.xlu0 %v1221
      %v1223 = vpop.xlane.xlu0 %1222
      %v1224 = vsel %vm642, %v1220, 0.0
      %1225 = vadd.xlane.f32.xlu0 %v1224
      %v1226 = vpop.xlane.xlu0 %1225
      %v1227 = vrcp.pop %v1223
      %v1228 = vrcp.pop %v1226
      %v1230 = vsel %vm642, %v1218, 0
      %v1233 = vsel %vm642, %v1220, 0
      %1235 = vmatprep.subr.mxu0 0.0
      %1236 = vmatpush1.msra.mxu0 0.0
      %1237 = vmatprep.subr.mxu0 0.0
      %1238 = vmatpush1.msra.mxu0 0.0
      %1239 = vmatprep.subr.mxu0 0.0
      %1240 = vmatpush1.msra.mxu0 0.0
      %1241 = vmatprep.subr.mxu0 0.0
      %1242 = vmatpush1.msra.mxu0 0.0
      %1243 = vmatprep.subr.mxu0 0.0
      %1244 = vmatpush1.msra.mxu0 0.0
      %1245 = vmatprep.subr.mxu0 0.0
      %1246 = vmatpush1.msra.mxu0 0.0
      %1247 = vmatprep.subr.mxu0 0.0
      %1248 = vmatpush1.msra.mxu0 0.0
      %1249 = vmatprep.subr.mxu0 0.0
      %1250 = vmatpush1.msra.mxu0 0.0
      %1251 = vmatprep.subr.mxu0 0.0
      %1252 = vmatpush1.msra.mxu0 0.0
      %1253 = vmatprep.subr.mxu0 0.0
      %1254 = vmatpush1.msra.mxu0 0.0
      %1255 = vmatprep.subr.mxu0 0.0
      %1256 = vmatpush1.msra.mxu0 0.0
      %1257 = vmatprep.subr.mxu0 0.0
      %1258 = vmatpush1.msra.mxu0 0.0
      %1259 = vmatprep.subr.mxu0 0.0
      %1260 = vmatpush1.msra.mxu0 0.0
      %1261 = vmatprep.subr.mxu0 0.0
      %1262 = vmatpush1.msra.mxu0 0.0
      %1263 = vmatprep.subr.mxu0 0.0
      %1264 = vmatpush1.msra.mxu0 %v557
      %1265 = vmatprep.subr.mxu0 0.0
      %1266 = vmatpush1.msra.mxu0 %v552
      %1267 = vmatprep.subr.mxu0 0.0
      %1268 = vmatpush2.msra.mxu0 0.0
      %1269 = vmatprep.subr.mxu0 0.0
      %1270 = vmatpush2.msra.mxu0 0.0
      %1271 = vmatprep.subr.mxu0 0.0
      %1272 = vmatpush2.msra.mxu0 0.0
      %1273 = vmatprep.subr.mxu0 0.0
      %1274 = vmatpush2.msra.mxu0 0.0
      %1275 = vmatprep.subr.mxu0 0.0
      %1276 = vmatpush2.msra.mxu0 0.0
      %1277 = vmatprep.subr.mxu0 0.0
      %1278 = vmatpush2.msra.mxu0 0.0
      %1279 = vmatprep.subr.mxu0 0.0
      %1280 = vmatpush2.msra.mxu0 0.0
      %1281 = vmatprep.subr.mxu0 0.0
      %1282 = vmatpush2.msra.mxu0 0.0
      %1283 = vmatprep.subr.mxu0 0.0
      %1284 = vmatpush2.msra.mxu0 0.0
      %1285 = vmatprep.subr.mxu0 0.0
      %1286 = vmatpush2.msra.mxu0 0.0
      %1287 = vmatprep.subr.mxu0 0.0
      %1288 = vmatpush2.msra.mxu0 0.0
      %1289 = vmatprep.subr.mxu0 0.0
      %1290 = vmatpush2.msra.mxu0 0.0
      %1291 = vmatprep.subr.mxu0 0.0
      %1292 = vmatpush2.msra.mxu0 0.0
      %1293 = vmatprep.subr.mxu0 0.0
      %1294 = vmatpush2.msra.mxu0 0.0
      %1295 = vmatprep.subr.mxu0 0.0
      %1296 = vmatpush2.msra.mxu0 0.0
      %1297 = vmatprep.subr.mxu0 0.0
      %1298 = vmatpush2.msra.mxu0 0.0
      %1299 = vmatprep.mubr.f32.mxu0 0.0
      %1300 = vmatmul.mubr.f32.gmra.mxu0 %v1230
      %v1301 = vpop.f32.mrf.mxu0
      %v1302 = vadd.f32 0.0, %v1301
      %v1303 = vpop.f32.mrf.mxu0
      %1304 = vmatprep.mubr.f32.mxu0 0.0
      %1305 = vmatmul.mubr.f32.gmra.mxu0 %v1233
      %v1306 = vpop.f32.mrf.mxu0
      %v1307 = vadd.f32 0.0, %v1306
      %v1308 = vpop.f32.mrf.mxu0
      %1309 = vdwg.mxu0
      %v1310 = vsel %vm1129, %v1302, 0.0
      %v1311 = vsel %vm1129, %v1307, 0.0
      %v1312 = vmul.f32 %v1310, %v1227
      %v1313 = vmul.f32 %v1311, %v1228
      %v1314 = vadd.f32 %v1126, %v1312
      %v1315 = vadd.f32 %v1127, %v1313
      %s1316 = scalar_lea.vmem %s1, 384
      %v1317 = vld [vmem:[%s1316] sm:$0xff]
      %v1318 = vld [vmem:[%s1316 + $0x8] sm:$0xff]
      %v1319 = vld [vmem:[%s1316 + $0x10] sm:$0xff]
      %v1320 = vld [vmem:[%s1316 + $0x18] sm:$0xff]
      %v1321 = vld [vmem:[%s1316 + $0x20] sm:$0xff]
      %v1322 = vld [vmem:[%s1316 + $0x28] sm:$0xff]
      %v1323 = vld [vmem:[%s1316 + $0x30] sm:$0xff]
      %v1324 = vld [vmem:[%s1316 + $0x38] sm:$0xff]
      %v1325 = vld [vmem:[%s1316 + $0x40] sm:$0xff]
      %v1326 = vld [vmem:[%s1316 + $0x48] sm:$0xff]
      %v1327 = vld [vmem:[%s1316 + $0x50] sm:$0xff]
      %v1328 = vld [vmem:[%s1316 + $0x58] sm:$0xff]
      %v1329 = vld [vmem:[%s1316 + $0x60] sm:$0xff]
      %v1330 = vld [vmem:[%s1316 + $0x68] sm:$0xff]
      %v1331 = vld [vmem:[%s1316 + $0x70] sm:$0xff]
      %v1332 = vld [vmem:[%s1316 + $0x78] sm:$0xff]
      %s1333 = scalar_lea.vmem %s2, 5
      %v1334 = vld [vmem:[%s1333] sm:$0x1]
      %v1336 = vlaneseq
      %v1337 = vshrl.u32 %v1336, 7
      %v1338 = vsub.s32 0, %v1337
      %v1339 = vrot.slane %v1334, %v1338
      %1341 = vmatprep.subr.mxu0 0.0
      %1342 = vmatpush1.msra.mxu0 %v1332
      %1343 = vmatprep.subr.mxu0 0.0
      %1344 = vmatpush1.msra.mxu0 %v1331
      %1345 = vmatprep.subr.mxu0 0.0
      %1346 = vmatpush1.msra.mxu0 %v1330
      %1347 = vmatprep.subr.mxu0 0.0
      %1348 = vmatpush1.msra.mxu0 %v1329
      %1349 = vmatprep.subr.mxu0 0.0
      %1350 = vmatpush1.msra.mxu0 %v1328
      %1351 = vmatprep.subr.mxu0 0.0
      %1352 = vmatpush1.msra.mxu0 %v1327
      %1353 = vmatprep.subr.mxu0 0.0
      %1354 = vmatpush1.msra.mxu0 %v1326
      %1355 = vmatprep.subr.mxu0 0.0
      %1356 = vmatpush1.msra.mxu0 %v1325
      %1357 = vmatprep.subr.mxu0 0.0
      %1358 = vmatpush1.msra.mxu0 %v1324
      %1359 = vmatprep.subr.mxu0 0.0
      %1360 = vmatpush1.msra.mxu0 %v1323
      %1361 = vmatprep.subr.mxu0 0.0
      %1362 = vmatpush1.msra.mxu0 %v1322
      %1363 = vmatprep.subr.mxu0 0.0
      %1364 = vmatpush1.msra.mxu0 %v1321
      %1365 = vmatprep.subr.mxu0 0.0
      %1366 = vmatpush1.msra.mxu0 %v1320
      %1367 = vmatprep.subr.mxu0 0.0
      %1368 = vmatpush1.msra.mxu0 %v1319
      %1369 = vmatprep.subr.mxu0 0.0
      %1370 = vmatpush1.msra.mxu0 %v1318
      %1371 = vmatprep.subr.mxu0 0.0
      %1372 = vmatpush1.msra.mxu0 %v1317
      %1373 = vmatprep.subr.mxu0 0.0
      %1374 = vmatpush2.msra.mxu0 0.0
      %1375 = vmatprep.subr.mxu0 0.0
      %1376 = vmatpush2.msra.mxu0 0.0
      %1377 = vmatprep.subr.mxu0 0.0
      %1378 = vmatpush2.msra.mxu0 0.0
      %1379 = vmatprep.subr.mxu0 0.0
      %1380 = vmatpush2.msra.mxu0 0.0
      %1381 = vmatprep.subr.mxu0 0.0
      %1382 = vmatpush2.msra.mxu0 0.0
      %1383 = vmatprep.subr.mxu0 0.0
      %1384 = vmatpush2.msra.mxu0 0.0
      %1385 = vmatprep.subr.mxu0 0.0
      %1386 = vmatpush2.msra.mxu0 0.0
      %1387 = vmatprep.subr.mxu0 0.0
      %1388 = vmatpush2.msra.mxu0 0.0
      %1389 = vmatprep.subr.mxu0 0.0
      %1390 = vmatpush2.msra.mxu0 0.0
      %1391 = vmatprep.subr.mxu0 0.0
      %1392 = vmatpush2.msra.mxu0 0.0
      %1393 = vmatprep.subr.mxu0 0.0
      %1394 = vmatpush2.msra.mxu0 0.0
      %1395 = vmatprep.subr.mxu0 0.0
      %1396 = vmatpush2.msra.mxu0 0.0
      %1397 = vmatprep.subr.mxu0 0.0
      %1398 = vmatpush2.msra.mxu0 0.0
      %1399 = vmatprep.subr.mxu0 0.0
      %1400 = vmatpush2.msra.mxu0 0.0
      %1401 = vmatprep.subr.mxu0 0.0
      %1402 = vmatpush2.msra.mxu0 0.0
      %1403 = vmatprep.subr.mxu0 0.0
      %1404 = vmatpush2.msra.mxu0 0.0
      %1405 = vmatprep.mubr.f32.mxu0 0.0
      %1406 = vmatmul.mubr.f32.gmra.mxu0 %v1314
      %v1407 = vpop.f32.mrf.mxu0
      %v1408 = vadd.f32 %v1339, %v1407
      %v1409 = vpop.f32.mrf.mxu0
      %1410 = vmatprep.mubr.f32.mxu0 0.0
      %1411 = vmatmul.mubr.f32.gmra.mxu0 %v1315
      %v1412 = vpop.f32.mrf.mxu0
      %v1413 = vadd.f32 %v1339, %v1412
      %v1414 = vpop.f32.mrf.mxu0
      %1415 = vdwg.mxu0
      %v1416 = vadd.f32 %v211, %v1408
      %v1417 = vadd.f32 %v212, %v1413
      %s1418 = scalar_lea.vmem %s2, 6
      %v1419 = vld [vmem:[%s1418] sm:$0x1]
      %s1420 = scalar_lea.vmem %s2, 7
      %v1421 = vld [vmem:[%s1420] sm:$0x1]
      %v1422 = vsel %vm218, %v1416, 0.0
      %v1423 = vsel %vm218, %v1417, 0.0
      %1424 = vadd.xlane.f32.xlu0 %v1422
      %v1425 = vpop.xlane.xlu0 %1424
      %1426 = vadd.xlane.f32.xlu0 %v1423
      %v1427 = vpop.xlane.xlu0 %1426
      %v1428 = vmul.f32 %v1425, 0.03125
      %v1429 = vmul.f32 %v1427, 0.03125
      %v1430 = vsub.f32 %v1416, %v1428
      %v1431 = vsub.f32 %v1417, %v1429
      %v1432 = vsel %vm218, %v1430, 0.0
      %v1433 = vsel %vm218, %v1431, 0.0
      %v1434 = vmul.f32 %v1432, %v1432
      %v1435 = vmul.f32 %v1433, %v1433
      %1436 = vadd.xlane.f32.xlu0 %v1434
      %v1437 = vpop.xlane.xlu0 %1436
      %1438 = vadd.xlane.f32.xlu0 %v1435
      %v1439 = vpop.xlane.xlu0 %1438
      %v1440 = vmul.f32 %v1437, 0.03125
      %v1441 = vmul.f32 %v1439, 0.03125
      %v1442 = vadd.f32 %v1440, 1e-05
      %v1443 = vadd.f32 %v1441, 1e-05
      %v1444 = vrsqrt.pop %v1442
      %v1445 = vrsqrt.pop %v1443
      %v1446 = vmul.f32 %v1430, %v1444
      %v1447 = vmul.f32 %v1431, %v1445
      %v1449 = vlaneseq
      %v1450 = vshrl.u32 %v1449, 7
      %v1451 = vsub.s32 0, %v1450
      %v1452 = vrot.slane %v1419, %v1451
      %v1454 = vmul.f32 %v1446, %v1452
      %v1455 = vmul.f32 %v1447, %v1452
      %v1457 = vlaneseq
      %v1458 = vshrl.u32 %v1457, 7
      %v1459 = vsub.s32 0, %v1458
      %v1460 = vrot.slane %v1421, %v1459
      %v1462 = vadd.f32 %v1454, %v1460
      %v1463 = vadd.f32 %v1455, %v1460
      %s1464 = scalar_lea.vmem %s1, 512
      %v1465 = vld [vmem:[%s1464] sm:$0xff]
      %v1466 = vld [vmem:[%s1464 + $0x8] sm:$0xff]
      %v1467 = vld [vmem:[%s1464 + $0x10] sm:$0xff]
      %v1468 = vld [vmem:[%s1464 + $0x18] sm:$0xff]
      %v1469 = vld [vmem:[%s1464 + $0x20] sm:$0xff]
      %v1470 = vld [vmem:[%s1464 + $0x28] sm:$0xff]
      %v1471 = vld [vmem:[%s1464 + $0x30] sm:$0xff]
      %v1472 = vld [vmem:[%s1464 + $0x38] sm:$0xff]
      %v1473 = vld [vmem:[%s1464 + $0x40] sm:$0xff]
      %v1474 = vld [vmem:[%s1464 + $0x48] sm:$0xff]
      %v1475 = vld [vmem:[%s1464 + $0x50] sm:$0xff]
      %v1476 = vld [vmem:[%s1464 + $0x58] sm:$0xff]
      %v1477 = vld [vmem:[%s1464 + $0x60] sm:$0xff]
      %v1478 = vld [vmem:[%s1464 + $0x68] sm:$0xff]
      %v1479 = vld [vmem:[%s1464 + $0x70] sm:$0xff]
      %v1480 = vld [vmem:[%s1464 + $0x78] sm:$0xff]
      %s1481 = scalar_lea.vmem %s2, 8
      %v1482 = vld [vmem:[%s1481] sm:$0x1]
      %v1484 = vlaneseq
      %v1485 = vshrl.u32 %v1484, 7
      %v1486 = vsub.s32 0, %v1485
      %v1487 = vrot.slane %v1482, %v1486
      %1489 = vmatprep.subr.mxu0 0.0
      %1490 = vmatpush1.msra.mxu0 %v1480
      %1491 = vmatprep.subr.mxu0 0.0
      %1492 = vmatpush1.msra.mxu0 %v1479
      %1493 = vmatprep.subr.mxu0 0.0
      %1494 = vmatpush1.msra.mxu0 %v1478
      %1495 = vmatprep.subr.mxu0 0.0
      %1496 = vmatpush1.msra.mxu0 %v1477
      %1497 = vmatprep.subr.mxu0 0.0
      %1498 = vmatpush1.msra.mxu0 %v1476
      %1499 = vmatprep.subr.mxu0 0.0
      %1500 = vmatpush1.msra.mxu0 %v1475
      %1501 = vmatprep.subr.mxu0 0.0
      %1502 = vmatpush1.msra.mxu0 %v1474
      %1503 = vmatprep.subr.mxu0 0.0
      %1504 = vmatpush1.msra.mxu0 %v1473
      %1505 = vmatprep.subr.mxu0 0.0
      %1506 = vmatpush1.msra.mxu0 %v1472
      %1507 = vmatprep.subr.mxu0 0.0
      %1508 = vmatpush1.msra.mxu0 %v1471
      %1509 = vmatprep.subr.mxu0 0.0
      %1510 = vmatpush1.msra.mxu0 %v1470
      %1511 = vmatprep.subr.mxu0 0.0
      %1512 = vmatpush1.msra.mxu0 %v1469
      %1513 = vmatprep.subr.mxu0 0.0
      %1514 = vmatpush1.msra.mxu0 %v1468
      %1515 = vmatprep.subr.mxu0 0.0
      %1516 = vmatpush1.msra.mxu0 %v1467
      %1517 = vmatprep.subr.mxu0 0.0
      %1518 = vmatpush1.msra.mxu0 %v1466
      %1519 = vmatprep.subr.mxu0 0.0
      %1520 = vmatpush1.msra.mxu0 %v1465
      %1521 = vmatprep.subr.mxu0 0.0
      %1522 = vmatpush2.msra.mxu0 0.0
      %1523 = vmatprep.subr.mxu0 0.0
      %1524 = vmatpush2.msra.mxu0 0.0
      %1525 = vmatprep.subr.mxu0 0.0
      %1526 = vmatpush2.msra.mxu0 0.0
      %1527 = vmatprep.subr.mxu0 0.0
      %1528 = vmatpush2.msra.mxu0 0.0
      %1529 = vmatprep.subr.mxu0 0.0
      %1530 = vmatpush2.msra.mxu0 0.0
      %1531 = vmatprep.subr.mxu0 0.0
      %1532 = vmatpush2.msra.mxu0 0.0
      %1533 = vmatprep.subr.mxu0 0.0
      %1534 = vmatpush2.msra.mxu0 0.0
      %1535 = vmatprep.subr.mxu0 0.0
      %1536 = vmatpush2.msra.mxu0 0.0
      %1537 = vmatprep.subr.mxu0 0.0
      %1538 = vmatpush2.msra.mxu0 0.0
      %1539 = vmatprep.subr.mxu0 0.0
      %1540 = vmatpush2.msra.mxu0 0.0
      %1541 = vmatprep.subr.mxu0 0.0
      %1542 = vmatpush2.msra.mxu0 0.0
      %1543 = vmatprep.subr.mxu0 0.0
      %1544 = vmatpush2.msra.mxu0 0.0
      %1545 = vmatprep.subr.mxu0 0.0
      %1546 = vmatpush2.msra.mxu0 0.0
      %1547 = vmatprep.subr.mxu0 0.0
      %1548 = vmatpush2.msra.mxu0 0.0
      %1549 = vmatprep.subr.mxu0 0.0
      %1550 = vmatpush2.msra.mxu0 0.0
      %1551 = vmatprep.subr.mxu0 0.0
      %1552 = vmatpush2.msra.mxu0 0.0
      %1553 = vmatprep.mubr.f32.mxu0 0.0
      %1554 = vmatmul.mubr.f32.gmra.mxu0 %v1462
      %v1555 = vpop.f32.mrf.mxu0
      %v1556 = vadd.f32 %v1487, %v1555
      %v1557 = vpop.f32.mrf.mxu0
      %1558 = vmatprep.mubr.f32.mxu0 0.0
      %1559 = vmatmul.mubr.f32.gmra.mxu0 %v1463
      %v1560 = vpop.f32.mrf.mxu0
      %v1561 = vadd.f32 %v1487, %v1560
      %v1562 = vpop.f32.mrf.mxu0
      %1563 = vdwg.mxu0
      %v1564 = vmul.f32 %v1556, %v1556
      %v1565 = vmul.f32 %v1561, %v1561
      %v1566 = vmul.f32 %v1556, %v1564
      %v1567 = vmul.f32 %v1561, %v1565
      %v1568 = vmul.f32 %v1566, 0.044715
      %v1569 = vmul.f32 %v1567, 0.044715
      %v1570 = vadd.f32 %v1556, %v1568
      %v1571 = vadd.f32 %v1561, %v1569
      %v1572 = vmul.f32 %v1570, 0.7978846
      %v1573 = vmul.f32 %v1571, 0.7978846
      %v1574 = vtanh.pop %v1572
      %v1575 = vtanh.pop %v1573
      %v1576 = vadd.f32 %v1574, 1.0
      %v1577 = vadd.f32 %v1575, 1.0
      %v1578 = vmul.f32 %v1576, 0.5
      %v1579 = vmul.f32 %v1577, 0.5
      %v1580 = vmul.f32 %v1556, %v1578
      %v1581 = vmul.f32 %v1561, %v1579
      %s1582 = scalar_lea.vmem %s1, 640
      %v1583 = vld [vmem:[%s1582] sm:$0xff]
      %v1584 = vld [vmem:[%s1582 + $0x8] sm:$0xff]
      %v1585 = vld [vmem:[%s1582 + $0x10] sm:$0xff]
      %v1586 = vld [vmem:[%s1582 + $0x18] sm:$0xff]
      %v1587 = vld [vmem:[%s1582 + $0x20] sm:$0xff]
      %v1588 = vld [vmem:[%s1582 + $0x28] sm:$0xff]
      %v1589 = vld [vmem:[%s1582 + $0x30] sm:$0xff]
      %v1590 = vld [vmem:[%s1582 + $0x38] sm:$0xff]
      %v1591 = vld [vmem:[%s1582 + $0x40] sm:$0xff]
      %v1592 = vld [vmem:[%s1582 + $0x48] sm:$0xff]
      %v1593 = vld [vmem:[%s1582 + $0x50] sm:$0xff]
      %v1594 = vld [vmem:[%s1582 + $0x58] sm:$0xff]
      %v1595 = vld [vmem:[%s1582 + $0x60] sm:$0xff]
      %v1596 = vld [vmem:[%s1582 + $0x68] sm:$0xff]
      %v1597 = vld [vmem:[%s1582 + $0x70] sm:$0xff]
      %v1598 = vld [vmem:[%s1582 + $0x78] sm:$0xff]
      %s1599 = scalar_lea.vmem %s2, 9
      %v1600 = vld [vmem:[%s1599] sm:$0x1]
      %v1602 = vlaneseq
      %v1603 = vshrl.u32 %v1602, 7
      %v1604 = vsub.s32 0, %v1603
      %v1605 = vrot.slane %v1600, %v1604
      %1607 = vmatprep.subr.mxu0 0.0
      %1608 = vmatpush1.msra.mxu0 %v1598
      %1609 = vmatprep.subr.mxu0 0.0
      %1610 = vmatpush1.msra.mxu0 %v1597
      %1611 = vmatprep.subr.mxu0 0.0
      %1612 = vmatpush1.msra.mxu0 %v1596
      %1613 = vmatprep.subr.mxu0 0.0
      %1614 = vmatpush1.msra.mxu0 %v1595
      %1615 = vmatprep.subr.mxu0 0.0
      %1616 = vmatpush1.msra.mxu0 %v1594
      %1617 = vmatprep.subr.mxu0 0.0
      %1618 = vmatpush1.msra.mxu0 %v1593
      %1619 = vmatprep.subr.mxu0 0.0
      %1620 = vmatpush1.msra.mxu0 %v1592
      %1621 = vmatprep.subr.mxu0 0.0
      %1622 = vmatpush1.msra.mxu0 %v1591
      %1623 = vmatprep.subr.mxu0 0.0
      %1624 = vmatpush1.msra.mxu0 %v1590
      %1625 = vmatprep.subr.mxu0 0.0
      %1626 = vmatpush1.msra.mxu0 %v1589
      %1627 = vmatprep.subr.mxu0 0.0
      %1628 = vmatpush1.msra.mxu0 %v1588
      %1629 = vmatprep.subr.mxu0 0.0
      %1630 = vmatpush1.msra.mxu0 %v1587
      %1631 = vmatprep.subr.mxu0 0.0
      %1632 = vmatpush1.msra.mxu0 %v1586
      %1633 = vmatprep.subr.mxu0 0.0
      %1634 = vmatpush1.msra.mxu0 %v1585
      %1635 = vmatprep.subr.mxu0 0.0
      %1636 = vmatpush1.msra.mxu0 %v1584
      %1637 = vmatprep.subr.mxu0 0.0
      %1638 = vmatpush1.msra.mxu0 %v1583
      %1639 = vmatprep.subr.mxu0 0.0
      %1640 = vmatpush2.msra.mxu0 0.0
      %1641 = vmatprep.subr.mxu0 0.0
      %1642 = vmatpush2.msra.mxu0 0.0
      %1643 = vmatprep.subr.mxu0 0.0
      %1644 = vmatpush2.msra.mxu0 0.0
      %1645 = vmatprep.subr.mxu0 0.0
      %1646 = vmatpush2.msra.mxu0 0.0
      %1647 = vmatprep.subr.mxu0 0.0
      %1648 = vmatpush2.msra.mxu0 0.0
      %1649 = vmatprep.subr.mxu0 0.0
      %1650 = vmatpush2.msra.mxu0 0.0
      %1651 = vmatprep.subr.mxu0 0.0
      %1652 = vmatpush2.msra.mxu0 0.0
      %1653 = vmatprep.subr.mxu0 0.0
      %1654 = vmatpush2.msra.mxu0 0.0
      %1655 = vmatprep.subr.mxu0 0.0
      %1656 = vmatpush2.msra.mxu0 0.0
      %1657 = vmatprep.subr.mxu0 0.0
      %1658 = vmatpush2.msra.mxu0 0.0
      %1659 = vmatprep.subr.mxu0 0.0
      %1660 = vmatpush2.msra.mxu0 0.0
      %1661 = vmatprep.subr.mxu0 0.0
      %1662 = vmatpush2.msra.mxu0 0.0
      %1663 = vmatprep.subr.mxu0 0.0
      %1664 = vmatpush2.msra.mxu0 0.0
      %1665 = vmatprep.subr.mxu0 0.0
      %1666 = vmatpush2.msra.mxu0 0.0
      %1667 = vmatprep.subr.mxu0 0.0
      %1668 = vmatpush2.msra.mxu0 0.0
      %1669 = vmatprep.subr.mxu0 0.0
      %1670 = vmatpush2.msra.mxu0 0.0
      %1671 = vmatprep.mubr.f32.mxu0 0.0
      %1672 = vmatmul.mubr.f32.gmra.mxu0 %v1580
      %v1673 = vpop.f32.mrf.mxu0
      %v1674 = vadd.f32 %v1605, %v1673
      %v1675 = vpop.f32.mrf.mxu0
      %1676 = vmatprep.mubr.f32.mxu0 0.0
      %1677 = vmatmul.mubr.f32.gmra.mxu0 %v1581
      %v1678 = vpop.f32.mrf.mxu0
      %v1679 = vadd.f32 %v1605, %v1678
      %v1680 = vpop.f32.mrf.mxu0
      %1681 = vdwg.mxu0
      %v1682 = vadd.f32 %v1416, %v1674
      %v1683 = vadd.f32 %v1417, %v1679
      %s1684 = scalar_lea.vmem %s2, 10
      %v1685 = vld [vmem:[%s1684] sm:$0x1]
      %s1686 = scalar_lea.vmem %s2, 11
      %v1687 = vld [vmem:[%s1686] sm:$0x1]
      %v1688 = vsel %vm218, %v1682, 0.0
      %v1689 = vsel %vm218, %v1683, 0.0
      %1690 = vadd.xlane.f32.xlu0 %v1688
      %v1691 = vpop.xlane.xlu0 %1690
      %1692 = vadd.xlane.f32.xlu0 %v1689
      %v1693 = vpop.xlane.xlu0 %1692
      %v1694 = vmul.f32 %v1691, 0.03125
      %v1695 = vmul.f32 %v1693, 0.03125
      %v1696 = vsub.f32 %v1682, %v1694
      %v1697 = vsub.f32 %v1683, %v1695
      %v1698 = vsel %vm218, %v1696, 0.0
      %v1699 = vsel %vm218, %v1697, 0.0
      %v1700 = vmul.f32 %v1698, %v1698
      %v1701 = vmul.f32 %v1699, %v1699
      %1702 = vadd.xlane.f32.xlu0 %v1700
      %v1703 = vpop.xlane.xlu0 %1702
      %1704 = vadd.xlane.f32.xlu0 %v1701
      %v1705 = vpop.xlane.xlu0 %1704
      %v1706 = vmul.f32 %v1703, 0.03125
      %v1707 = vmul.f32 %v1705, 0.03125
      %v1708 = vadd.f32 %v1706, 1e-05
      %v1709 = vadd.f32 %v1707, 1e-05
      %v1710 = vrsqrt.pop %v1708
      %v1711 = vrsqrt.pop %v1709
      %v1712 = vmul.f32 %v1696, %v1710
      %v1713 = vmul.f32 %v1697, %v1711
      %v1715 = vlaneseq
      %v1716 = vshrl.u32 %v1715, 7
      %v1717 = vsub.s32 0, %v1716
      %v1718 = vrot.slane %v1685, %v1717
      %v1720 = vmul.f32 %v1712, %v1718
      %v1721 = vmul.f32 %v1713, %v1718
      %v1723 = vlaneseq
      %v1724 = vshrl.u32 %v1723, 7
      %v1725 = vsub.s32 0, %v1724
      %v1726 = vrot.slane %v1687, %v1725
      %v1728 = vadd.f32 %v1720, %v1726
      %v1729 = vadd.f32 %v1721, %v1726
      %1730 = vst [vmem:[%s205] sm:$0xff] %v1682
      %1731 = vst [vmem:[%s205 + $0x8] sm:$0xff] %v1683
      %1732 = vst [vmem:[%s210] sm:$0xff] %v1728
      %1733 = vst [vmem:[%s210 + $0x8] sm:$0xff] %v1729
      %p1734 = scmp.lt.s32.totalorder %s16, 1
      %s1735 = scalar_select %p1734, %s16, 1
      %s1736 = smul.addr %s1735, 2
      %s1737 = smul.addr %s1736, 8
      %s1738 = scalar_lea.vmem %s3, %s1737
      %p1739 = scmp.lt.s32.totalorder %s16, 1
      %s1740 = scalar_select %p1739, %s16, 1
      %s1741 = smul.addr %s1740, 2
      %s1742 = smul.addr %s1741, 8
      %s1743 = scalar_lea.vmem %s4, %s1742
      // Predicated region
      $region33: #{hifno_encoder_forward.7} parent=31 // pred_check
        %p1744 = pneg %p102
      $region34: #{hifno_encoder_forward.7} parent=31 // pred_check_branch
        %1746 = sbr.rel (%p1744) target = $region36
      $region35: #{hifno_encoder_forward.7} parent=31 // pred_region
        _
      $region36: #{hifno_encoder_forward.7} parent=31 // pred_fallthru
        _
      // Predicated region
      $region37: #{hifno_encoder_forward.7} parent=31 // pred_check
        %p1747 = pneg %p128
      $region38: #{hifno_encoder_forward.7} parent=31 // pred_check_branch
        %1749 = sbr.rel (%p1747) target = $region40
      $region39: #{hifno_encoder_forward.7} parent=31 // pred_region
        _
      $region40: #{hifno_encoder_forward.7} parent=31 // pred_fallthru
        _
    $region32: #{hifno_encoder_forward.7} parent=5 // pred_fallthru
      _
    %p1750 = scmp.le.s32.totalorder 2, %s11
    // Predicated region
    $region41: #{hifno_encoder_forward.7} parent=5 // pred_check
      %p1751 = pneg %p1750
    $region42: #{hifno_encoder_forward.7} parent=5 // pred_check_branch
      %1753 = sbr.rel (%p1751) target = $region44
    $region43: #{hifno_encoder_forward.7} parent=5 // pred_region
      %s1754 = ssub.s32 %s11, 2
      // Predicated region
      $region45: #{hifno_encoder_forward.7} parent=43 // pred_check
        %p1755 = pneg %p108
      $region46: #{hifno_encoder_forward.7} parent=43 // pred_check_branch
        %1757 = sbr.rel (%p1755) target = $region48
      $region47: #{hifno_encoder_forward.7} parent=43 // pred_region
        %p1758 = scmp.lt.s32.totalorder %s17, 1
        %s1759 = scalar_select %p1758, %s17, 1
        %s1760 = smul.addr %s1759, 2
        %s1761 = smul.addr %s1760, 8
        %s1762 = scalar_lea.vmem %s3, %s1761
      $region48: #{hifno_encoder_forward.7} parent=43 // pred_fallthru
        _
      // Predicated region
      $region49: #{hifno_encoder_forward.7} parent=43 // pred_check
        %p1763 = pneg %p134
      $region50: #{hifno_encoder_forward.7} parent=43 // pred_check_branch
        %1765 = sbr.rel (%p1763) target = $region52
      $region51: #{hifno_encoder_forward.7} parent=43 // pred_region
        %p1766 = scmp.lt.s32.totalorder %s17, 1
        %s1767 = scalar_select %p1766, %s17, 1
        %s1768 = smul.addr %s1767, 2
        %s1769 = smul.addr %s1768, 8
        %s1770 = scalar_lea.vmem %s4, %s1769
      $region52: #{hifno_encoder_forward.7} parent=43 // pred_fallthru
        _
    $region44: #{hifno_encoder_forward.7} parent=5 // pred_fallthru
      _
  $region6: #{hifno_encoder_forward.7} parent=0 // loop_footer
    %s15 = sadd.s32 1, %s11
  $region7: #{hifno_encoder_forward.7} parent=0 // loop_footer_branch
    %10 = sbr.rel target = $region3
  $region8: #{hifno_encoder_forward.7} parent=0 // loop_exit
    _

// kernel: hifno_encoder_forward.11
$region0: #{hifno_encoder_forward.11}
  #allocation0 [shape = 'u32[]', space=smem, size = 0x4, offset = 0x4, fixed_abs, tag = 'smem constant byte address 0x4 - core index']
  #allocation1 [shape = 'u32[144,128]{1,0:T(1,128)}', space=vmem, size = 0x12000, scoped, tag = 'internal scratch']
  %s0 = inlined_call_operand.vmem [shape: f32[2,16,128], index: 0, kind: input, shape index: {}]
  %s1 = inlined_call_operand.vmem [shape: f32[2,1,128], index: 1, kind: input, shape index: {}]
  %s2 = inlined_call_operand.vmem [shape: f32[128,128], index: 2, kind: input, shape index: {}]
  %s3 = inlined_call_operand.vmem [shape: f32[1,128], index: 3, kind: input, shape index: {}]
  %s4 = inlined_call_operand.hbm [shape: f32[2,128], index: 4, kind: output, shape index: {}]
  %s5 = sld [smem:[#allocation0]]
  $region26: #{hifno_encoder_forward.11} parent=0
    _
  %s7 = ssub.s32 1, %s5
  %s8 = scalar_select 0, %s7, %s5
  $region1: #{hifno_encoder_forward.11} parent=0
    #allocation2 [shape = 'u8[1024]{0}', space=vmem, size = 0x400, scoped, tag = 'output window, operand 0, single buffered']
    #allocation3 [shape = 's32[1]{0}', space=sflag, size = 0x4, scoped, tag = 'scoped memory for hifno_encoder_forward.11']
    %9 = vsyncpa [#allocation3], 0
    // Predicated region
    $region2: #{hifno_encoder_forward.11} parent=1 // pred_check
      _
    $region3: #{hifno_encoder_forward.11} parent=1 // pred_check_branch
      %11 = sbr.rel (0) target = $region5
    $region4: #{hifno_encoder_forward.11} parent=1 // pred_region
      _
    $region5: #{hifno_encoder_forward.11} parent=1 // pred_fallthru
      _
    // Predicated region
    $region6: #{hifno_encoder_forward.11} parent=1 // pred_check
      _
    $region7: #{hifno_encoder_forward.11} parent=1 // pred_check_branch
      %13 = sbr.rel (0) target = $region9
    $region8: #{hifno_encoder_forward.11} parent=1 // pred_region
      _
    $region9: #{hifno_encoder_forward.11} parent=1 // pred_fallthru
      _
    // Predicated region
    $region10: #{hifno_encoder_forward.11} parent=1 // pred_check
      _
    $region11: #{hifno_encoder_forward.11} parent=1 // pred_check_branch
      %15 = sbr.rel (0) target = $region13
    $region12: #{hifno_encoder_forward.11} parent=1 // pred_region
      _
    $region13: #{hifno_encoder_forward.11} parent=1 // pred_fallthru
      _
    // Predicated region
    $region14: #{hifno_encoder_forward.11} parent=1 // pred_check
      _
    $region15: #{hifno_encoder_forward.11} parent=1 // pred_check_branch
      %17 = sbr.rel (0) target = $region17
    $region16: #{hifno_encoder_forward.11} parent=1 // pred_region
      _
    $region17: #{hifno_encoder_forward.11} parent=1 // pred_fallthru
      _
    %v18 = vld [vmem:[%s0] sm:$0xff]
    %v19 = vld [vmem:[%s0 + $0x8] sm:$0xff]
    %v20 = vld [vmem:[%s0 + $0x10] sm:$0xff]
    %v21 = vld [vmem:[%s0 + $0x18] sm:$0xff]
    %v22 = vld [vmem:[%s1] sm:$0x1]
    %s23 = scalar_lea.vmem %s1, 1
    %v24 = vld [vmem:[%s23] sm:$0x1]
    %v25 = vlaneseq
    %v26 = vand.u32 %v25, 127
    %vm27 = vcmp.lt.s32.totalorder %v26, 32
    %v28 = vsel %vm27, %v18, 0.0
    %v29 = vsel %vm27, %v19, 0.0
    %v30 = vsel %vm27, %v20, 0.0
    %v31 = vsel %vm27, %v21, 0.0
    %32 = vadd.xlane.f32.xlu0 %v28
    %v33 = vpop.xlane.xlu0 %32
    %34 = vadd.xlane.f32.xlu0 %v29
    %v35 = vpop.xlane.xlu0 %34
    %36 = vadd.xlane.f32.xlu0 %v30
    %v37 = vpop.xlane.xlu0 %36
    %38 = vadd.xlane.f32.xlu0 %v31
    %v39 = vpop.xlane.xlu0 %38
    %v40 = vmul.f32 %v33, 0.03125
    %v41 = vmul.f32 %v35, 0.03125
    %v42 = vmul.f32 %v37, 0.03125
    %v43 = vmul.f32 %v39, 0.03125
    %v44 = vsub.f32 %v18, %v40
    %v45 = vsub.f32 %v19, %v41
    %v46 = vsub.f32 %v20, %v42
    %v47 = vsub.f32 %v21, %v43
    %v48 = vsel %vm27, %v44, 0.0
    %v49 = vsel %vm27, %v45, 0.0
    %v50 = vsel %vm27, %v46, 0.0
    %v51 = vsel %vm27, %v47, 0.0
    %v52 = vmul.f32 %v48, %v48
    %v53 = vmul.f32 %v49, %v49
    %v54 = vmul.f32 %v50, %v50
    %v55 = vmul.f32 %v51, %v51
    %56 = vadd.xlane.f32.xlu0 %v52
    %v57 = vpop.xlane.xlu0 %56
    %58 = vadd.xlane.f32.xlu0 %v53
    %v59 = vpop.xlane.xlu0 %58
    %60 = vadd.xlane.f32.xlu0 %v54
    %v61 = vpop.xlane.xlu0 %60
    %62 = vadd.xlane.f32.xlu0 %v55
    %v63 = vpop.xlane.xlu0 %62
    %v64 = vmul.f32 %v57, 0.03125
    %v65 = vmul.f32 %v59, 0.03125
    %v66 = vmul.f32 %v61, 0.03125
    %v67 = vmul.f32 %v63, 0.03125
    %v68 = vadd.f32 %v64, 1e-05
    %v69 = vadd.f32 %v65, 1e-05
    %v70 = vadd.f32 %v66, 1e-05
    %v71 = vadd.f32 %v67, 1e-05
    %v72 = vrsqrt.pop %v68
    %v73 = vrsqrt.pop %v69
    %v74 = vrsqrt.pop %v70
    %v75 = vrsqrt.pop %v71
    %v76 = vmul.f32 %v44, %v72
    %v77 = vmul.f32 %v45, %v73
    %v78 = vmul.f32 %v46, %v74
    %v79 = vmul.f32 %v47, %v75
    %v81 = vlaneseq
    %v82 = vshrl.u32 %v81, 7
    %v83 = vsub.s32 0, %v82
    %v84 = vrot.slane %v22, %v83
    %v86 = vmul.f32 %v76, %v84
    %v87 = vmul.f32 %v77, %v84
    %v88 = vmul.f32 %v78, %v84
    %v89 = vmul.f32 %v79, %v84
    %v91 = vlaneseq
    %v92 = vshrl.u32 %v91, 7
    %v93 = vsub.s32 0, %v92
    %v94 = vrot.slane %v24, %v93
    %v96 = vadd.f32 %v86, %v94
    %v97 = vadd.f32 %v87, %v94
    %v98 = vadd.f32 %v88, %v94
    %v99 = vadd.f32 %v89, %v94
    %v100 = vadd.f32 %v96, %v97
    %v101 = vrot.slane %v100, 4
    %v102 = vadd.f32 %v100, %v101
    %v103 = vrot.slane %v102, 2
    %v104 = vadd.f32 %v102, %v103
    %v105 = vrot.slane %v104, 1
    %v106 = vadd.f32 %v104, %v105
    %v107 = vadd.f32 %v98, %v99
    %v108 = vrot.slane %v107, 4
    %v109 = vadd.f32 %v107, %v108
    %v110 = vrot.slane %v109, 2
    %v111 = vadd.f32 %v109, %v110
    %v112 = vrot.slane %v111, 1
    %v113 = vadd.f32 %v111, %v112
    %v114 = vrcp.pop 16.0
    %v115 = vmul.f32 %v106, %v114
    %v116 = vmul.f32 %v113, %v114
    %v117 = vld [vmem:[%s2] sm:$0xff]
    %v118 = vld [vmem:[%s2 + $0x8] sm:$0xff]
    %v119 = vld [vmem:[%s2 + $0x10] sm:$0xff]
    %v120 = vld [vmem:[%s2 + $0x18] sm:$0xff]
    %v121 = vld [vmem:[%s2 + $0x20] sm:$0xff]
    %v122 = vld [vmem:[%s2 + $0x28] sm:$0xff]
    %v123 = vld [vmem:[%s2 + $0x30] sm:$0xff]
    %v124 = vld [vmem:[%s2 + $0x38] sm:$0xff]
    %v125 = vld [vmem:[%s2 + $0x40] sm:$0xff]
    %v126 = vld [vmem:[%s2 + $0x48] sm:$0xff]
    %v127 = vld [vmem:[%s2 + $0x50] sm:$0xff]
    %v128 = vld [vmem:[%s2 + $0x58] sm:$0xff]
    %v129 = vld [vmem:[%s2 + $0x60] sm:$0xff]
    %v130 = vld [vmem:[%s2 + $0x68] sm:$0xff]
    %v131 = vld [vmem:[%s2 + $0x70] sm:$0xff]
    %v132 = vld [vmem:[%s2 + $0x78] sm:$0xff]
    %v133 = vld [vmem:[%s3] sm:$0x1]
    %v135 = vlaneseq
    %v136 = vshrl.u32 %v135, 7
    %v137 = vsub.s32 0, %v136
    %v138 = vrot.slane %v133, %v137
    %vm142 = vcmask 1041409
    %v143 = vsel %vm142, %v116, %v115
    %145 = vmatprep.subr.mxu0 0.0
    %146 = vmatpush1.msra.mxu0 %v132
    %147 = vmatprep.subr.mxu0 0.0
    %148 = vmatpush1.msra.mxu0 %v131
    %149 = vmatprep.subr.mxu0 0.0
    %150 = vmatpush1.msra.mxu0 %v130
    %151 = vmatprep.subr.mxu0 0.0
    %152 = vmatpush1.msra.mxu0 %v129
    %153 = vmatprep.subr.mxu0 0.0
    %154 = vmatpush1.msra.mxu0 %v128
    %155 = vmatprep.subr.mxu0 0.0
    %156 = vmatpush1.msra.mxu0 %v127
    %157 = vmatprep.subr.mxu0 0.0
    %158 = vmatpush1.msra.mxu0 %v126
    %159 = vmatprep.subr.mxu0 0.0
    %160 = vmatpush1.msra.mxu0 %v125
    %161 = vmatprep.subr.mxu0 0.0
    %162 = vmatpush1.msra.mxu0 %v124
    %163 = vmatprep.subr.mxu0 0.0
    %164 = vmatpush1.msra.mxu0 %v123
    %165 = vmatprep.subr.mxu0 0.0
    %166 = vmatpush1.msra.mxu0 %v122
    %167 = vmatprep.subr.mxu0 0.0
    %168 = vmatpush1.msra.mxu0 %v121
    %169 = vmatprep.subr.mxu0 0.0
    %170 = vmatpush1.msra.mxu0 %v120
    %171 = vmatprep.subr.mxu0 0.0
    %172 = vmatpush1.msra.mxu0 %v119
    %173 = vmatprep.subr.mxu0 0.0
    %174 = vmatpush1.msra.mxu0 %v118
    %175 = vmatprep.subr.mxu0 0.0
    %176 = vmatpush1.msra.mxu0 %v117
    %177 = vmatprep.subr.mxu0 0.0
    %178 = vmatpush2.msra.mxu0 0.0
    %179 = vmatprep.subr.mxu0 0.0
    %180 = vmatpush2.msra.mxu0 0.0
    %181 = vmatprep.subr.mxu0 0.0
    %182 = vmatpush2.msra.mxu0 0.0
    %183 = vmatprep.subr.mxu0 0.0
    %184 = vmatpush2.msra.mxu0 0.0
    %185 = vmatprep.subr.mxu0 0.0
    %186 = vmatpush2.msra.mxu0 0.0
    %187 = vmatprep.subr.mxu0 0.0
    %188 = vmatpush2.msra.mxu0 0.0
    %189 = vmatprep.subr.mxu0 0.0
    %190 = vmatpush2.msra.mxu0 0.0
    %191 = vmatprep.subr.mxu0 0.0
    %192 = vmatpush2.msra.mxu0 0.0
    %193 = vmatprep.subr.mxu0 0.0
    %194 = vmatpush2.msra.mxu0 0.0
    %195 = vmatprep.subr.mxu0 0.0
    %196 = vmatpush2.msra.mxu0 0.0
    %197 = vmatprep.subr.mxu0 0.0
    %198 = vmatpush2.msra.mxu0 0.0
    %199 = vmatprep.subr.mxu0 0.0
    %200 = vmatpush2.msra.mxu0 0.0
    %201 = vmatprep.subr.mxu0 0.0
    %202 = vmatpush2.msra.mxu0 0.0
    %203 = vmatprep.subr.mxu0 0.0
    %204 = vmatpush2.msra.mxu0 0.0
    %205 = vmatprep.subr.mxu0 0.0
    %206 = vmatpush2.msra.mxu0 0.0
    %207 = vmatprep.subr.mxu0 0.0
    %208 = vmatpush2.msra.mxu0 0.0
    %209 = vmatprep.mubr.f32.mxu0 0.0
    %210 = vmatmul.mubr.f32.gmra.mxu0 %v143
    %v211 = vpop.f32.mrf.mxu0
    %v212 = vadd.f32 %v138, %v211
    %v213 = vpop.f32.mrf.mxu0
    %214 = vdwg.mxu0
    %215 = vst [vmem:[#allocation2] sm:$0x3] %v212
    // Predicated region
    $region18: #{hifno_encoder_forward.11} parent=1 // pred_check
      _
    $region19: #{hifno_encoder_forward.11} parent=1 // pred_check_branch
      %217 = sbr.rel (0) target = $region21
    $region20: #{hifno_encoder_forward.11} parent=1 // pred_region
      %s219 = ssub.s32 32, 32
      %220 = vsyncadd [#allocation3], %s219
      %s222 = sshll.u32 [#allocation2], 4
      %s223 = int_to_ptr.vmem [resolvable:$true] %s222
      %225 = dma.vmem_to_hbm [thread:$0]  %s223, 32, %s4, [#allocation3]
    $region21: #{hifno_encoder_forward.11} parent=1 // pred_fallthru
      _
    // Predicated region
    $region22: #{hifno_encoder_forward.11} parent=1 // pred_check
      _
    $region23: #{hifno_encoder_forward.11} parent=1 // pred_check_branch
      %227 = sbr.rel (0) target = $region25
    $region24: #{hifno_encoder_forward.11} parent=1 // pred_region
      %228 = dma.done [#allocation3], 32
    $region25: #{hifno_encoder_forward.11} parent=1 // pred_fallthru
      _
    %229 = vsyncpa [#allocation3], 1

</llo_original>
